<compile_context>
chip_gen: v7x
topology: tpu7x:2x2x1
jax: 0.10.0
libtpu: 0.0.40
codegen_flags: <defaults>
</compile_context>

<pallas_src>
import functools

import numpy as np
import jax
import jax.numpy as jnp
from jax import lax
from jax.experimental import pallas as pl
from jax.experimental.pallas import tpu as pltpu


# ----------------------------------------------------------------------------
# LoG weight composition (tiny weight-space convs) — plain JAX, hoisted out of
# the hot Pallas kernel.
# ----------------------------------------------------------------------------
def log_effective_weight(w):
    """Conv1d_LoG: conv_weight2 = conv1d(conv1d(W, w1, pad=1), w2, pad=1)."""
    Cout, Cin, K = w.shape
    k1 = jnp.array([1.0, 2.0, 1.0], jnp.float32) / 16.0
    k2 = jnp.array([-1.0, 8.0, -1.0], jnp.float32) / 16.0
    w1 = jnp.ones((Cin, Cin, K), jnp.float32) * k1
    w2 = jnp.ones((Cin, Cin, K), jnp.float32) * k2
    dn = ("NCH", "OIH", "NCH")
    cw1 = lax.conv_general_dilated(w, w1, (1,), ((1, 1),), dimension_numbers=dn)
    cw2 = lax.conv_general_dilated(cw1, w2, (1,), ((1, 1),), dimension_numbers=dn)
    return cw2                                            # (Cout, Cin, 3)


# ----------------------------------------------------------------------------
# Pallas kernel: k=3, stride=1, padding=1 conv on one (Cin, tL) tile.
# Three accumulated MXU dots (no stacked-operand materialisation); shifted
# operands built with XLU rolls + halo-column splice at the tile edges.
# ----------------------------------------------------------------------------
def _log_conv_kernel(x_ref, hl_ref, hr_ref, w_ref, o_ref, *, precision):
    # x_ref:(1,Cin,tL)  hl_ref/hr_ref:(1,Cin,nT)  w_ref:(3,Cout,Cin)  o_ref:(1,Cout,tL)
    x = x_ref[0]                                          # (Cin, tL)
    c_in, t_l = x.shape
    n_t = hl_ref.shape[2]
    j = pl.program_id(1)                                  # L-tile index

    # Select column j of the halo tables with a lane mask + reduce (avoids a
    # dynamic lane-offset slice; nT is tiny so this is negligible VPU/XLU work).
    hsel = lax.broadcasted_iota(jnp.int32, (c_in, n_t), 1) == j
    hl = hl_ref[0]
    hr = hr_ref[0]
    left_col = jnp.sum(jnp.where(hsel, hl, jnp.zeros_like(hl)),
                       axis=1, keepdims=True)             # (Cin, 1) = x[:, j*tL - 1]
    right_col = jnp.sum(jnp.where(hsel, hr, jnp.zeros_like(hr)),
                        axis=1, keepdims=True)            # (Cin, 1) = x[:, (j+1)*tL]

    lane = lax.broadcasted_iota(jnp.int32, (c_in, t_l), 1)
    # x[:, l-1] and x[:, l+1] via XLU rotations (non-negative shifts only);
    # the wrapped edge column is replaced by the true halo value (zero at the
    # sequence ends, the neighbour tile's column otherwise).
    x_left = jnp.where(lane == 0, left_col, pltpu.roll(x, shift=1, axis=1))
    x_right = jnp.where(lane == t_l - 1, right_col,
                        pltpu.roll(x, shift=t_l - 1, axis=1))

    # Three accumulated MXU dots: tap 0 -> x[l-1], tap 1 -> x[l], tap 2 -> x[l+1].
    acc = jnp.dot(w_ref[0], x_left,
                  preferred_element_type=jnp.float32, precision=precision)
    acc = acc + jnp.dot(w_ref[1], x,
                        preferred_element_type=jnp.float32, precision=precision)
    acc = acc + jnp.dot(w_ref[2], x_right,
                        preferred_element_type=jnp.float32, precision=precision)
    o_ref[0] = acc.astype(o_ref.dtype)


# ----------------------------------------------------------------------------
# Tile-size selection: largest multiple of 128 that divides L and keeps the
# per-step VMEM footprint (double-buffered I/O + shifted-operand temporaries)
# under a conservative budget — safe on v7x's 64 MiB physical VMEM as well as
# v5e/v6e's 128 MiB.
# ----------------------------------------------------------------------------
def _pick_tile_l(L, c_in, c_out, itemsize, vmem_budget_bytes=8 << 20):
    # per column: 2x double-buffered x block + ~3 shifted temps (c_in) and
    # 2x double-buffered f32 output block (c_out).
    bytes_per_col = itemsize * (2 * c_in + 3 * c_in) + 4 * 2 * c_out
    max_tl = max(128, (vmem_budget_bytes // bytes_per_col) // 128 * 128)
    if L <= max_tl:
        return L
    best = L  # TODO(synk): support a ragged last tile when L has no suitable divisor.
    for t in range(128, max_tl + 1, 128):
        if L % t == 0:
            best = t
    return best


# ----------------------------------------------------------------------------
# Wrapper
# ----------------------------------------------------------------------------
def conv1d_log(x, conv_weight, *, tile_l=None, compute_dtype=jnp.float32):
    """Conv1d_LoG forward.

    x:           (N, Cin, L)   float32
    conv_weight: (Cout, Cin, 3) raw nn.Conv1d weight (bias=False)
    tile_l:      L-tile width (multiple of 128 dividing L); None -> auto.
    compute_dtype: jnp.float32 (exact) or jnp.bfloat16 (halves HBM traffic on
                   v6e/v7x; accumulation stays f32).
    returns:     (N, Cout, L) float32
    """
    N, Cin, L = x.shape
    Cout = conv_weight.shape[0]
    compute_dtype = jnp.dtype(compute_dtype)
    itemsize = compute_dtype.itemsize

    if tile_l is None:
        tile_l = _pick_tile_l(L, Cin, Cout, itemsize)
    if L % tile_l != 0:
        raise ValueError(f"tile_l={tile_l} must divide L={L}")
    if tile_l != L and tile_l % 128 != 0:
        raise ValueError(f"tile_l={tile_l} must be a multiple of 128 (lane-dense)")
    n_t = L // tile_l

    # Weight-space LoG composition (tiny), taps split along a leading axis so
    # the kernel never concatenates activations.
    w_eff = log_effective_weight(conv_weight)                       # (Cout, Cin, 3)
    w_taps = jnp.transpose(w_eff, (2, 0, 1)).astype(compute_dtype)  # (3, Cout, Cin)

    xc = x.astype(compute_dtype)

    # Inter-tile halo columns (tiny: N*Cin*nT elements).
    # halo_left[n,:,j]  = x[n,:, j*tL - 1]   (0 for j == 0)
    # halo_right[n,:,j] = x[n,:, (j+1)*tL]   (0 for j == nT-1)
    zcol = jnp.zeros((N, Cin, 1), compute_dtype)
    tile_last = xc[:, :, tile_l - 1::tile_l]                        # (N, Cin, nT)
    tile_first = xc[:, :, ::tile_l]                                 # (N, Cin, nT)
    halo_left = jnp.concatenate([zcol, tile_last[:, :, :n_t - 1]], axis=-1)
    halo_right = jnp.concatenate([tile_first[:, :, 1:], zcol], axis=-1)

    precision = (lax.Precision.HIGHEST if compute_dtype == jnp.dtype(jnp.float32)
                 else lax.Precision.DEFAULT)
    kernel = functools.partial(_log_conv_kernel, precision=precision)

    cost = pl.CostEstimate(
        flops=2 * N * Cout * 3 * Cin * L,
        transcendentals=0,
        bytes_accessed=(itemsize * (N * Cin * L + 2 * N * Cin * n_t + 3 * Cout * Cin)
                        + 4 * N * Cout * L),
    )

    # NOTE: if profiling ever shows exposed DMA at very long L, bump the x
    # BlockSpec to pipeline_mode=pl.Buffered(3).
    return pl.pallas_call(
        kernel,
        out_shape=jax.ShapeDtypeStruct((N, Cout, L), jnp.float32),
        grid=(N, n_t),
        in_specs=[
            pl.BlockSpec((1, Cin, tile_l), lambda n, j: (n, 0, j)),   # x tile
            pl.BlockSpec((1, Cin, n_t), lambda n, j: (n, 0, 0)),      # halo_left
            pl.BlockSpec((1, Cin, n_t), lambda n, j: (n, 0, 0)),      # halo_right
            pl.BlockSpec((3, Cout, Cin), lambda n, j: (0, 0, 0)),     # weight taps
        ],
        out_specs=pl.BlockSpec((1, Cout, tile_l), lambda n, j: (n, 0, j)),
        compiler_params=pltpu.CompilerParams(
            dimension_semantics=("parallel", "parallel")),
        cost_estimate=cost,
    )(xc, halo_left, halo_right, w_taps)


# ----------------------------------------------------------------------------
# Pure-JAX reference (for correctness check)
# ----------------------------------------------------------------------------
def conv1d_log_reference(x, conv_weight):
    w_eff = log_effective_weight(conv_weight)
    dn = ("NCH", "OIH", "NCH")
    return lax.conv_general_dilated(x, w_eff, (1,), ((1, 1),),
                                    dimension_numbers=dn,
                                    precision=lax.Precision.HIGHEST)


# ----------------------------------------------------------------------------
if __name__ == "__main__":
    key = jax.random.PRNGKey(0)
    N, Cin, Cout, L = 2, 16, 8, 512

    kx, kw = jax.random.split(key)
    x = jax.random.normal(kx, (N, Cin, L), jnp.float32)
    conv_weight = 0.1 * jax.random.normal(kw, (Cout, Cin, 3), jnp.float32)

    ref = conv1d_log_reference(x, conv_weight)

    # 1) Single L-tile (tL == L): exercises the zero-padding edge masks.
    out_full = jax.block_until_ready(conv1d_log(x, conv_weight))
    assert out_full.shape == (N, Cout, L), out_full.shape
    np.testing.assert_allclose(np.asarray(out_full), np.asarray(ref),
                               rtol=1e-4, atol=1e-4)

    # 2) L-tiled path (4 tiles of 128): exercises the inter-tile halo columns.
    out_tiled = jax.block_until_ready(conv1d_log(x, conv_weight, tile_l=128))
    np.testing.assert_allclose(np.asarray(out_tiled), np.asarray(ref),
                               rtol=1e-4, atol=1e-4)

    # 3) bf16 activation traffic (v6e/v7x bandwidth optimization), f32 accum;
    #    compared at bf16-appropriate tolerance.
    out_bf16 = jax.block_until_ready(
        conv1d_log(x, conv_weight, tile_l=128, compute_dtype=jnp.bfloat16))
    np.testing.assert_allclose(np.asarray(out_bf16), np.asarray(ref),
                               rtol=1e-1, atol=1e-1)

    print("KERNEL_OK")
</pallas_src>

<mosaic_0001>
module attributes {stable_mosaic.version = 11 : i64} {
  func.func @_log_conv_kernel(%arg0: i32, %arg1: i32, %arg2: memref<1x16x512xf32, #tpu.memory_space<vmem>>, %arg3: memref<1x16x1xf32, #tpu.memory_space<vmem>>, %arg4: memref<1x16x1xf32, #tpu.memory_space<vmem>>, %arg5: memref<3x8x16xf32, #tpu.memory_space<vmem>>, %arg6: memref<1x8x512xf32, #tpu.memory_space<vmem>>) attributes {dimension_semantics = [#tpu.dimension_semantics<parallel>, #tpu.dimension_semantics<parallel>], iteration_bounds = array<i64: 2, 1>, scalar_prefetch = 0 : i64, scratch_operands = 0 : i64, tpu.core_type = #tpu.core_type<tc>, window_params = [{transform_indices = @transform_0, window_bounds = array<i64: 1, 16, 512>}, {transform_indices = @transform_1, window_bounds = array<i64: 1, 16, 1>}, {transform_indices = @transform_2, window_bounds = array<i64: 1, 16, 1>}, {pipeline_mode = #tpu.pipeline_mode<synchronous>, transform_indices = @transform_3, window_bounds = array<i64: 3, 8, 16>}, {transform_indices = @transform_4, window_bounds = array<i64: 1, 8, 512>}]} {
    %c0 = arith.constant 0 : index
    %c0_0 = arith.constant 0 : index
    %c0_1 = arith.constant 0 : index
    %0 = vector.load %arg2[%c0, %c0_0, %c0_1] : memref<1x16x512xf32, #tpu.memory_space<vmem>>, vector<1x16x512xf32>
    %1 = vector.shape_cast %0 : vector<1x16x512xf32> to vector<16x512xf32>
    %2 = tpu.iota {dimensions = array<i32: 1>} : vector<16x1xi32>
    %3 = vector.broadcast %arg1 : i32 to vector<16x1xi32>
    %4 = arith.cmpi eq, %2, %3 : vector<16x1xi32>
    %c0_2 = arith.constant 0 : index
    %c0_3 = arith.constant 0 : index
    %c0_4 = arith.constant 0 : index
    %5 = vector.load %arg3[%c0_2, %c0_3, %c0_4] : memref<1x16x1xf32, #tpu.memory_space<vmem>>, vector<1x16x1xf32>
    %6 = vector.shape_cast %5 : vector<1x16x1xf32> to vector<16x1xf32>
    %c0_5 = arith.constant 0 : index
    %c0_6 = arith.constant 0 : index
    %c0_7 = arith.constant 0 : index
    %7 = vector.load %arg4[%c0_5, %c0_6, %c0_7] : memref<1x16x1xf32, #tpu.memory_space<vmem>>, vector<1x16x1xf32>
    %8 = vector.shape_cast %7 : vector<1x16x1xf32> to vector<16x1xf32>
    %cst = arith.constant 0.000000e+00 : f32
    %9 = vector.broadcast %cst : f32 to vector<16x1xf32>
    %10 = arith.select %4, %6, %9 : vector<16x1xi1>, vector<16x1xf32>
    %cst_8 = arith.constant dense<0.000000e+00> : vector<16xf32>
    %11 = vector.multi_reduction <add>, %10, %cst_8 [1] : vector<16x1xf32> to vector<16xf32>
    %12 = vector.shape_cast %11 : vector<16xf32> to vector<16x1xf32>
    %cst_9 = arith.constant 0.000000e+00 : f32
    %13 = vector.broadcast %cst_9 : f32 to vector<16x1xf32>
    %14 = arith.select %4, %8, %13 : vector<16x1xi1>, vector<16x1xf32>
    %cst_10 = arith.constant dense<0.000000e+00> : vector<16xf32>
    %15 = vector.multi_reduction <add>, %14, %cst_10 [1] : vector<16x1xf32> to vector<16xf32>
    %16 = vector.shape_cast %15 : vector<16xf32> to vector<16x1xf32>
    %17 = tpu.iota {dimensions = array<i32: 1>} : vector<16x512xi32>
    %c0_i32 = arith.constant 0 : i32
    %18 = vector.broadcast %c0_i32 : i32 to vector<16x512xi32>
    %19 = arith.cmpi eq, %17, %18 : vector<16x512xi32>
    %c1_i32 = arith.constant 1 : i32
    %20 = tpu.dynamic_rotate %1 by %c1_i32 dim 1 : vector<16x512xf32>, i32 -> vector<16x512xf32>
    %21 = vector.shape_cast %12 : vector<16x1xf32> to vector<16x1xf32>
    %22 = vector.broadcast %21 : vector<16x1xf32> to vector<16x512xf32>
    %23 = arith.select %19, %22, %20 : vector<16x512xi1>, vector<16x512xf32>
    %c511_i32 = arith.constant 511 : i32
    %24 = vector.broadcast %c511_i32 : i32 to vector<16x512xi32>
    %25 = arith.cmpi eq, %17, %24 : vector<16x512xi32>
    %c511_i32_11 = arith.constant 511 : i32
    %26 = tpu.dynamic_rotate %1 by %c511_i32_11 dim 1 : vector<16x512xf32>, i32 -> vector<16x512xf32>
    %27 = vector.shape_cast %16 : vector<16x1xf32> to vector<16x1xf32>
    %28 = vector.broadcast %27 : vector<16x1xf32> to vector<16x512xf32>
    %29 = arith.select %25, %28, %26 : vector<16x512xi1>, vector<16x512xf32>
    %c0_12 = arith.constant 0 : index
    %c0_13 = arith.constant 0 : index
    %c0_14 = arith.constant 0 : index
    %30 = vector.load %arg5[%c0_12, %c0_13, %c0_14] : memref<3x8x16xf32, #tpu.memory_space<vmem>>, vector<1x8x16xf32>
    %31 = vector.shape_cast %30 : vector<1x8x16xf32> to vector<8x16xf32>
    %cst_15 = arith.constant dense<0.000000e+00> : vector<8x512xf32>
    %32 = tpu.matmul %31, %23, %cst_15 {dimension_numbers = #tpu.dot_dimension_numbers<[1], [0], [0], [1], [0, 0, 1, 1], [], []>, precision = #tpu.contract_precision<fp32>} : vector<8x16xf32>, vector<16x512xf32>, vector<8x512xf32> -> vector<8x512xf32>
    %c1 = arith.constant 1 : index
    %c0_16 = arith.constant 0 : index
    %c0_17 = arith.constant 0 : index
    %33 = vector.load %arg5[%c1, %c0_16, %c0_17] : memref<3x8x16xf32, #tpu.memory_space<vmem>>, vector<1x8x16xf32>
    %34 = vector.shape_cast %33 : vector<1x8x16xf32> to vector<8x16xf32>
    %cst_18 = arith.constant dense<0.000000e+00> : vector<8x512xf32>
    %35 = tpu.matmul %34, %1, %cst_18 {dimension_numbers = #tpu.dot_dimension_numbers<[1], [0], [0], [1], [0, 0, 1, 1], [], []>, precision = #tpu.contract_precision<fp32>} : vector<8x16xf32>, vector<16x512xf32>, vector<8x512xf32> -> vector<8x512xf32>
    %36 = arith.addf %32, %35 : vector<8x512xf32>
    %c2 = arith.constant 2 : index
    %c0_19 = arith.constant 0 : index
    %c0_20 = arith.constant 0 : index
    %37 = vector.load %arg5[%c2, %c0_19, %c0_20] : memref<3x8x16xf32, #tpu.memory_space<vmem>>, vector<1x8x16xf32>
    %38 = vector.shape_cast %37 : vector<1x8x16xf32> to vector<8x16xf32>
    %cst_21 = arith.constant dense<0.000000e+00> : vector<8x512xf32>
    %39 = tpu.matmul %38, %29, %cst_21 {dimension_numbers = #tpu.dot_dimension_numbers<[1], [0], [0], [1], [0, 0, 1, 1], [], []>, precision = #tpu.contract_precision<fp32>} : vector<8x16xf32>, vector<16x512xf32>, vector<8x512xf32> -> vector<8x512xf32>
    %40 = arith.addf %36, %39 : vector<8x512xf32>
    %c0_22 = arith.constant 0 : index
    %c0_23 = arith.constant 0 : index
    %c0_24 = arith.constant 0 : index
    %41 = vector.load %arg6[%c0_22, %c0_23, %c0_24] : memref<1x8x512xf32, #tpu.memory_space<vmem>>, vector<1x8x512xf32>
    %42 = vector.shape_cast %41 : vector<1x8x512xf32> to vector<8x512xf32>
    %43 = vector.shape_cast %40 : vector<8x512xf32> to vector<1x8x512xf32>
    tpu.vector_store %arg6[%c0_22, %c0_23, %c0_24], %43 {strides = array<i32>} : memref<1x8x512xf32, #tpu.memory_space<vmem>>, vector<1x8x512xf32>,
    return
  }
  func.func @transform_0(%arg0: i32, %arg1: i32) -> (i32, i32, i32) {
    %c0_i32 = arith.constant 0 : i32
    %c0_i32_0 = arith.constant 0 : i32
    return %arg0, %c0_i32, %arg1 : i32, i32, i32
  }
  func.func @transform_1(%arg0: i32, %arg1: i32) -> (i32, i32, i32) {
    %c0_i32 = arith.constant 0 : i32
    %c0_i32_0 = arith.constant 0 : i32
    %c0_i32_1 = arith.constant 0 : i32
    return %arg0, %c0_i32, %c0_i32_0 : i32, i32, i32
  }
  func.func @transform_2(%arg0: i32, %arg1: i32) -> (i32, i32, i32) {
    %c0_i32 = arith.constant 0 : i32
    %c0_i32_0 = arith.constant 0 : i32
    %c0_i32_1 = arith.constant 0 : i32
    return %arg0, %c0_i32, %c0_i32_0 : i32, i32, i32
  }
  func.func @transform_3(%arg0: i32, %arg1: i32) -> (i32, i32, i32) {
    %c0_i32 = arith.constant 0 : i32
    %c0_i32_0 = arith.constant 0 : i32
    %c0_i32_1 = arith.constant 0 : i32
    %c0_i32_2 = arith.constant 0 : i32
    return %c0_i32, %c0_i32_0, %c0_i32_1 : i32, i32, i32
  }
  func.func @transform_4(%arg0: i32, %arg1: i32) -> (i32, i32, i32) {
    %c0_i32 = arith.constant 0 : i32
    %c0_i32_0 = arith.constant 0 : i32
    return %arg0, %c0_i32, %arg1 : i32, i32, i32
  }
}

</mosaic_0001>

<llo_original>
// kernel: tpu_custom_call.1
$region0: #{tpu_custom_call.1}
  #allocation0 [shape = 'u32[]', space=smem, size = 0x4, offset = 0x4, fixed_abs, tag = 'smem constant byte address 0x4 - core index']
  #allocation1 [shape = 'u32[144,128]{1,0:T(1,128)}', space=vmem, size = 0x12000, scoped, tag = 'internal scratch']
  %s0 = inlined_call_operand.hbm [shape: f32[2,16,512], index: 0, kind: input, shape index: {}]
  %s1 = inlined_call_operand.vmem [shape: f32[2,16,1], index: 1, kind: input, shape index: {}]
  %s2 = inlined_call_operand.vmem [shape: f32[2,16,1], index: 2, kind: input, shape index: {}]
  %s3 = inlined_call_operand.vmem [shape: f32[3,8,16], index: 3, kind: input, shape index: {}]
  %s4 = inlined_call_operand.hbm [shape: f32[2,8,512], index: 4, kind: output, shape index: {}]
  %s5 = sld [smem:[#allocation0]]
  $region53: #{tpu_custom_call.1} parent=0
    _
  %s7 = ssub.s32 1, %s5
  %s8 = scalar_select 0, %s7, %s5
  $region1: #{tpu_custom_call.1} parent=0
    #allocation2 [shape = 'u8[65536]{0}', space=vmem, size = 0x10000, scoped, tag = 'input window, operand 0']
    #allocation3 [shape = 's32[2]{0}', space=sflag, size = 0x8, scoped, tag = 'scoped memory for tpu_custom_call.1']
    #allocation4 [shape = 's32[2]{0}', space=sflag, size = 0x8, scoped, tag = 'scoped memory for tpu_custom_call.1']
    #allocation5 [shape = 'u8[32768]{0}', space=vmem, size = 0x8000, scoped, tag = 'output window, operand 0']
    %9 = vsyncpa [#allocation3], 0
    %s10 = scalar_lea.sflag [#allocation3], 1
    %11 = vsyncpa %s10, 0
    %12 = vsyncpa [#allocation4], 0
    %s13 = scalar_lea.sflag [#allocation4], 1
    %14 = vsyncpa %s13, 0
    loop: start=0, step=1, limit=4
    $region2: #{tpu_custom_call.1} parent=1 // loop_pre_header
      _
    $region3: #{tpu_custom_call.1} parent=1 // loop_header
      %s16 = sphi 0, %s20
      %p17 = scmp.ge.s32.totalorder %s16, 4
      %s23 = sphi 0, %s35
      %s24 = sphi 0, %s31
      %s25 = sphi 0, %s23
      %s26 = sphi 0, %s24
      %s27 = sphi 0, %s25
      %s28 = sphi 0, %s26
      %s40 = sphi 0, %s42
      %s43 = sphi 0, %s40
      %s44 = sphi 0, %s43
      %s60 = sphi 0, %s44
      %s66 = sphi 0, %s68
      %s69 = sphi 0, %s66
      %s70 = sphi 0, %s69
      %s86 = sphi 0, %s70
      %s92 = sphi 0, %s94
      %s95 = sphi 0, %s92
      %s96 = sphi 0, %s95
      %s112 = sphi 0, %s96
      %s116 = sphi 0, %s116
      %s118 = sphi 0, %s116
      %s119 = sphi 0, %s118
      %s133 = sphi 0, %s119
      %s141 = sphi 0, %s143
      %s144 = sphi 0, %s141
      %s145 = sphi 0, %s144
      %s161 = sphi 0, %s145
    $region4: #{tpu_custom_call.1} parent=1 // loop_header_branch
      %19 = sbr.rel (%p17) target = $region8
    $region5: #{tpu_custom_call.1} parent=1 // loop_body
      %s21 = ssub.s32 %s16, 1
      %s22 = ssub.s32 %s16, 2
      %s29 = sadd.s32 1, %s24
      %p30 = scmp.ge.s32.totalorder %s29, 1
      %s31 = scalar_select %p30, 0, %s29
      %s32 = sadd.s32 1, %s23
      %s33 = scalar_select %p30, %s32, %s23
      %p34 = scmp.ge.s32.totalorder %s33, 2
      %s35 = scalar_select %p34, 0, %s33
      %s36 = ssub.s32 %s23, %s35
      %s37 = ssub.s32 %s24, %s31
      %s38 = sor.u32 %s36, %s37
      %p39 = scmp.eq.s32.totalorder %s38, 0
      %s41 = sadd.s32 %s40, 1
      %s42 = scalar_select %p39, %s40, %s41
      %p45 = pneg %p39
      %p46 = scmp.eq.s32.totalorder %s16, 1
      %p47 = por %p45, %p46
      %p48 = scmp.ne.s32.totalorder %s40, %s43
      %p49 = scmp.eq.s32.totalorder %s16, 0
      %p50 = por %p48, %p49
      %p51 = scmp.ne.s32.totalorder %s40, %s43
      %p52 = scmp.eq.s32.totalorder %s21, 1
      %p53 = por %p51, %p52
      %p54 = scmp.ne.s32.totalorder %s43, %s44
      %p55 = scmp.eq.s32.totalorder %s21, 0
      %p56 = por %p54, %p55
      %p57 = scmp.ne.s32.totalorder %s43, %s44
      %p58 = scmp.eq.s32.totalorder %s22, 1
      %p59 = por %p57, %p58
      %p61 = scmp.ne.s32.totalorder %s44, %s60
      %p62 = scmp.eq.s32.totalorder %s22, 0
      %p63 = por %p61, %p62
      %s64 = ssub.s32 %s23, %s35
      %p65 = scmp.eq.s32.totalorder %s64, 0
      %s67 = sadd.s32 %s66, 1
      %s68 = scalar_select %p65, %s66, %s67
      %p71 = pneg %p65
      %p72 = scmp.eq.s32.totalorder %s16, 1
      %p73 = por %p71, %p72
      %p74 = scmp.ne.s32.totalorder %s66, %s69
      %p75 = scmp.eq.s32.totalorder %s16, 0
      %p76 = por %p74, %p75
      %p77 = scmp.ne.s32.totalorder %s66, %s69
      %p78 = scmp.eq.s32.totalorder %s21, 1
      %p79 = por %p77, %p78
      %p80 = scmp.ne.s32.totalorder %s69, %s70
      %p81 = scmp.eq.s32.totalorder %s21, 0
      %p82 = por %p80, %p81
      %p83 = scmp.ne.s32.totalorder %s69, %s70
      %p84 = scmp.eq.s32.totalorder %s22, 1
      %p85 = por %p83, %p84
      %p87 = scmp.ne.s32.totalorder %s70, %s86
      %p88 = scmp.eq.s32.totalorder %s22, 0
      %p89 = por %p87, %p88
      %s90 = ssub.s32 %s23, %s35
      %p91 = scmp.eq.s32.totalorder %s90, 0
      %s93 = sadd.s32 %s92, 1
      %s94 = scalar_select %p91, %s92, %s93
      %p97 = pneg %p91
      %p98 = scmp.eq.s32.totalorder %s16, 1
      %p99 = por %p97, %p98
      %p100 = scmp.ne.s32.totalorder %s92, %s95
      %p101 = scmp.eq.s32.totalorder %s16, 0
      %p102 = por %p100, %p101
      %p103 = scmp.ne.s32.totalorder %s92, %s95
      %p104 = scmp.eq.s32.totalorder %s21, 1
      %p105 = por %p103, %p104
      %p106 = scmp.ne.s32.totalorder %s95, %s96
      %p107 = scmp.eq.s32.totalorder %s21, 0
      %p108 = por %p106, %p107
      %p109 = scmp.ne.s32.totalorder %s95, %s96
      %p110 = scmp.eq.s32.totalorder %s22, 1
      %p111 = por %p109, %p110
      %p113 = scmp.ne.s32.totalorder %s96, %s112
      %p114 = scmp.eq.s32.totalorder %s22, 0
      %p115 = por %p113, %p114
      %s117 = sadd.s32 %s116, 1
      %p120 = scmp.eq.s32.totalorder %s16, 1
      %p121 = scmp.ne.s32.totalorder %s116, %s118
      %p122 = scmp.eq.s32.totalorder %s16, 0
      %p123 = por %p121, %p122
      %p124 = scmp.ne.s32.totalorder %s116, %s118
      %p125 = scmp.eq.s32.totalorder %s21, 1
      %p126 = por %p124, %p125
      %p127 = scmp.ne.s32.totalorder %s118, %s119
      %p128 = scmp.eq.s32.totalorder %s21, 0
      %p129 = por %p127, %p128
      %p130 = scmp.ne.s32.totalorder %s118, %s119
      %p131 = scmp.eq.s32.totalorder %s22, 1
      %p132 = por %p130, %p131
      %p134 = scmp.ne.s32.totalorder %s119, %s133
      %p135 = scmp.eq.s32.totalorder %s22, 0
      %p136 = por %p134, %p135
      %s137 = ssub.s32 %s23, %s35
      %s138 = ssub.s32 %s24, %s31
      %s139 = sor.u32 %s137, %s138
      %p140 = scmp.eq.s32.totalorder %s139, 0
      %s142 = sadd.s32 %s141, 1
      %s143 = scalar_select %p140, %s141, %s142
      %p146 = pneg %p140
      %p147 = scmp.eq.s32.totalorder %s16, 1
      %p148 = por %p146, %p147
      %p149 = scmp.ne.s32.totalorder %s141, %s144
      %p150 = scmp.eq.s32.totalorder %s16, 0
      %p151 = por %p149, %p150
      %p152 = scmp.ne.s32.totalorder %s141, %s144
      %p153 = scmp.eq.s32.totalorder %s21, 1
      %p154 = por %p152, %p153
      %p155 = scmp.ne.s32.totalorder %s144, %s145
      %p156 = scmp.eq.s32.totalorder %s21, 0
      %p157 = por %p155, %p156
      %p158 = scmp.ne.s32.totalorder %s144, %s145
      %p159 = scmp.eq.s32.totalorder %s22, 1
      %p160 = por %p158, %p159
      %p162 = scmp.ne.s32.totalorder %s145, %s161
      %p163 = scmp.eq.s32.totalorder %s22, 0
      %p164 = por %p162, %p163
      %p165 = scmp.le.s32.totalorder 1, %s16
      %p166 = scmp.lt.s32.totalorder %s16, 3
      %p167 = pnand %p165, %p166
      %p168 = pneg %p167
      // Predicated region
      $region9: #{tpu_custom_call.1} parent=5 // pred_check
        _
      $region10: #{tpu_custom_call.1} parent=5 // pred_check_branch
        %170 = sbr.rel (%p167) target = $region12
      $region11: #{tpu_custom_call.1} parent=5 // pred_region
        %s171 = ssub.s32 %s16, 1
        // Predicated region
        $region13: #{tpu_custom_call.1} parent=11 // pred_check
          %p172 = pneg %p129
        $region14: #{tpu_custom_call.1} parent=11 // pred_check_branch
          %174 = sbr.rel (%p172) target = $region16
        $region15: #{tpu_custom_call.1} parent=11 // pred_region
          _
        $region16: #{tpu_custom_call.1} parent=11 // pred_fallthru
          _
      $region12: #{tpu_custom_call.1} parent=5 // pred_fallthru
        _
      %p175 = scmp.lt.s32.totalorder %s16, 2
      // Predicated region
      $region17: #{tpu_custom_call.1} parent=5 // pred_check
        %p176 = pneg %p175
      $region18: #{tpu_custom_call.1} parent=5 // pred_check_branch
        %178 = sbr.rel (%p176) target = $region20
      $region19: #{tpu_custom_call.1} parent=5 // pred_region
        // Predicated region
        $region21: #{tpu_custom_call.1} parent=19 // pred_check
          %p179 = pneg %p50
        $region22: #{tpu_custom_call.1} parent=19 // pred_check_branch
          %181 = sbr.rel (%p179) target = $region24
        $region23: #{tpu_custom_call.1} parent=19 // pred_region
          %s182 = sand.u32 %s40, 1
          %s183 = scalar_lea.sflag [#allocation3], %s182
          %s184 = sand.u32 %s40, 1
          %s185 = smul.addr %s184, 64
          %s186 = scalar_lea.vmem [#allocation2], %s185
          %s187 = smul.u32 4, %s24
          %s189 = ssub.s32 1024, 1024
          %190 = vsyncadd %s183, %s189
          %s191 = smul.addr %s23, 8
          %s192 = sadd.s32 %s187, %s191
          %s193 = smul.addr %s192, 128
          %s194 = scalar_lea.hbm %s0, %s193
          %s195 = sshll.u32 %s186, 4
          %s196 = int_to_ptr.vmem [resolvable:$true] %s195
          %201 = dma.hbm_to_vmem [thread:$0]  %s194, 1024, %s196, %s183, 512, 512, 32
        $region24: #{tpu_custom_call.1} parent=19 // pred_fallthru
          _
        // Predicated region
        $region25: #{tpu_custom_call.1} parent=19 // pred_check
          %p202 = pneg %p76
        $region26: #{tpu_custom_call.1} parent=19 // pred_check_branch
          %204 = sbr.rel (%p202) target = $region28
        $region27: #{tpu_custom_call.1} parent=19 // pred_region
          %p205 = scmp.lt.s32.totalorder %s23, 1
          %s206 = scalar_select %p205, %s23, 1
          %s207 = smul.addr %s206, 2
          %s208 = smul.addr %s207, 8
          %s209 = scalar_lea.vmem %s1, %s208
        $region28: #{tpu_custom_call.1} parent=19 // pred_fallthru
          _
        // Predicated region
        $region29: #{tpu_custom_call.1} parent=19 // pred_check
          %p210 = pneg %p102
        $region30: #{tpu_custom_call.1} parent=19 // pred_check_branch
          %212 = sbr.rel (%p210) target = $region32
        $region31: #{tpu_custom_call.1} parent=19 // pred_region
          %p213 = scmp.lt.s32.totalorder %s23, 1
          %s214 = scalar_select %p213, %s23, 1
          %s215 = smul.addr %s214, 2
          %s216 = smul.addr %s215, 8
          %s217 = scalar_lea.vmem %s2, %s216
        $region32: #{tpu_custom_call.1} parent=19 // pred_fallthru
          _
      $region20: #{tpu_custom_call.1} parent=5 // pred_fallthru
        _
      %p218 = scmp.le.s32.totalorder 1, %s16
      %p219 = scmp.lt.s32.totalorder %s16, 3
      %p220 = pnand %p218, %p219
      %p221 = pneg %p220
      // Predicated region
      $region33: #{tpu_custom_call.1} parent=5 // pred_check
        _
      $region34: #{tpu_custom_call.1} parent=5 // pred_check_branch
        %223 = sbr.rel (%p220) target = $region36
      $region35: #{tpu_custom_call.1} parent=5 // pred_region
        %s224 = ssub.s32 %s16, 1
        %s225 = sand.u32 %s43, 1
        %s226 = scalar_lea.sflag [#allocation3], %s225
        %s227 = sand.u32 %s43, 1
        %s228 = smul.addr %s227, 64
        %s229 = scalar_lea.vmem [#allocation2], %s228
        // Predicated region
        $region37: #{tpu_custom_call.1} parent=35 // pred_check
          %p230 = pneg %p56
        $region38: #{tpu_custom_call.1} parent=35 // pred_check_branch
          %232 = sbr.rel (%p230) target = $region40
        $region39: #{tpu_custom_call.1} parent=35 // pred_region
          %233 = dma.done %s226, 1024
        $region40: #{tpu_custom_call.1} parent=35 // pred_fallthru
          _
        %s234 = sand.u32 %s43, 1
        %s235 = scalar_lea.sflag [#allocation3], %s234
        %s236 = sand.u32 %s43, 1
        %s237 = smul.addr %s236, 64
        %s238 = scalar_lea.vmem [#allocation2], %s237
        %p239 = pneg %p56
        %p240 = pneg %p53
        %p241 = scmp.lt.s32.totalorder %s25, 1
        %s242 = scalar_select %p241, %s25, 1
        %s243 = smul.addr %s242, 2
        %s244 = smul.addr %s243, 8
        %s245 = scalar_lea.vmem %s1, %s244
        %p246 = pneg %p82
        %p247 = pneg %p79
        %p248 = scmp.lt.s32.totalorder %s25, 1
        %s249 = scalar_select %p248, %s25, 1
        %s250 = smul.addr %s249, 2
        %s251 = smul.addr %s250, 8
        %s252 = scalar_lea.vmem %s2, %s251
        %p253 = pneg %p108
        %p254 = pneg %p105
        %p255 = pneg %p129
        %p256 = pneg %p126
        %p257 = pneg %p157
        %p258 = pneg %p154
        %s259 = sand.u32 %s144, 1
        %s260 = scalar_lea.sflag [#allocation4], %s259
        %s261 = sand.u32 %s144, 1
        %s262 = smul.addr %s261, 32
        %s263 = scalar_lea.vmem [#allocation5], %s262
        %s264 = smul.u32 4, %s26
        %p265 = scmp.lt.s32.totalorder %s25, 1
        %s266 = scalar_select %p265, %s25, 1
        %s267 = smul.addr %s266, 2
        %s268 = smul.addr %s267, 8
        %s269 = scalar_lea.vmem %s1, %s268
        %p270 = scmp.lt.s32.totalorder %s25, 1
        %s271 = scalar_select %p270, %s25, 1
        %s272 = smul.addr %s271, 2
        %s273 = smul.addr %s272, 8
        %s274 = scalar_lea.vmem %s2, %s273
        %s275 = smul.u32 4, %s26
        %v276 = vld [vmem:[%s229] sm:$0xff]
        %v277 = vld [vmem:[%s229 + $0x8] sm:$0xff]
        %v278 = vld [vmem:[%s229 + $0x10] sm:$0xff]
        %v279 = vld [vmem:[%s229 + $0x18] sm:$0xff]
        %v280 = vld [vmem:[%s229 + $0x20] sm:$0xff]
        %v281 = vld [vmem:[%s229 + $0x28] sm:$0xff]
        %v282 = vld [vmem:[%s229 + $0x30] sm:$0xff]
        %v283 = vld [vmem:[%s229 + $0x38] sm:$0xff]
        %v284 = vlaneseq
        %v285 = vand.u32 %v284, 127
        %v286 = vstv %s26
        %vm287 = vcmp.eq.s32.totalorder %v285, %v286
        %v288 = vld [vmem:[%s269] sm:$0xff]
        %v289 = vld [vmem:[%s269 + $0x8] sm:$0xff]
        %v290 = vld [vmem:[%s274] sm:$0xff]
        %v291 = vld [vmem:[%s274 + $0x8] sm:$0xff]
        %v292 = vsel %vm287, %v288, 0.0
        %v293 = vsel %vm287, %v289, 0.0
        %v294 = vadd.f32 %v292, 0.0
        %v295 = vadd.f32 %v293, 0.0
        %v296 = vsel %vm287, %v290, 0.0
        %v297 = vsel %vm287, %v291, 0.0
        %v298 = vadd.f32 %v296, 0.0
        %v299 = vadd.f32 %v297, 0.0
        %v300 = vadd.s32 %v285, 128
        %v301 = vadd.s32 %v285, 256
        %v302 = vadd.s32 %v285, 384
        %vm303 = vcmp.eq.s32.totalorder %v285, 0
        %vm304 = vcmp.eq.s32.totalorder %v300, 0
        %vm305 = vcmp.eq.s32.totalorder %v301, 0
        %vm306 = vcmp.eq.s32.totalorder %v302, 0
        %307 = vrot.lane.b32.xlu0 %v276, 1
        %v308 = vpop.permute.xlu0 %307
        %309 = vrot.lane.b32.xlu0 %v280, 1
        %v310 = vpop.permute.xlu0 %309
        %311 = vrot.lane.b32.xlu0 %v277, 1
        %v312 = vpop.permute.xlu0 %311
        %313 = vrot.lane.b32.xlu0 %v281, 1
        %v314 = vpop.permute.xlu0 %313
        %315 = vrot.lane.b32.xlu0 %v278, 1
        %v316 = vpop.permute.xlu0 %315
        %317 = vrot.lane.b32.xlu0 %v282, 1
        %v318 = vpop.permute.xlu0 %317
        %319 = vrot.lane.b32.xlu0 %v279, 1
        %v320 = vpop.permute.xlu0 %319
        %321 = vrot.lane.b32.xlu0 %v283, 1
        %v322 = vpop.permute.xlu0 %321
        %vm323 = vcmp.lt.s32.totalorder %v285, 1
        %v324 = vsel %vm323, %v316, %v320
        %v325 = vsel %vm323, %v318, %v322
        %v326 = vsel %vm323, %v312, %v316
        %v327 = vsel %vm323, %v314, %v318
        %v328 = vsel %vm323, %v308, %v312
        %v329 = vsel %vm323, %v310, %v314
        %v330 = vsel %vm323, %v320, %v308
        %v331 = vsel %vm323, %v322, %v310
        %333 = vset.pattern.permute.xlu0 0
        %334 = vperm.xlu0 %333, %v294
        %v335 = vpop.permute.xlu0 %334
        %338 = vset.pattern.permute.xlu0 0
        %339 = vperm.xlu0 %338, %v295
        %v340 = vpop.permute.xlu0 %339
        %v342 = vsel %vm303, %v335, %v330
        %v343 = vsel %vm304, %v335, %v328
        %v344 = vsel %vm305, %v335, %v326
        %v345 = vsel %vm306, %v335, %v324
        %v346 = vsel %vm303, %v340, %v331
        %v347 = vsel %vm304, %v340, %v329
        %v348 = vsel %vm305, %v340, %v327
        %v349 = vsel %vm306, %v340, %v325
        %vm350 = vcmp.eq.s32.totalorder %v285, 511
        %vm351 = vcmp.eq.s32.totalorder %v300, 511
        %vm352 = vcmp.eq.s32.totalorder %v301, 511
        %vm353 = vcmp.eq.s32.totalorder %v302, 511
        %354 = vrot.lane.b32.xlu0 %v276, 127
        %v355 = vpop.permute.xlu0 %354
        %356 = vrot.lane.b32.xlu0 %v280, 127
        %v357 = vpop.permute.xlu0 %356
        %358 = vrot.lane.b32.xlu0 %v277, 127
        %v359 = vpop.permute.xlu0 %358
        %360 = vrot.lane.b32.xlu0 %v281, 127
        %v361 = vpop.permute.xlu0 %360
        %362 = vrot.lane.b32.xlu0 %v278, 127
        %v363 = vpop.permute.xlu0 %362
        %364 = vrot.lane.b32.xlu0 %v282, 127
        %v365 = vpop.permute.xlu0 %364
        %366 = vrot.lane.b32.xlu0 %v279, 127
        %v367 = vpop.permute.xlu0 %366
        %368 = vrot.lane.b32.xlu0 %v283, 127
        %v369 = vpop.permute.xlu0 %368
        %vm370 = vcmp.lt.s32.totalorder %v285, 127
        %v371 = vsel %vm370, %v363, %v367
        %v372 = vsel %vm370, %v365, %v369
        %v373 = vsel %vm370, %v359, %v363
        %v374 = vsel %vm370, %v361, %v365
        %v375 = vsel %vm370, %v355, %v359
        %v376 = vsel %vm370, %v357, %v361
        %v377 = vsel %vm370, %v367, %v355
        %v378 = vsel %vm370, %v369, %v357
        %380 = vset.pattern.permute.xlu0 0
        %381 = vperm.xlu0 %380, %v298
        %v382 = vpop.permute.xlu0 %381
        %385 = vset.pattern.permute.xlu0 0
        %386 = vperm.xlu0 %385, %v299
        %v387 = vpop.permute.xlu0 %386
        %v389 = vsel %vm350, %v382, %v375
        %v390 = vsel %vm351, %v382, %v373
        %v391 = vsel %vm352, %v382, %v371
        %v392 = vsel %vm353, %v382, %v377
        %v393 = vsel %vm350, %v387, %v376
        %v394 = vsel %vm351, %v387, %v374
        %v395 = vsel %vm352, %v387, %v372
        %v396 = vsel %vm353, %v387, %v378
        %v397 = vld [vmem:[%s3] sm:$0xff]
        %s398 = scalar_lea.vmem %s3, 8
        %v399 = vld [vmem:[%s398] sm:$0xff]
        %vm400 = vcmask 130048
        %v402 = vsel %vm400, %v399, 0
        %v404 = vand.u32 %v277, 4294901760
        %405 = vmatprep.subr.mxu0 %v404
        %v406 = vand.u32 %v276, 4294901760
        %407 = vmatpush1.msra.mxu0 %v406
        %v408 = vand.u32 %v281, 4294901760
        %409 = vmatprep.subr.mxu0 %v408
        %v410 = vand.u32 %v280, 4294901760
        %411 = vmatpush1.msra.mxu0 %v410
        %412 = vmatprep.subr.mxu0 0.0
        %413 = vmatpush1.msra.mxu0 0.0
        %414 = vmatprep.subr.mxu0 0.0
        %415 = vmatpush1.msra.mxu0 0.0
        %416 = vmatprep.subr.mxu0 0.0
        %417 = vmatpush1.msra.mxu0 0.0
        %418 = vmatprep.subr.mxu0 0.0
        %419 = vmatpush1.msra.mxu0 0.0
        %420 = vmatprep.subr.mxu0 0.0
        %421 = vmatpush1.msra.mxu0 0.0
        %422 = vmatprep.subr.mxu0 0.0
        %423 = vmatpush1.msra.mxu0 0.0
        %424 = vmatprep.subr.mxu0 0.0
        %425 = vmatpush1.msra.mxu0 0.0
        %426 = vmatprep.subr.mxu0 0.0
        %427 = vmatpush1.msra.mxu0 0.0
        %428 = vmatprep.subr.mxu0 0.0
        %429 = vmatpush1.msra.mxu0 0.0
        %430 = vmatprep.subr.mxu0 0.0
        %431 = vmatpush1.msra.mxu0 0.0
        %432 = vmatprep.subr.mxu0 0.0
        %433 = vmatpush1.msra.mxu0 0.0
        %434 = vmatprep.subr.mxu0 0.0
        %435 = vmatpush1.msra.mxu0 0.0
        %436 = vmatprep.subr.mxu0 0.0
        %437 = vmatpush1.msra.mxu0 0.0
        %438 = vmatprep.subr.mxu0 0.0
        %439 = vmatpush1.msra.mxu0 0.0
        %440 = vmatprep.subr.mxu0 0.0
        %441 = vmatpush1.msra.mxu0 0.0
        %442 = vmatprep.subr.mxu0 0.0
        %443 = vmatpush1.msra.mxu0 0.0
        %444 = vmatprep.subr.mxu0 0.0
        %445 = vmatpush1.msra.mxu0 0.0
        %446 = vmatprep.subr.mxu0 0.0
        %447 = vmatpush1.msra.mxu0 0.0
        %448 = vmatprep.subr.mxu0 0.0
        %449 = vmatpush1.msra.mxu0 0.0
        %450 = vmatprep.subr.mxu0 0.0
        %451 = vmatpush1.msra.mxu0 0.0
        %452 = vmatprep.subr.mxu0 0.0
        %453 = vmatpush1.msra.mxu0 0.0
        %454 = vmatprep.subr.mxu0 0.0
        %455 = vmatpush1.msra.mxu0 0.0
        %456 = vmatprep.subr.mxu0 0.0
        %457 = vmatpush1.msra.mxu0 0.0
        %458 = vmatprep.subr.mxu0 0.0
        %459 = vmatpush1.msra.mxu0 0.0
        %460 = vmatprep.subr.mxu0 0.0
        %461 = vmatpush1.msra.mxu0 0.0
        %462 = vmatprep.subr.mxu0 0.0
        %463 = vmatpush1.msra.mxu0 0.0
        %464 = vmatprep.subr.mxu0 0.0
        %465 = vmatpush1.msra.mxu0 0.0
        %466 = vmatprep.subr.mxu0 0.0
        %467 = vmatpush1.msra.mxu0 0.0
        %468 = vmatprep.subr.mxu0 0.0
        %469 = vmatpush1.msra.mxu0 0.0
        %470 = vmatprep.subr.mxu0 0.0
        %471 = vmatpush1.msra.mxu0 0.0
        %472 = vmatprep.mubr.f32.mxu0 0.0
        %v473 = vand.u32 %v402, 4294901760
        %v474 = vsub.f32 %v402, %v473
        %v475 = vand.u32 %v474, 4294901760
        %v476 = vsub.f32 %v474, %v475
        %v477 = vand.u32 %v476, 4294901760
        %478 = vmatmul.mubr.f32.gmra.mrb[0].mxu0 %v477
        %v479 = vpop.f32.mrb[0].mxu0
        %v480 = vadd.f32 0.0, %v479
        %v481 = vpop.f32.mrb[0].mxu0
        %v482 = vadd.f32 0.0, %v481
        %483 = vdwg.mxu0
        %v484 = vand.u32 %v277, 4294901760
        %v485 = vsub.f32 %v277, %v484
        %v486 = vand.u32 %v485, 4294901760
        %v487 = vsub.f32 %v485, %v486
        %v488 = vand.u32 %v487, 4294901760
        %489 = vmatprep.subr.mxu0 %v488
        %v490 = vand.u32 %v276, 4294901760
        %v491 = vsub.f32 %v276, %v490
        %v492 = vand.u32 %v491, 4294901760
        %v493 = vsub.f32 %v491, %v492
        %v494 = vand.u32 %v493, 4294901760
        %495 = vmatpush1.msra.mxu0 %v494
        %v496 = vand.u32 %v281, 4294901760
        %v497 = vsub.f32 %v281, %v496
        %v498 = vand.u32 %v497, 4294901760
        %v499 = vsub.f32 %v497, %v498
        %v500 = vand.u32 %v499, 4294901760
        %501 = vmatprep.subr.mxu0 %v500
        %v502 = vand.u32 %v280, 4294901760
        %v503 = vsub.f32 %v280, %v502
        %v504 = vand.u32 %v503, 4294901760
        %v505 = vsub.f32 %v503, %v504
        %v506 = vand.u32 %v505, 4294901760
        %507 = vmatpush1.msra.mxu0 %v506
        %508 = vmatprep.subr.mxu0 0.0
        %509 = vmatpush1.msra.mxu0 0.0
        %510 = vmatprep.subr.mxu0 0.0
        %511 = vmatpush1.msra.mxu0 0.0
        %512 = vmatprep.subr.mxu0 0.0
        %513 = vmatpush1.msra.mxu0 0.0
        %514 = vmatprep.subr.mxu0 0.0
        %515 = vmatpush1.msra.mxu0 0.0
        %516 = vmatprep.subr.mxu0 0.0
        %517 = vmatpush1.msra.mxu0 0.0
        %518 = vmatprep.subr.mxu0 0.0
        %519 = vmatpush1.msra.mxu0 0.0
        %520 = vmatprep.subr.mxu0 0.0
        %521 = vmatpush1.msra.mxu0 0.0
        %522 = vmatprep.subr.mxu0 0.0
        %523 = vmatpush1.msra.mxu0 0.0
        %524 = vmatprep.subr.mxu0 0.0
        %525 = vmatpush1.msra.mxu0 0.0
        %526 = vmatprep.subr.mxu0 0.0
        %527 = vmatpush1.msra.mxu0 0.0
        %528 = vmatprep.subr.mxu0 0.0
        %529 = vmatpush1.msra.mxu0 0.0
        %530 = vmatprep.subr.mxu0 0.0
        %531 = vmatpush1.msra.mxu0 0.0
        %532 = vmatprep.subr.mxu0 0.0
        %533 = vmatpush1.msra.mxu0 0.0
        %534 = vmatprep.subr.mxu0 0.0
        %535 = vmatpush1.msra.mxu0 0.0
        %536 = vmatprep.subr.mxu0 0.0
        %537 = vmatpush1.msra.mxu0 0.0
        %538 = vmatprep.subr.mxu0 0.0
        %539 = vmatpush1.msra.mxu0 0.0
        %540 = vmatprep.subr.mxu0 0.0
        %541 = vmatpush1.msra.mxu0 0.0
        %542 = vmatprep.subr.mxu0 0.0
        %543 = vmatpush1.msra.mxu0 0.0
        %544 = vmatprep.subr.mxu0 0.0
        %545 = vmatpush1.msra.mxu0 0.0
        %546 = vmatprep.subr.mxu0 0.0
        %547 = vmatpush1.msra.mxu0 0.0
        %548 = vmatprep.subr.mxu0 0.0
        %549 = vmatpush1.msra.mxu0 0.0
        %550 = vmatprep.subr.mxu0 0.0
        %551 = vmatpush1.msra.mxu0 0.0
        %552 = vmatprep.subr.mxu0 0.0
        %553 = vmatpush1.msra.mxu0 0.0
        %554 = vmatprep.subr.mxu0 0.0
        %555 = vmatpush1.msra.mxu0 0.0
        %556 = vmatprep.subr.mxu0 0.0
        %557 = vmatpush1.msra.mxu0 0.0
        %558 = vmatprep.subr.mxu0 0.0
        %559 = vmatpush1.msra.mxu0 0.0
        %560 = vmatprep.subr.mxu0 0.0
        %561 = vmatpush1.msra.mxu0 0.0
        %562 = vmatprep.subr.mxu0 0.0
        %563 = vmatpush1.msra.mxu0 0.0
        %564 = vmatprep.subr.mxu0 0.0
        %565 = vmatpush1.msra.mxu0 0.0
        %566 = vmatprep.subr.mxu0 0.0
        %567 = vmatpush1.msra.mxu0 0.0
        %568 = vmatprep.mubr.f32.mxu0 0.0
        %v569 = vand.u32 %v402, 4294901760
        %570 = vmatmul.mubr.f32.gmra.mrb[0].mxu0 %v569
        %v571 = vpop.f32.mrb[0].mxu0
        %v572 = vadd.f32 %v480, %v571
        %v573 = vpop.f32.mrb[0].mxu0
        %v574 = vadd.f32 %v482, %v573
        %575 = vdwg.mxu0
        %v576 = vand.u32 %v277, 4294901760
        %v577 = vsub.f32 %v277, %v576
        %578 = vmatprep.subr.mxu0 %v577
        %v579 = vand.u32 %v276, 4294901760
        %v580 = vsub.f32 %v276, %v579
        %581 = vmatpush1.msra.mxu0 %v580
        %v582 = vand.u32 %v281, 4294901760
        %v583 = vsub.f32 %v281, %v582
        %584 = vmatprep.subr.mxu0 %v583
        %v585 = vand.u32 %v280, 4294901760
        %v586 = vsub.f32 %v280, %v585
        %587 = vmatpush1.msra.mxu0 %v586
        %588 = vmatprep.subr.mxu0 0.0
        %589 = vmatpush1.msra.mxu0 0.0
        %590 = vmatprep.subr.mxu0 0.0
        %591 = vmatpush1.msra.mxu0 0.0
        %592 = vmatprep.subr.mxu0 0.0
        %593 = vmatpush1.msra.mxu0 0.0
        %594 = vmatprep.subr.mxu0 0.0
        %595 = vmatpush1.msra.mxu0 0.0
        %596 = vmatprep.subr.mxu0 0.0
        %597 = vmatpush1.msra.mxu0 0.0
        %598 = vmatprep.subr.mxu0 0.0
        %599 = vmatpush1.msra.mxu0 0.0
        %600 = vmatprep.subr.mxu0 0.0
        %601 = vmatpush1.msra.mxu0 0.0
        %602 = vmatprep.subr.mxu0 0.0
        %603 = vmatpush1.msra.mxu0 0.0
        %604 = vmatprep.subr.mxu0 0.0
        %605 = vmatpush1.msra.mxu0 0.0
        %606 = vmatprep.subr.mxu0 0.0
        %607 = vmatpush1.msra.mxu0 0.0
        %608 = vmatprep.subr.mxu0 0.0
        %609 = vmatpush1.msra.mxu0 0.0
        %610 = vmatprep.subr.mxu0 0.0
        %611 = vmatpush1.msra.mxu0 0.0
        %612 = vmatprep.subr.mxu0 0.0
        %613 = vmatpush1.msra.mxu0 0.0
        %614 = vmatprep.subr.mxu0 0.0
        %615 = vmatpush1.msra.mxu0 0.0
        %616 = vmatprep.subr.mxu0 0.0
        %617 = vmatpush1.msra.mxu0 0.0
        %618 = vmatprep.subr.mxu0 0.0
        %619 = vmatpush1.msra.mxu0 0.0
        %620 = vmatprep.subr.mxu0 0.0
        %621 = vmatpush1.msra.mxu0 0.0
        %622 = vmatprep.subr.mxu0 0.0
        %623 = vmatpush1.msra.mxu0 0.0
        %624 = vmatprep.subr.mxu0 0.0
        %625 = vmatpush1.msra.mxu0 0.0
        %626 = vmatprep.subr.mxu0 0.0
        %627 = vmatpush1.msra.mxu0 0.0
        %628 = vmatprep.subr.mxu0 0.0
        %629 = vmatpush1.msra.mxu0 0.0
        %630 = vmatprep.subr.mxu0 0.0
        %631 = vmatpush1.msra.mxu0 0.0
        %632 = vmatprep.subr.mxu0 0.0
        %633 = vmatpush1.msra.mxu0 0.0
        %634 = vmatprep.subr.mxu0 0.0
        %635 = vmatpush1.msra.mxu0 0.0
        %636 = vmatprep.subr.mxu0 0.0
        %637 = vmatpush1.msra.mxu0 0.0
        %638 = vmatprep.subr.mxu0 0.0
        %639 = vmatpush1.msra.mxu0 0.0
        %640 = vmatprep.subr.mxu0 0.0
        %641 = vmatpush1.msra.mxu0 0.0
        %642 = vmatprep.subr.mxu0 0.0
        %643 = vmatpush1.msra.mxu0 0.0
        %644 = vmatprep.subr.mxu0 0.0
        %645 = vmatpush1.msra.mxu0 0.0
        %646 = vmatprep.subr.mxu0 0.0
        %647 = vmatpush1.msra.mxu0 0.0
        %648 = vmatprep.mubr.f32.mxu0 0.0
        %v649 = vand.u32 %v402, 4294901760
        %v650 = vsub.f32 %v402, %v649
        %651 = vmatmul.mubr.f32.gmra.mrb[0].mxu0 %v650
        %v652 = vpop.f32.mrb[0].mxu0
        %v653 = vadd.f32 %v572, %v652
        %v654 = vpop.f32.mrb[0].mxu0
        %v655 = vadd.f32 %v574, %v654
        %656 = vdwg.mxu0
        %v657 = vand.u32 %v277, 4294901760
        %658 = vmatprep.subr.mxu0 %v657
        %v659 = vand.u32 %v276, 4294901760
        %660 = vmatpush1.msra.mxu0 %v659
        %v661 = vand.u32 %v281, 4294901760
        %662 = vmatprep.subr.mxu0 %v661
        %v663 = vand.u32 %v280, 4294901760
        %664 = vmatpush1.msra.mxu0 %v663
        %665 = vmatprep.subr.mxu0 0.0
        %666 = vmatpush1.msra.mxu0 0.0
        %667 = vmatprep.subr.mxu0 0.0
        %668 = vmatpush1.msra.mxu0 0.0
        %669 = vmatprep.subr.mxu0 0.0
        %670 = vmatpush1.msra.mxu0 0.0
        %671 = vmatprep.subr.mxu0 0.0
        %672 = vmatpush1.msra.mxu0 0.0
        %673 = vmatprep.subr.mxu0 0.0
        %674 = vmatpush1.msra.mxu0 0.0
        %675 = vmatprep.subr.mxu0 0.0
        %676 = vmatpush1.msra.mxu0 0.0
        %677 = vmatprep.subr.mxu0 0.0
        %678 = vmatpush1.msra.mxu0 0.0
        %679 = vmatprep.subr.mxu0 0.0
        %680 = vmatpush1.msra.mxu0 0.0
        %681 = vmatprep.subr.mxu0 0.0
        %682 = vmatpush1.msra.mxu0 0.0
        %683 = vmatprep.subr.mxu0 0.0
        %684 = vmatpush1.msra.mxu0 0.0
        %685 = vmatprep.subr.mxu0 0.0
        %686 = vmatpush1.msra.mxu0 0.0
        %687 = vmatprep.subr.mxu0 0.0
        %688 = vmatpush1.msra.mxu0 0.0
        %689 = vmatprep.subr.mxu0 0.0
        %690 = vmatpush1.msra.mxu0 0.0
        %691 = vmatprep.subr.mxu0 0.0
        %692 = vmatpush1.msra.mxu0 0.0
        %693 = vmatprep.subr.mxu0 0.0
        %694 = vmatpush1.msra.mxu0 0.0
        %695 = vmatprep.subr.mxu0 0.0
        %696 = vmatpush1.msra.mxu0 0.0
        %697 = vmatprep.subr.mxu0 0.0
        %698 = vmatpush1.msra.mxu0 0.0
        %699 = vmatprep.subr.mxu0 0.0
        %700 = vmatpush1.msra.mxu0 0.0
        %701 = vmatprep.subr.mxu0 0.0
        %702 = vmatpush1.msra.mxu0 0.0
        %703 = vmatprep.subr.mxu0 0.0
        %704 = vmatpush1.msra.mxu0 0.0
        %705 = vmatprep.subr.mxu0 0.0
        %706 = vmatpush1.msra.mxu0 0.0
        %707 = vmatprep.subr.mxu0 0.0
        %708 = vmatpush1.msra.mxu0 0.0
        %709 = vmatprep.subr.mxu0 0.0
        %710 = vmatpush1.msra.mxu0 0.0
        %711 = vmatprep.subr.mxu0 0.0
        %712 = vmatpush1.msra.mxu0 0.0
        %713 = vmatprep.subr.mxu0 0.0
        %714 = vmatpush1.msra.mxu0 0.0
        %715 = vmatprep.subr.mxu0 0.0
        %716 = vmatpush1.msra.mxu0 0.0
        %717 = vmatprep.subr.mxu0 0.0
        %718 = vmatpush1.msra.mxu0 0.0
        %719 = vmatprep.subr.mxu0 0.0
        %720 = vmatpush1.msra.mxu0 0.0
        %721 = vmatprep.subr.mxu0 0.0
        %722 = vmatpush1.msra.mxu0 0.0
        %723 = vmatprep.subr.mxu0 0.0
        %724 = vmatpush1.msra.mxu0 0.0
        %725 = vmatprep.mubr.f32.mxu0 0.0
        %v726 = vand.u32 %v402, 4294901760
        %v727 = vsub.f32 %v402, %v726
        %v728 = vand.u32 %v727, 4294901760
        %729 = vmatmul.mubr.f32.gmra.mrb[0].mxu0 %v728
        %v730 = vpop.f32.mrb[0].mxu0
        %v731 = vadd.f32 %v653, %v730
        %v732 = vpop.f32.mrb[0].mxu0
        %v733 = vadd.f32 %v655, %v732
        %734 = vdwg.mxu0
        %v735 = vand.u32 %v277, 4294901760
        %v736 = vsub.f32 %v277, %v735
        %v737 = vand.u32 %v736, 4294901760
        %738 = vmatprep.subr.mxu0 %v737
        %v739 = vand.u32 %v276, 4294901760
        %v740 = vsub.f32 %v276, %v739
        %v741 = vand.u32 %v740, 4294901760
        %742 = vmatpush1.msra.mxu0 %v741
        %v743 = vand.u32 %v281, 4294901760
        %v744 = vsub.f32 %v281, %v743
        %v745 = vand.u32 %v744, 4294901760
        %746 = vmatprep.subr.mxu0 %v745
        %v747 = vand.u32 %v280, 4294901760
        %v748 = vsub.f32 %v280, %v747
        %v749 = vand.u32 %v748, 4294901760
        %750 = vmatpush1.msra.mxu0 %v749
        %751 = vmatprep.subr.mxu0 0.0
        %752 = vmatpush1.msra.mxu0 0.0
        %753 = vmatprep.subr.mxu0 0.0
        %754 = vmatpush1.msra.mxu0 0.0
        %755 = vmatprep.subr.mxu0 0.0
        %756 = vmatpush1.msra.mxu0 0.0
        %757 = vmatprep.subr.mxu0 0.0
        %758 = vmatpush1.msra.mxu0 0.0
        %759 = vmatprep.subr.mxu0 0.0
        %760 = vmatpush1.msra.mxu0 0.0
        %761 = vmatprep.subr.mxu0 0.0
        %762 = vmatpush1.msra.mxu0 0.0
        %763 = vmatprep.subr.mxu0 0.0
        %764 = vmatpush1.msra.mxu0 0.0
        %765 = vmatprep.subr.mxu0 0.0
        %766 = vmatpush1.msra.mxu0 0.0
        %767 = vmatprep.subr.mxu0 0.0
        %768 = vmatpush1.msra.mxu0 0.0
        %769 = vmatprep.subr.mxu0 0.0
        %770 = vmatpush1.msra.mxu0 0.0
        %771 = vmatprep.subr.mxu0 0.0
        %772 = vmatpush1.msra.mxu0 0.0
        %773 = vmatprep.subr.mxu0 0.0
        %774 = vmatpush1.msra.mxu0 0.0
        %775 = vmatprep.subr.mxu0 0.0
        %776 = vmatpush1.msra.mxu0 0.0
        %777 = vmatprep.subr.mxu0 0.0
        %778 = vmatpush1.msra.mxu0 0.0
        %779 = vmatprep.subr.mxu0 0.0
        %780 = vmatpush1.msra.mxu0 0.0
        %781 = vmatprep.subr.mxu0 0.0
        %782 = vmatpush1.msra.mxu0 0.0
        %783 = vmatprep.subr.mxu0 0.0
        %784 = vmatpush1.msra.mxu0 0.0
        %785 = vmatprep.subr.mxu0 0.0
        %786 = vmatpush1.msra.mxu0 0.0
        %787 = vmatprep.subr.mxu0 0.0
        %788 = vmatpush1.msra.mxu0 0.0
        %789 = vmatprep.subr.mxu0 0.0
        %790 = vmatpush1.msra.mxu0 0.0
        %791 = vmatprep.subr.mxu0 0.0
        %792 = vmatpush1.msra.mxu0 0.0
        %793 = vmatprep.subr.mxu0 0.0
        %794 = vmatpush1.msra.mxu0 0.0
        %795 = vmatprep.subr.mxu0 0.0
        %796 = vmatpush1.msra.mxu0 0.0
        %797 = vmatprep.subr.mxu0 0.0
        %798 = vmatpush1.msra.mxu0 0.0
        %799 = vmatprep.subr.mxu0 0.0
        %800 = vmatpush1.msra.mxu0 0.0
        %801 = vmatprep.subr.mxu0 0.0
        %802 = vmatpush1.msra.mxu0 0.0
        %803 = vmatprep.subr.mxu0 0.0
        %804 = vmatpush1.msra.mxu0 0.0
        %805 = vmatprep.subr.mxu0 0.0
        %806 = vmatpush1.msra.mxu0 0.0
        %807 = vmatprep.subr.mxu0 0.0
        %808 = vmatpush1.msra.mxu0 0.0
        %809 = vmatprep.subr.mxu0 0.0
        %810 = vmatpush1.msra.mxu0 0.0
        %811 = vmatprep.mubr.f32.mxu0 0.0
        %v812 = vand.u32 %v402, 4294901760
        %813 = vmatmul.mubr.f32.gmra.mrb[0].mxu0 %v812
        %v814 = vpop.f32.mrb[0].mxu0
        %v815 = vadd.f32 %v731, %v814
        %v816 = vpop.f32.mrb[0].mxu0
        %v817 = vadd.f32 %v733, %v816
        %818 = vdwg.mxu0
        %v819 = vand.u32 %v277, 4294901760
        %820 = vmatprep.subr.mxu0 %v819
        %v821 = vand.u32 %v276, 4294901760
        %822 = vmatpush1.msra.mxu0 %v821
        %v823 = vand.u32 %v281, 4294901760
        %824 = vmatprep.subr.mxu0 %v823
        %v825 = vand.u32 %v280, 4294901760
        %826 = vmatpush1.msra.mxu0 %v825
        %827 = vmatprep.subr.mxu0 0.0
        %828 = vmatpush1.msra.mxu0 0.0
        %829 = vmatprep.subr.mxu0 0.0
        %830 = vmatpush1.msra.mxu0 0.0
        %831 = vmatprep.subr.mxu0 0.0
        %832 = vmatpush1.msra.mxu0 0.0
        %833 = vmatprep.subr.mxu0 0.0
        %834 = vmatpush1.msra.mxu0 0.0
        %835 = vmatprep.subr.mxu0 0.0
        %836 = vmatpush1.msra.mxu0 0.0
        %837 = vmatprep.subr.mxu0 0.0
        %838 = vmatpush1.msra.mxu0 0.0
        %839 = vmatprep.subr.mxu0 0.0
        %840 = vmatpush1.msra.mxu0 0.0
        %841 = vmatprep.subr.mxu0 0.0
        %842 = vmatpush1.msra.mxu0 0.0
        %843 = vmatprep.subr.mxu0 0.0
        %844 = vmatpush1.msra.mxu0 0.0
        %845 = vmatprep.subr.mxu0 0.0
        %846 = vmatpush1.msra.mxu0 0.0
        %847 = vmatprep.subr.mxu0 0.0
        %848 = vmatpush1.msra.mxu0 0.0
        %849 = vmatprep.subr.mxu0 0.0
        %850 = vmatpush1.msra.mxu0 0.0
        %851 = vmatprep.subr.mxu0 0.0
        %852 = vmatpush1.msra.mxu0 0.0
        %853 = vmatprep.subr.mxu0 0.0
        %854 = vmatpush1.msra.mxu0 0.0
        %855 = vmatprep.subr.mxu0 0.0
        %856 = vmatpush1.msra.mxu0 0.0
        %857 = vmatprep.subr.mxu0 0.0
        %858 = vmatpush1.msra.mxu0 0.0
        %859 = vmatprep.subr.mxu0 0.0
        %860 = vmatpush1.msra.mxu0 0.0
        %861 = vmatprep.subr.mxu0 0.0
        %862 = vmatpush1.msra.mxu0 0.0
        %863 = vmatprep.subr.mxu0 0.0
        %864 = vmatpush1.msra.mxu0 0.0
        %865 = vmatprep.subr.mxu0 0.0
        %866 = vmatpush1.msra.mxu0 0.0
        %867 = vmatprep.subr.mxu0 0.0
        %868 = vmatpush1.msra.mxu0 0.0
        %869 = vmatprep.subr.mxu0 0.0
        %870 = vmatpush1.msra.mxu0 0.0
        %871 = vmatprep.subr.mxu0 0.0
        %872 = vmatpush1.msra.mxu0 0.0
        %873 = vmatprep.subr.mxu0 0.0
        %874 = vmatpush1.msra.mxu0 0.0
        %875 = vmatprep.subr.mxu0 0.0
        %876 = vmatpush1.msra.mxu0 0.0
        %877 = vmatprep.subr.mxu0 0.0
        %878 = vmatpush1.msra.mxu0 0.0
        %879 = vmatprep.subr.mxu0 0.0
        %880 = vmatpush1.msra.mxu0 0.0
        %881 = vmatprep.subr.mxu0 0.0
        %882 = vmatpush1.msra.mxu0 0.0
        %883 = vmatprep.subr.mxu0 0.0
        %884 = vmatpush1.msra.mxu0 0.0
        %885 = vmatprep.subr.mxu0 0.0
        %886 = vmatpush1.msra.mxu0 0.0
        %887 = vmatprep.mubr.f32.mxu0 0.0
        %v888 = vand.u32 %v402, 4294901760
        %889 = vmatmul.mubr.f32.gmra.mrb[0].mxu0 %v888
        %v890 = vpop.f32.mrb[0].mxu0
        %v891 = vadd.f32 %v815, %v890
        %v892 = vpop.f32.mrb[0].mxu0
        %v893 = vadd.f32 %v817, %v892
        %894 = vdwg.mxu0
        %v895 = vand.u32 %v279, 4294901760
        %896 = vmatprep.subr.mxu0 %v895
        %v897 = vand.u32 %v278, 4294901760
        %898 = vmatpush1.msra.mxu0 %v897
        %v899 = vand.u32 %v283, 4294901760
        %900 = vmatprep.subr.mxu0 %v899
        %v901 = vand.u32 %v282, 4294901760
        %902 = vmatpush1.msra.mxu0 %v901
        %903 = vmatprep.subr.mxu0 0.0
        %904 = vmatpush1.msra.mxu0 0.0
        %905 = vmatprep.subr.mxu0 0.0
        %906 = vmatpush1.msra.mxu0 0.0
        %907 = vmatprep.subr.mxu0 0.0
        %908 = vmatpush1.msra.mxu0 0.0
        %909 = vmatprep.subr.mxu0 0.0
        %910 = vmatpush1.msra.mxu0 0.0
        %911 = vmatprep.subr.mxu0 0.0
        %912 = vmatpush1.msra.mxu0 0.0
        %913 = vmatprep.subr.mxu0 0.0
        %914 = vmatpush1.msra.mxu0 0.0
        %915 = vmatprep.subr.mxu0 0.0
        %916 = vmatpush1.msra.mxu0 0.0
        %917 = vmatprep.subr.mxu0 0.0
        %918 = vmatpush1.msra.mxu0 0.0
        %919 = vmatprep.subr.mxu0 0.0
        %920 = vmatpush1.msra.mxu0 0.0
        %921 = vmatprep.subr.mxu0 0.0
        %922 = vmatpush1.msra.mxu0 0.0
        %923 = vmatprep.subr.mxu0 0.0
        %924 = vmatpush1.msra.mxu0 0.0
        %925 = vmatprep.subr.mxu0 0.0
        %926 = vmatpush1.msra.mxu0 0.0
        %927 = vmatprep.subr.mxu0 0.0
        %928 = vmatpush1.msra.mxu0 0.0
        %929 = vmatprep.subr.mxu0 0.0
        %930 = vmatpush1.msra.mxu0 0.0
        %931 = vmatprep.subr.mxu0 0.0
        %932 = vmatpush1.msra.mxu0 0.0
        %933 = vmatprep.subr.mxu0 0.0
        %934 = vmatpush1.msra.mxu0 0.0
        %935 = vmatprep.subr.mxu0 0.0
        %936 = vmatpush1.msra.mxu0 0.0
        %937 = vmatprep.subr.mxu0 0.0
        %938 = vmatpush1.msra.mxu0 0.0
        %939 = vmatprep.subr.mxu0 0.0
        %940 = vmatpush1.msra.mxu0 0.0
        %941 = vmatprep.subr.mxu0 0.0
        %942 = vmatpush1.msra.mxu0 0.0
        %943 = vmatprep.subr.mxu0 0.0
        %944 = vmatpush1.msra.mxu0 0.0
        %945 = vmatprep.subr.mxu0 0.0
        %946 = vmatpush1.msra.mxu0 0.0
        %947 = vmatprep.subr.mxu0 0.0
        %948 = vmatpush1.msra.mxu0 0.0
        %949 = vmatprep.subr.mxu0 0.0
        %950 = vmatpush1.msra.mxu0 0.0
        %951 = vmatprep.subr.mxu0 0.0
        %952 = vmatpush1.msra.mxu0 0.0
        %953 = vmatprep.subr.mxu0 0.0
        %954 = vmatpush1.msra.mxu0 0.0
        %955 = vmatprep.subr.mxu0 0.0
        %956 = vmatpush1.msra.mxu0 0.0
        %957 = vmatprep.subr.mxu0 0.0
        %958 = vmatpush1.msra.mxu0 0.0
        %959 = vmatprep.subr.mxu0 0.0
        %960 = vmatpush1.msra.mxu0 0.0
        %961 = vmatprep.subr.mxu0 0.0
        %962 = vmatpush1.msra.mxu0 0.0
        %963 = vmatprep.mubr.f32.mxu0 0.0
        %v964 = vand.u32 %v402, 4294901760
        %v965 = vsub.f32 %v402, %v964
        %v966 = vand.u32 %v965, 4294901760
        %v967 = vsub.f32 %v965, %v966
        %v968 = vand.u32 %v967, 4294901760
        %969 = vmatmul.mubr.f32.gmra.mrb[0].mxu0 %v968
        %v970 = vpop.f32.mrb[0].mxu0
        %v971 = vadd.f32 0.0, %v970
        %v972 = vpop.f32.mrb[0].mxu0
        %v973 = vadd.f32 0.0, %v972
        %974 = vdwg.mxu0
        %v975 = vand.u32 %v279, 4294901760
        %v976 = vsub.f32 %v279, %v975
        %v977 = vand.u32 %v976, 4294901760
        %v978 = vsub.f32 %v976, %v977
        %v979 = vand.u32 %v978, 4294901760
        %980 = vmatprep.subr.mxu0 %v979
        %v981 = vand.u32 %v278, 4294901760
        %v982 = vsub.f32 %v278, %v981
        %v983 = vand.u32 %v982, 4294901760
        %v984 = vsub.f32 %v982, %v983
        %v985 = vand.u32 %v984, 4294901760
        %986 = vmatpush1.msra.mxu0 %v985
        %v987 = vand.u32 %v283, 4294901760
        %v988 = vsub.f32 %v283, %v987
        %v989 = vand.u32 %v988, 4294901760
        %v990 = vsub.f32 %v988, %v989
        %v991 = vand.u32 %v990, 4294901760
        %992 = vmatprep.subr.mxu0 %v991
        %v993 = vand.u32 %v282, 4294901760
        %v994 = vsub.f32 %v282, %v993
        %v995 = vand.u32 %v994, 4294901760
        %v996 = vsub.f32 %v994, %v995
        %v997 = vand.u32 %v996, 4294901760
        %998 = vmatpush1.msra.mxu0 %v997
        %999 = vmatprep.subr.mxu0 0.0
        %1000 = vmatpush1.msra.mxu0 0.0
        %1001 = vmatprep.subr.mxu0 0.0
        %1002 = vmatpush1.msra.mxu0 0.0
        %1003 = vmatprep.subr.mxu0 0.0
        %1004 = vmatpush1.msra.mxu0 0.0
        %1005 = vmatprep.subr.mxu0 0.0
        %1006 = vmatpush1.msra.mxu0 0.0
        %1007 = vmatprep.subr.mxu0 0.0
        %1008 = vmatpush1.msra.mxu0 0.0
        %1009 = vmatprep.subr.mxu0 0.0
        %1010 = vmatpush1.msra.mxu0 0.0
        %1011 = vmatprep.subr.mxu0 0.0
        %1012 = vmatpush1.msra.mxu0 0.0
        %1013 = vmatprep.subr.mxu0 0.0
        %1014 = vmatpush1.msra.mxu0 0.0
        %1015 = vmatprep.subr.mxu0 0.0
        %1016 = vmatpush1.msra.mxu0 0.0
        %1017 = vmatprep.subr.mxu0 0.0
        %1018 = vmatpush1.msra.mxu0 0.0
        %1019 = vmatprep.subr.mxu0 0.0
        %1020 = vmatpush1.msra.mxu0 0.0
        %1021 = vmatprep.subr.mxu0 0.0
        %1022 = vmatpush1.msra.mxu0 0.0
        %1023 = vmatprep.subr.mxu0 0.0
        %1024 = vmatpush1.msra.mxu0 0.0
        %1025 = vmatprep.subr.mxu0 0.0
        %1026 = vmatpush1.msra.mxu0 0.0
        %1027 = vmatprep.subr.mxu0 0.0
        %1028 = vmatpush1.msra.mxu0 0.0
        %1029 = vmatprep.subr.mxu0 0.0
        %1030 = vmatpush1.msra.mxu0 0.0
        %1031 = vmatprep.subr.mxu0 0.0
        %1032 = vmatpush1.msra.mxu0 0.0
        %1033 = vmatprep.subr.mxu0 0.0
        %1034 = vmatpush1.msra.mxu0 0.0
        %1035 = vmatprep.subr.mxu0 0.0
        %1036 = vmatpush1.msra.mxu0 0.0
        %1037 = vmatprep.subr.mxu0 0.0
        %1038 = vmatpush1.msra.mxu0 0.0
        %1039 = vmatprep.subr.mxu0 0.0
        %1040 = vmatpush1.msra.mxu0 0.0
        %1041 = vmatprep.subr.mxu0 0.0
        %1042 = vmatpush1.msra.mxu0 0.0
        %1043 = vmatprep.subr.mxu0 0.0
        %1044 = vmatpush1.msra.mxu0 0.0
        %1045 = vmatprep.subr.mxu0 0.0
        %1046 = vmatpush1.msra.mxu0 0.0
        %1047 = vmatprep.subr.mxu0 0.0
        %1048 = vmatpush1.msra.mxu0 0.0
        %1049 = vmatprep.subr.mxu0 0.0
        %1050 = vmatpush1.msra.mxu0 0.0
        %1051 = vmatprep.subr.mxu0 0.0
        %1052 = vmatpush1.msra.mxu0 0.0
        %1053 = vmatprep.subr.mxu0 0.0
        %1054 = vmatpush1.msra.mxu0 0.0
        %1055 = vmatprep.subr.mxu0 0.0
        %1056 = vmatpush1.msra.mxu0 0.0
        %1057 = vmatprep.subr.mxu0 0.0
        %1058 = vmatpush1.msra.mxu0 0.0
        %1059 = vmatprep.mubr.f32.mxu0 0.0
        %v1060 = vand.u32 %v402, 4294901760
        %1061 = vmatmul.mubr.f32.gmra.mrb[0].mxu0 %v1060
        %v1062 = vpop.f32.mrb[0].mxu0
        %v1063 = vadd.f32 %v971, %v1062
        %v1064 = vpop.f32.mrb[0].mxu0
        %v1065 = vadd.f32 %v973, %v1064
        %1066 = vdwg.mxu0
        %v1067 = vand.u32 %v279, 4294901760
        %v1068 = vsub.f32 %v279, %v1067
        %1069 = vmatprep.subr.mxu0 %v1068
        %v1070 = vand.u32 %v278, 4294901760
        %v1071 = vsub.f32 %v278, %v1070
        %1072 = vmatpush1.msra.mxu0 %v1071
        %v1073 = vand.u32 %v283, 4294901760
        %v1074 = vsub.f32 %v283, %v1073
        %1075 = vmatprep.subr.mxu0 %v1074
        %v1076 = vand.u32 %v282, 4294901760
        %v1077 = vsub.f32 %v282, %v1076
        %1078 = vmatpush1.msra.mxu0 %v1077
        %1079 = vmatprep.subr.mxu0 0.0
        %1080 = vmatpush1.msra.mxu0 0.0
        %1081 = vmatprep.subr.mxu0 0.0
        %1082 = vmatpush1.msra.mxu0 0.0
        %1083 = vmatprep.subr.mxu0 0.0
        %1084 = vmatpush1.msra.mxu0 0.0
        %1085 = vmatprep.subr.mxu0 0.0
        %1086 = vmatpush1.msra.mxu0 0.0
        %1087 = vmatprep.subr.mxu0 0.0
        %1088 = vmatpush1.msra.mxu0 0.0
        %1089 = vmatprep.subr.mxu0 0.0
        %1090 = vmatpush1.msra.mxu0 0.0
        %1091 = vmatprep.subr.mxu0 0.0
        %1092 = vmatpush1.msra.mxu0 0.0
        %1093 = vmatprep.subr.mxu0 0.0
        %1094 = vmatpush1.msra.mxu0 0.0
        %1095 = vmatprep.subr.mxu0 0.0
        %1096 = vmatpush1.msra.mxu0 0.0
        %1097 = vmatprep.subr.mxu0 0.0
        %1098 = vmatpush1.msra.mxu0 0.0
        %1099 = vmatprep.subr.mxu0 0.0
        %1100 = vmatpush1.msra.mxu0 0.0
        %1101 = vmatprep.subr.mxu0 0.0
        %1102 = vmatpush1.msra.mxu0 0.0
        %1103 = vmatprep.subr.mxu0 0.0
        %1104 = vmatpush1.msra.mxu0 0.0
        %1105 = vmatprep.subr.mxu0 0.0
        %1106 = vmatpush1.msra.mxu0 0.0
        %1107 = vmatprep.subr.mxu0 0.0
        %1108 = vmatpush1.msra.mxu0 0.0
        %1109 = vmatprep.subr.mxu0 0.0
        %1110 = vmatpush1.msra.mxu0 0.0
        %1111 = vmatprep.subr.mxu0 0.0
        %1112 = vmatpush1.msra.mxu0 0.0
        %1113 = vmatprep.subr.mxu0 0.0
        %1114 = vmatpush1.msra.mxu0 0.0
        %1115 = vmatprep.subr.mxu0 0.0
        %1116 = vmatpush1.msra.mxu0 0.0
        %1117 = vmatprep.subr.mxu0 0.0
        %1118 = vmatpush1.msra.mxu0 0.0
        %1119 = vmatprep.subr.mxu0 0.0
        %1120 = vmatpush1.msra.mxu0 0.0
        %1121 = vmatprep.subr.mxu0 0.0
        %1122 = vmatpush1.msra.mxu0 0.0
        %1123 = vmatprep.subr.mxu0 0.0
        %1124 = vmatpush1.msra.mxu0 0.0
        %1125 = vmatprep.subr.mxu0 0.0
        %1126 = vmatpush1.msra.mxu0 0.0
        %1127 = vmatprep.subr.mxu0 0.0
        %1128 = vmatpush1.msra.mxu0 0.0
        %1129 = vmatprep.subr.mxu0 0.0
        %1130 = vmatpush1.msra.mxu0 0.0
        %1131 = vmatprep.subr.mxu0 0.0
        %1132 = vmatpush1.msra.mxu0 0.0
        %1133 = vmatprep.subr.mxu0 0.0
        %1134 = vmatpush1.msra.mxu0 0.0
        %1135 = vmatprep.subr.mxu0 0.0
        %1136 = vmatpush1.msra.mxu0 0.0
        %1137 = vmatprep.subr.mxu0 0.0
        %1138 = vmatpush1.msra.mxu0 0.0
        %1139 = vmatprep.mubr.f32.mxu0 0.0
        %v1140 = vand.u32 %v402, 4294901760
        %v1141 = vsub.f32 %v402, %v1140
        %1142 = vmatmul.mubr.f32.gmra.mrb[0].mxu0 %v1141
        %v1143 = vpop.f32.mrb[0].mxu0
        %v1144 = vadd.f32 %v1063, %v1143
        %v1145 = vpop.f32.mrb[0].mxu0
        %v1146 = vadd.f32 %v1065, %v1145
        %1147 = vdwg.mxu0
        %v1148 = vand.u32 %v279, 4294901760
        %1149 = vmatprep.subr.mxu0 %v1148
        %v1150 = vand.u32 %v278, 4294901760
        %1151 = vmatpush1.msra.mxu0 %v1150
        %v1152 = vand.u32 %v283, 4294901760
        %1153 = vmatprep.subr.mxu0 %v1152
        %v1154 = vand.u32 %v282, 4294901760
        %1155 = vmatpush1.msra.mxu0 %v1154
        %1156 = vmatprep.subr.mxu0 0.0
        %1157 = vmatpush1.msra.mxu0 0.0
        %1158 = vmatprep.subr.mxu0 0.0
        %1159 = vmatpush1.msra.mxu0 0.0
        %1160 = vmatprep.subr.mxu0 0.0
        %1161 = vmatpush1.msra.mxu0 0.0
        %1162 = vmatprep.subr.mxu0 0.0
        %1163 = vmatpush1.msra.mxu0 0.0
        %1164 = vmatprep.subr.mxu0 0.0
        %1165 = vmatpush1.msra.mxu0 0.0
        %1166 = vmatprep.subr.mxu0 0.0
        %1167 = vmatpush1.msra.mxu0 0.0
        %1168 = vmatprep.subr.mxu0 0.0
        %1169 = vmatpush1.msra.mxu0 0.0
        %1170 = vmatprep.subr.mxu0 0.0
        %1171 = vmatpush1.msra.mxu0 0.0
        %1172 = vmatprep.subr.mxu0 0.0
        %1173 = vmatpush1.msra.mxu0 0.0
        %1174 = vmatprep.subr.mxu0 0.0
        %1175 = vmatpush1.msra.mxu0 0.0
        %1176 = vmatprep.subr.mxu0 0.0
        %1177 = vmatpush1.msra.mxu0 0.0
        %1178 = vmatprep.subr.mxu0 0.0
        %1179 = vmatpush1.msra.mxu0 0.0
        %1180 = vmatprep.subr.mxu0 0.0
        %1181 = vmatpush1.msra.mxu0 0.0
        %1182 = vmatprep.subr.mxu0 0.0
        %1183 = vmatpush1.msra.mxu0 0.0
        %1184 = vmatprep.subr.mxu0 0.0
        %1185 = vmatpush1.msra.mxu0 0.0
        %1186 = vmatprep.subr.mxu0 0.0
        %1187 = vmatpush1.msra.mxu0 0.0
        %1188 = vmatprep.subr.mxu0 0.0
        %1189 = vmatpush1.msra.mxu0 0.0
        %1190 = vmatprep.subr.mxu0 0.0
        %1191 = vmatpush1.msra.mxu0 0.0
        %1192 = vmatprep.subr.mxu0 0.0
        %1193 = vmatpush1.msra.mxu0 0.0
        %1194 = vmatprep.subr.mxu0 0.0
        %1195 = vmatpush1.msra.mxu0 0.0
        %1196 = vmatprep.subr.mxu0 0.0
        %1197 = vmatpush1.msra.mxu0 0.0
        %1198 = vmatprep.subr.mxu0 0.0
        %1199 = vmatpush1.msra.mxu0 0.0
        %1200 = vmatprep.subr.mxu0 0.0
        %1201 = vmatpush1.msra.mxu0 0.0
        %1202 = vmatprep.subr.mxu0 0.0
        %1203 = vmatpush1.msra.mxu0 0.0
        %1204 = vmatprep.subr.mxu0 0.0
        %1205 = vmatpush1.msra.mxu0 0.0
        %1206 = vmatprep.subr.mxu0 0.0
        %1207 = vmatpush1.msra.mxu0 0.0
        %1208 = vmatprep.subr.mxu0 0.0
        %1209 = vmatpush1.msra.mxu0 0.0
        %1210 = vmatprep.subr.mxu0 0.0
        %1211 = vmatpush1.msra.mxu0 0.0
        %1212 = vmatprep.subr.mxu0 0.0
        %1213 = vmatpush1.msra.mxu0 0.0
        %1214 = vmatprep.subr.mxu0 0.0
        %1215 = vmatpush1.msra.mxu0 0.0
        %1216 = vmatprep.mubr.f32.mxu0 0.0
        %v1217 = vand.u32 %v402, 4294901760
        %v1218 = vsub.f32 %v402, %v1217
        %v1219 = vand.u32 %v1218, 4294901760
        %1220 = vmatmul.mubr.f32.gmra.mrb[0].mxu0 %v1219
        %v1221 = vpop.f32.mrb[0].mxu0
        %v1222 = vadd.f32 %v1144, %v1221
        %v1223 = vpop.f32.mrb[0].mxu0
        %v1224 = vadd.f32 %v1146, %v1223
        %1225 = vdwg.mxu0
        %v1226 = vand.u32 %v279, 4294901760
        %v1227 = vsub.f32 %v279, %v1226
        %v1228 = vand.u32 %v1227, 4294901760
        %1229 = vmatprep.subr.mxu0 %v1228
        %v1230 = vand.u32 %v278, 4294901760
        %v1231 = vsub.f32 %v278, %v1230
        %v1232 = vand.u32 %v1231, 4294901760
        %1233 = vmatpush1.msra.mxu0 %v1232
        %v1234 = vand.u32 %v283, 4294901760
        %v1235 = vsub.f32 %v283, %v1234
        %v1236 = vand.u32 %v1235, 4294901760
        %1237 = vmatprep.subr.mxu0 %v1236
        %v1238 = vand.u32 %v282, 4294901760
        %v1239 = vsub.f32 %v282, %v1238
        %v1240 = vand.u32 %v1239, 4294901760
        %1241 = vmatpush1.msra.mxu0 %v1240
        %1242 = vmatprep.subr.mxu0 0.0
        %1243 = vmatpush1.msra.mxu0 0.0
        %1244 = vmatprep.subr.mxu0 0.0
        %1245 = vmatpush1.msra.mxu0 0.0
        %1246 = vmatprep.subr.mxu0 0.0
        %1247 = vmatpush1.msra.mxu0 0.0
        %1248 = vmatprep.subr.mxu0 0.0
        %1249 = vmatpush1.msra.mxu0 0.0
        %1250 = vmatprep.subr.mxu0 0.0
        %1251 = vmatpush1.msra.mxu0 0.0
        %1252 = vmatprep.subr.mxu0 0.0
        %1253 = vmatpush1.msra.mxu0 0.0
        %1254 = vmatprep.subr.mxu0 0.0
        %1255 = vmatpush1.msra.mxu0 0.0
        %1256 = vmatprep.subr.mxu0 0.0
        %1257 = vmatpush1.msra.mxu0 0.0
        %1258 = vmatprep.subr.mxu0 0.0
        %1259 = vmatpush1.msra.mxu0 0.0
        %1260 = vmatprep.subr.mxu0 0.0
        %1261 = vmatpush1.msra.mxu0 0.0
        %1262 = vmatprep.subr.mxu0 0.0
        %1263 = vmatpush1.msra.mxu0 0.0
        %1264 = vmatprep.subr.mxu0 0.0
        %1265 = vmatpush1.msra.mxu0 0.0
        %1266 = vmatprep.subr.mxu0 0.0
        %1267 = vmatpush1.msra.mxu0 0.0
        %1268 = vmatprep.subr.mxu0 0.0
        %1269 = vmatpush1.msra.mxu0 0.0
        %1270 = vmatprep.subr.mxu0 0.0
        %1271 = vmatpush1.msra.mxu0 0.0
        %1272 = vmatprep.subr.mxu0 0.0
        %1273 = vmatpush1.msra.mxu0 0.0
        %1274 = vmatprep.subr.mxu0 0.0
        %1275 = vmatpush1.msra.mxu0 0.0
        %1276 = vmatprep.subr.mxu0 0.0
        %1277 = vmatpush1.msra.mxu0 0.0
        %1278 = vmatprep.subr.mxu0 0.0
        %1279 = vmatpush1.msra.mxu0 0.0
        %1280 = vmatprep.subr.mxu0 0.0
        %1281 = vmatpush1.msra.mxu0 0.0
        %1282 = vmatprep.subr.mxu0 0.0
        %1283 = vmatpush1.msra.mxu0 0.0
        %1284 = vmatprep.subr.mxu0 0.0
        %1285 = vmatpush1.msra.mxu0 0.0
        %1286 = vmatprep.subr.mxu0 0.0
        %1287 = vmatpush1.msra.mxu0 0.0
        %1288 = vmatprep.subr.mxu0 0.0
        %1289 = vmatpush1.msra.mxu0 0.0
        %1290 = vmatprep.subr.mxu0 0.0
        %1291 = vmatpush1.msra.mxu0 0.0
        %1292 = vmatprep.subr.mxu0 0.0
        %1293 = vmatpush1.msra.mxu0 0.0
        %1294 = vmatprep.subr.mxu0 0.0
        %1295 = vmatpush1.msra.mxu0 0.0
        %1296 = vmatprep.subr.mxu0 0.0
        %1297 = vmatpush1.msra.mxu0 0.0
        %1298 = vmatprep.subr.mxu0 0.0
        %1299 = vmatpush1.msra.mxu0 0.0
        %1300 = vmatprep.subr.mxu0 0.0
        %1301 = vmatpush1.msra.mxu0 0.0
        %1302 = vmatprep.mubr.f32.mxu0 0.0
        %v1303 = vand.u32 %v402, 4294901760
        %1304 = vmatmul.mubr.f32.gmra.mrb[0].mxu0 %v1303
        %v1305 = vpop.f32.mrb[0].mxu0
        %v1306 = vadd.f32 %v1222, %v1305
        %v1307 = vpop.f32.mrb[0].mxu0
        %v1308 = vadd.f32 %v1224, %v1307
        %1309 = vdwg.mxu0
        %v1310 = vand.u32 %v279, 4294901760
        %1311 = vmatprep.subr.mxu0 %v1310
        %v1312 = vand.u32 %v278, 4294901760
        %1313 = vmatpush1.msra.mxu0 %v1312
        %v1314 = vand.u32 %v283, 4294901760
        %1315 = vmatprep.subr.mxu0 %v1314
        %v1316 = vand.u32 %v282, 4294901760
        %1317 = vmatpush1.msra.mxu0 %v1316
        %1318 = vmatprep.subr.mxu0 0.0
        %1319 = vmatpush1.msra.mxu0 0.0
        %1320 = vmatprep.subr.mxu0 0.0
        %1321 = vmatpush1.msra.mxu0 0.0
        %1322 = vmatprep.subr.mxu0 0.0
        %1323 = vmatpush1.msra.mxu0 0.0
        %1324 = vmatprep.subr.mxu0 0.0
        %1325 = vmatpush1.msra.mxu0 0.0
        %1326 = vmatprep.subr.mxu0 0.0
        %1327 = vmatpush1.msra.mxu0 0.0
        %1328 = vmatprep.subr.mxu0 0.0
        %1329 = vmatpush1.msra.mxu0 0.0
        %1330 = vmatprep.subr.mxu0 0.0
        %1331 = vmatpush1.msra.mxu0 0.0
        %1332 = vmatprep.subr.mxu0 0.0
        %1333 = vmatpush1.msra.mxu0 0.0
        %1334 = vmatprep.subr.mxu0 0.0
        %1335 = vmatpush1.msra.mxu0 0.0
        %1336 = vmatprep.subr.mxu0 0.0
        %1337 = vmatpush1.msra.mxu0 0.0
        %1338 = vmatprep.subr.mxu0 0.0
        %1339 = vmatpush1.msra.mxu0 0.0
        %1340 = vmatprep.subr.mxu0 0.0
        %1341 = vmatpush1.msra.mxu0 0.0
        %1342 = vmatprep.subr.mxu0 0.0
        %1343 = vmatpush1.msra.mxu0 0.0
        %1344 = vmatprep.subr.mxu0 0.0
        %1345 = vmatpush1.msra.mxu0 0.0
        %1346 = vmatprep.subr.mxu0 0.0
        %1347 = vmatpush1.msra.mxu0 0.0
        %1348 = vmatprep.subr.mxu0 0.0
        %1349 = vmatpush1.msra.mxu0 0.0
        %1350 = vmatprep.subr.mxu0 0.0
        %1351 = vmatpush1.msra.mxu0 0.0
        %1352 = vmatprep.subr.mxu0 0.0
        %1353 = vmatpush1.msra.mxu0 0.0
        %1354 = vmatprep.subr.mxu0 0.0
        %1355 = vmatpush1.msra.mxu0 0.0
        %1356 = vmatprep.subr.mxu0 0.0
        %1357 = vmatpush1.msra.mxu0 0.0
        %1358 = vmatprep.subr.mxu0 0.0
        %1359 = vmatpush1.msra.mxu0 0.0
        %1360 = vmatprep.subr.mxu0 0.0
        %1361 = vmatpush1.msra.mxu0 0.0
        %1362 = vmatprep.subr.mxu0 0.0
        %1363 = vmatpush1.msra.mxu0 0.0
        %1364 = vmatprep.subr.mxu0 0.0
        %1365 = vmatpush1.msra.mxu0 0.0
        %1366 = vmatprep.subr.mxu0 0.0
        %1367 = vmatpush1.msra.mxu0 0.0
        %1368 = vmatprep.subr.mxu0 0.0
        %1369 = vmatpush1.msra.mxu0 0.0
        %1370 = vmatprep.subr.mxu0 0.0
        %1371 = vmatpush1.msra.mxu0 0.0
        %1372 = vmatprep.subr.mxu0 0.0
        %1373 = vmatpush1.msra.mxu0 0.0
        %1374 = vmatprep.subr.mxu0 0.0
        %1375 = vmatpush1.msra.mxu0 0.0
        %1376 = vmatprep.subr.mxu0 0.0
        %1377 = vmatpush1.msra.mxu0 0.0
        %1378 = vmatprep.mubr.f32.mxu0 0.0
        %v1379 = vand.u32 %v402, 4294901760
        %1380 = vmatmul.mubr.f32.gmra.mrb[0].mxu0 %v1379
        %v1381 = vpop.f32.mrb[0].mxu0
        %v1382 = vadd.f32 %v1306, %v1381
        %v1383 = vpop.f32.mrb[0].mxu0
        %v1384 = vadd.f32 %v1308, %v1383
        %1385 = vdwg.mxu0
        %v1387 = vsel %vm400, %v397, 0
        %v1389 = vand.u32 %v343, 4294901760
        %1390 = vmatprep.subr.mxu0 %v1389
        %v1391 = vand.u32 %v342, 4294901760
        %1392 = vmatpush1.msra.mxu0 %v1391
        %v1393 = vand.u32 %v347, 4294901760
        %1394 = vmatprep.subr.mxu0 %v1393
        %v1395 = vand.u32 %v346, 4294901760
        %1396 = vmatpush1.msra.mxu0 %v1395
        %1397 = vmatprep.subr.mxu0 0.0
        %1398 = vmatpush1.msra.mxu0 0.0
        %1399 = vmatprep.subr.mxu0 0.0
        %1400 = vmatpush1.msra.mxu0 0.0
        %1401 = vmatprep.subr.mxu0 0.0
        %1402 = vmatpush1.msra.mxu0 0.0
        %1403 = vmatprep.subr.mxu0 0.0
        %1404 = vmatpush1.msra.mxu0 0.0
        %1405 = vmatprep.subr.mxu0 0.0
        %1406 = vmatpush1.msra.mxu0 0.0
        %1407 = vmatprep.subr.mxu0 0.0
        %1408 = vmatpush1.msra.mxu0 0.0
        %1409 = vmatprep.subr.mxu0 0.0
        %1410 = vmatpush1.msra.mxu0 0.0
        %1411 = vmatprep.subr.mxu0 0.0
        %1412 = vmatpush1.msra.mxu0 0.0
        %1413 = vmatprep.subr.mxu0 0.0
        %1414 = vmatpush1.msra.mxu0 0.0
        %1415 = vmatprep.subr.mxu0 0.0
        %1416 = vmatpush1.msra.mxu0 0.0
        %1417 = vmatprep.subr.mxu0 0.0
        %1418 = vmatpush1.msra.mxu0 0.0
        %1419 = vmatprep.subr.mxu0 0.0
        %1420 = vmatpush1.msra.mxu0 0.0
        %1421 = vmatprep.subr.mxu0 0.0
        %1422 = vmatpush1.msra.mxu0 0.0
        %1423 = vmatprep.subr.mxu0 0.0
        %1424 = vmatpush1.msra.mxu0 0.0
        %1425 = vmatprep.subr.mxu0 0.0
        %1426 = vmatpush1.msra.mxu0 0.0
        %1427 = vmatprep.subr.mxu0 0.0
        %1428 = vmatpush1.msra.mxu0 0.0
        %1429 = vmatprep.subr.mxu0 0.0
        %1430 = vmatpush1.msra.mxu0 0.0
        %1431 = vmatprep.subr.mxu0 0.0
        %1432 = vmatpush1.msra.mxu0 0.0
        %1433 = vmatprep.subr.mxu0 0.0
        %1434 = vmatpush1.msra.mxu0 0.0
        %1435 = vmatprep.subr.mxu0 0.0
        %1436 = vmatpush1.msra.mxu0 0.0
        %1437 = vmatprep.subr.mxu0 0.0
        %1438 = vmatpush1.msra.mxu0 0.0
        %1439 = vmatprep.subr.mxu0 0.0
        %1440 = vmatpush1.msra.mxu0 0.0
        %1441 = vmatprep.subr.mxu0 0.0
        %1442 = vmatpush1.msra.mxu0 0.0
        %1443 = vmatprep.subr.mxu0 0.0
        %1444 = vmatpush1.msra.mxu0 0.0
        %1445 = vmatprep.subr.mxu0 0.0
        %1446 = vmatpush1.msra.mxu0 0.0
        %1447 = vmatprep.subr.mxu0 0.0
        %1448 = vmatpush1.msra.mxu0 0.0
        %1449 = vmatprep.subr.mxu0 0.0
        %1450 = vmatpush1.msra.mxu0 0.0
        %1451 = vmatprep.subr.mxu0 0.0
        %1452 = vmatpush1.msra.mxu0 0.0
        %1453 = vmatprep.subr.mxu0 0.0
        %1454 = vmatpush1.msra.mxu0 0.0
        %1455 = vmatprep.subr.mxu0 0.0
        %1456 = vmatpush1.msra.mxu0 0.0
        %1457 = vmatprep.mubr.f32.mxu0 0.0
        %v1458 = vand.u32 %v1387, 4294901760
        %v1459 = vsub.f32 %v1387, %v1458
        %v1460 = vand.u32 %v1459, 4294901760
        %v1461 = vsub.f32 %v1459, %v1460
        %v1462 = vand.u32 %v1461, 4294901760
        %1463 = vmatmul.mubr.f32.gmra.mrb[0].mxu0 %v1462
        %v1464 = vpop.f32.mrb[0].mxu0
        %v1465 = vadd.f32 %v891, %v1464
        %v1466 = vpop.f32.mrb[0].mxu0
        %v1467 = vadd.f32 %v893, %v1466
        %1468 = vdwg.mxu0
        %v1469 = vand.u32 %v343, 4294901760
        %v1470 = vsub.f32 %v343, %v1469
        %v1471 = vand.u32 %v1470, 4294901760
        %v1472 = vsub.f32 %v1470, %v1471
        %v1473 = vand.u32 %v1472, 4294901760
        %1474 = vmatprep.subr.mxu0 %v1473
        %v1475 = vand.u32 %v342, 4294901760
        %v1476 = vsub.f32 %v342, %v1475
        %v1477 = vand.u32 %v1476, 4294901760
        %v1478 = vsub.f32 %v1476, %v1477
        %v1479 = vand.u32 %v1478, 4294901760
        %1480 = vmatpush1.msra.mxu0 %v1479
        %v1481 = vand.u32 %v347, 4294901760
        %v1482 = vsub.f32 %v347, %v1481
        %v1483 = vand.u32 %v1482, 4294901760
        %v1484 = vsub.f32 %v1482, %v1483
        %v1485 = vand.u32 %v1484, 4294901760
        %1486 = vmatprep.subr.mxu0 %v1485
        %v1487 = vand.u32 %v346, 4294901760
        %v1488 = vsub.f32 %v346, %v1487
        %v1489 = vand.u32 %v1488, 4294901760
        %v1490 = vsub.f32 %v1488, %v1489
        %v1491 = vand.u32 %v1490, 4294901760
        %1492 = vmatpush1.msra.mxu0 %v1491
        %1493 = vmatprep.subr.mxu0 0.0
        %1494 = vmatpush1.msra.mxu0 0.0
        %1495 = vmatprep.subr.mxu0 0.0
        %1496 = vmatpush1.msra.mxu0 0.0
        %1497 = vmatprep.subr.mxu0 0.0
        %1498 = vmatpush1.msra.mxu0 0.0
        %1499 = vmatprep.subr.mxu0 0.0
        %1500 = vmatpush1.msra.mxu0 0.0
        %1501 = vmatprep.subr.mxu0 0.0
        %1502 = vmatpush1.msra.mxu0 0.0
        %1503 = vmatprep.subr.mxu0 0.0
        %1504 = vmatpush1.msra.mxu0 0.0
        %1505 = vmatprep.subr.mxu0 0.0
        %1506 = vmatpush1.msra.mxu0 0.0
        %1507 = vmatprep.subr.mxu0 0.0
        %1508 = vmatpush1.msra.mxu0 0.0
        %1509 = vmatprep.subr.mxu0 0.0
        %1510 = vmatpush1.msra.mxu0 0.0
        %1511 = vmatprep.subr.mxu0 0.0
        %1512 = vmatpush1.msra.mxu0 0.0
        %1513 = vmatprep.subr.mxu0 0.0
        %1514 = vmatpush1.msra.mxu0 0.0
        %1515 = vmatprep.subr.mxu0 0.0
        %1516 = vmatpush1.msra.mxu0 0.0
        %1517 = vmatprep.subr.mxu0 0.0
        %1518 = vmatpush1.msra.mxu0 0.0
        %1519 = vmatprep.subr.mxu0 0.0
        %1520 = vmatpush1.msra.mxu0 0.0
        %1521 = vmatprep.subr.mxu0 0.0
        %1522 = vmatpush1.msra.mxu0 0.0
        %1523 = vmatprep.subr.mxu0 0.0
        %1524 = vmatpush1.msra.mxu0 0.0
        %1525 = vmatprep.subr.mxu0 0.0
        %1526 = vmatpush1.msra.mxu0 0.0
        %1527 = vmatprep.subr.mxu0 0.0
        %1528 = vmatpush1.msra.mxu0 0.0
        %1529 = vmatprep.subr.mxu0 0.0
        %1530 = vmatpush1.msra.mxu0 0.0
        %1531 = vmatprep.subr.mxu0 0.0
        %1532 = vmatpush1.msra.mxu0 0.0
        %1533 = vmatprep.subr.mxu0 0.0
        %1534 = vmatpush1.msra.mxu0 0.0
        %1535 = vmatprep.subr.mxu0 0.0
        %1536 = vmatpush1.msra.mxu0 0.0
        %1537 = vmatprep.subr.mxu0 0.0
        %1538 = vmatpush1.msra.mxu0 0.0
        %1539 = vmatprep.subr.mxu0 0.0
        %1540 = vmatpush1.msra.mxu0 0.0
        %1541 = vmatprep.subr.mxu0 0.0
        %1542 = vmatpush1.msra.mxu0 0.0
        %1543 = vmatprep.subr.mxu0 0.0
        %1544 = vmatpush1.msra.mxu0 0.0
        %1545 = vmatprep.subr.mxu0 0.0
        %1546 = vmatpush1.msra.mxu0 0.0
        %1547 = vmatprep.subr.mxu0 0.0
        %1548 = vmatpush1.msra.mxu0 0.0
        %1549 = vmatprep.subr.mxu0 0.0
        %1550 = vmatpush1.msra.mxu0 0.0
        %1551 = vmatprep.subr.mxu0 0.0
        %1552 = vmatpush1.msra.mxu0 0.0
        %1553 = vmatprep.mubr.f32.mxu0 0.0
        %v1554 = vand.u32 %v1387, 4294901760
        %1555 = vmatmul.mubr.f32.gmra.mrb[0].mxu0 %v1554
        %v1556 = vpop.f32.mrb[0].mxu0
        %v1557 = vadd.f32 %v1465, %v1556
        %v1558 = vpop.f32.mrb[0].mxu0
        %v1559 = vadd.f32 %v1467, %v1558
        %1560 = vdwg.mxu0
        %v1561 = vand.u32 %v343, 4294901760
        %v1562 = vsub.f32 %v343, %v1561
        %1563 = vmatprep.subr.mxu0 %v1562
        %v1564 = vand.u32 %v342, 4294901760
        %v1565 = vsub.f32 %v342, %v1564
        %1566 = vmatpush1.msra.mxu0 %v1565
        %v1567 = vand.u32 %v347, 4294901760
        %v1568 = vsub.f32 %v347, %v1567
        %1569 = vmatprep.subr.mxu0 %v1568
        %v1570 = vand.u32 %v346, 4294901760
        %v1571 = vsub.f32 %v346, %v1570
        %1572 = vmatpush1.msra.mxu0 %v1571
        %1573 = vmatprep.subr.mxu0 0.0
        %1574 = vmatpush1.msra.mxu0 0.0
        %1575 = vmatprep.subr.mxu0 0.0
        %1576 = vmatpush1.msra.mxu0 0.0
        %1577 = vmatprep.subr.mxu0 0.0
        %1578 = vmatpush1.msra.mxu0 0.0
        %1579 = vmatprep.subr.mxu0 0.0
        %1580 = vmatpush1.msra.mxu0 0.0
        %1581 = vmatprep.subr.mxu0 0.0
        %1582 = vmatpush1.msra.mxu0 0.0
        %1583 = vmatprep.subr.mxu0 0.0
        %1584 = vmatpush1.msra.mxu0 0.0
        %1585 = vmatprep.subr.mxu0 0.0
        %1586 = vmatpush1.msra.mxu0 0.0
        %1587 = vmatprep.subr.mxu0 0.0
        %1588 = vmatpush1.msra.mxu0 0.0
        %1589 = vmatprep.subr.mxu0 0.0
        %1590 = vmatpush1.msra.mxu0 0.0
        %1591 = vmatprep.subr.mxu0 0.0
        %1592 = vmatpush1.msra.mxu0 0.0
        %1593 = vmatprep.subr.mxu0 0.0
        %1594 = vmatpush1.msra.mxu0 0.0
        %1595 = vmatprep.subr.mxu0 0.0
        %1596 = vmatpush1.msra.mxu0 0.0
        %1597 = vmatprep.subr.mxu0 0.0
        %1598 = vmatpush1.msra.mxu0 0.0
        %1599 = vmatprep.subr.mxu0 0.0
        %1600 = vmatpush1.msra.mxu0 0.0
        %1601 = vmatprep.subr.mxu0 0.0
        %1602 = vmatpush1.msra.mxu0 0.0
        %1603 = vmatprep.subr.mxu0 0.0
        %1604 = vmatpush1.msra.mxu0 0.0
        %1605 = vmatprep.subr.mxu0 0.0
        %1606 = vmatpush1.msra.mxu0 0.0
        %1607 = vmatprep.subr.mxu0 0.0
        %1608 = vmatpush1.msra.mxu0 0.0
        %1609 = vmatprep.subr.mxu0 0.0
        %1610 = vmatpush1.msra.mxu0 0.0
        %1611 = vmatprep.subr.mxu0 0.0
        %1612 = vmatpush1.msra.mxu0 0.0
        %1613 = vmatprep.subr.mxu0 0.0
        %1614 = vmatpush1.msra.mxu0 0.0
        %1615 = vmatprep.subr.mxu0 0.0
        %1616 = vmatpush1.msra.mxu0 0.0
        %1617 = vmatprep.subr.mxu0 0.0
        %1618 = vmatpush1.msra.mxu0 0.0
        %1619 = vmatprep.subr.mxu0 0.0
        %1620 = vmatpush1.msra.mxu0 0.0
        %1621 = vmatprep.subr.mxu0 0.0
        %1622 = vmatpush1.msra.mxu0 0.0
        %1623 = vmatprep.subr.mxu0 0.0
        %1624 = vmatpush1.msra.mxu0 0.0
        %1625 = vmatprep.subr.mxu0 0.0
        %1626 = vmatpush1.msra.mxu0 0.0
        %1627 = vmatprep.subr.mxu0 0.0
        %1628 = vmatpush1.msra.mxu0 0.0
        %1629 = vmatprep.subr.mxu0 0.0
        %1630 = vmatpush1.msra.mxu0 0.0
        %1631 = vmatprep.subr.mxu0 0.0
        %1632 = vmatpush1.msra.mxu0 0.0
        %1633 = vmatprep.mubr.f32.mxu0 0.0
        %v1634 = vand.u32 %v1387, 4294901760
        %v1635 = vsub.f32 %v1387, %v1634
        %1636 = vmatmul.mubr.f32.gmra.mrb[0].mxu0 %v1635
        %v1637 = vpop.f32.mrb[0].mxu0
        %v1638 = vadd.f32 %v1557, %v1637
        %v1639 = vpop.f32.mrb[0].mxu0
        %v1640 = vadd.f32 %v1559, %v1639
        %1641 = vdwg.mxu0
        %v1642 = vand.u32 %v343, 4294901760
        %1643 = vmatprep.subr.mxu0 %v1642
        %v1644 = vand.u32 %v342, 4294901760
        %1645 = vmatpush1.msra.mxu0 %v1644
        %v1646 = vand.u32 %v347, 4294901760
        %1647 = vmatprep.subr.mxu0 %v1646
        %v1648 = vand.u32 %v346, 4294901760
        %1649 = vmatpush1.msra.mxu0 %v1648
        %1650 = vmatprep.subr.mxu0 0.0
        %1651 = vmatpush1.msra.mxu0 0.0
        %1652 = vmatprep.subr.mxu0 0.0
        %1653 = vmatpush1.msra.mxu0 0.0
        %1654 = vmatprep.subr.mxu0 0.0
        %1655 = vmatpush1.msra.mxu0 0.0
        %1656 = vmatprep.subr.mxu0 0.0
        %1657 = vmatpush1.msra.mxu0 0.0
        %1658 = vmatprep.subr.mxu0 0.0
        %1659 = vmatpush1.msra.mxu0 0.0
        %1660 = vmatprep.subr.mxu0 0.0
        %1661 = vmatpush1.msra.mxu0 0.0
        %1662 = vmatprep.subr.mxu0 0.0
        %1663 = vmatpush1.msra.mxu0 0.0
        %1664 = vmatprep.subr.mxu0 0.0
        %1665 = vmatpush1.msra.mxu0 0.0
        %1666 = vmatprep.subr.mxu0 0.0
        %1667 = vmatpush1.msra.mxu0 0.0
        %1668 = vmatprep.subr.mxu0 0.0
        %1669 = vmatpush1.msra.mxu0 0.0
        %1670 = vmatprep.subr.mxu0 0.0
        %1671 = vmatpush1.msra.mxu0 0.0
        %1672 = vmatprep.subr.mxu0 0.0
        %1673 = vmatpush1.msra.mxu0 0.0
        %1674 = vmatprep.subr.mxu0 0.0
        %1675 = vmatpush1.msra.mxu0 0.0
        %1676 = vmatprep.subr.mxu0 0.0
        %1677 = vmatpush1.msra.mxu0 0.0
        %1678 = vmatprep.subr.mxu0 0.0
        %1679 = vmatpush1.msra.mxu0 0.0
        %1680 = vmatprep.subr.mxu0 0.0
        %1681 = vmatpush1.msra.mxu0 0.0
        %1682 = vmatprep.subr.mxu0 0.0
        %1683 = vmatpush1.msra.mxu0 0.0
        %1684 = vmatprep.subr.mxu0 0.0
        %1685 = vmatpush1.msra.mxu0 0.0
        %1686 = vmatprep.subr.mxu0 0.0
        %1687 = vmatpush1.msra.mxu0 0.0
        %1688 = vmatprep.subr.mxu0 0.0
        %1689 = vmatpush1.msra.mxu0 0.0
        %1690 = vmatprep.subr.mxu0 0.0
        %1691 = vmatpush1.msra.mxu0 0.0
        %1692 = vmatprep.subr.mxu0 0.0
        %1693 = vmatpush1.msra.mxu0 0.0
        %1694 = vmatprep.subr.mxu0 0.0
        %1695 = vmatpush1.msra.mxu0 0.0
        %1696 = vmatprep.subr.mxu0 0.0
        %1697 = vmatpush1.msra.mxu0 0.0
        %1698 = vmatprep.subr.mxu0 0.0
        %1699 = vmatpush1.msra.mxu0 0.0
        %1700 = vmatprep.subr.mxu0 0.0
        %1701 = vmatpush1.msra.mxu0 0.0
        %1702 = vmatprep.subr.mxu0 0.0
        %1703 = vmatpush1.msra.mxu0 0.0
        %1704 = vmatprep.subr.mxu0 0.0
        %1705 = vmatpush1.msra.mxu0 0.0
        %1706 = vmatprep.subr.mxu0 0.0
        %1707 = vmatpush1.msra.mxu0 0.0
        %1708 = vmatprep.subr.mxu0 0.0
        %1709 = vmatpush1.msra.mxu0 0.0
        %1710 = vmatprep.mubr.f32.mxu0 0.0
        %v1711 = vand.u32 %v1387, 4294901760
        %v1712 = vsub.f32 %v1387, %v1711
        %v1713 = vand.u32 %v1712, 4294901760
        %1714 = vmatmul.mubr.f32.gmra.mrb[0].mxu0 %v1713
        %v1715 = vpop.f32.mrb[0].mxu0
        %v1716 = vadd.f32 %v1638, %v1715
        %v1717 = vpop.f32.mrb[0].mxu0
        %v1718 = vadd.f32 %v1640, %v1717
        %1719 = vdwg.mxu0
        %v1720 = vand.u32 %v343, 4294901760
        %v1721 = vsub.f32 %v343, %v1720
        %v1722 = vand.u32 %v1721, 4294901760
        %1723 = vmatprep.subr.mxu0 %v1722
        %v1724 = vand.u32 %v342, 4294901760
        %v1725 = vsub.f32 %v342, %v1724
        %v1726 = vand.u32 %v1725, 4294901760
        %1727 = vmatpush1.msra.mxu0 %v1726
        %v1728 = vand.u32 %v347, 4294901760
        %v1729 = vsub.f32 %v347, %v1728
        %v1730 = vand.u32 %v1729, 4294901760
        %1731 = vmatprep.subr.mxu0 %v1730
        %v1732 = vand.u32 %v346, 4294901760
        %v1733 = vsub.f32 %v346, %v1732
        %v1734 = vand.u32 %v1733, 4294901760
        %1735 = vmatpush1.msra.mxu0 %v1734
        %1736 = vmatprep.subr.mxu0 0.0
        %1737 = vmatpush1.msra.mxu0 0.0
        %1738 = vmatprep.subr.mxu0 0.0
        %1739 = vmatpush1.msra.mxu0 0.0
        %1740 = vmatprep.subr.mxu0 0.0
        %1741 = vmatpush1.msra.mxu0 0.0
        %1742 = vmatprep.subr.mxu0 0.0
        %1743 = vmatpush1.msra.mxu0 0.0
        %1744 = vmatprep.subr.mxu0 0.0
        %1745 = vmatpush1.msra.mxu0 0.0
        %1746 = vmatprep.subr.mxu0 0.0
        %1747 = vmatpush1.msra.mxu0 0.0
        %1748 = vmatprep.subr.mxu0 0.0
        %1749 = vmatpush1.msra.mxu0 0.0
        %1750 = vmatprep.subr.mxu0 0.0
        %1751 = vmatpush1.msra.mxu0 0.0
        %1752 = vmatprep.subr.mxu0 0.0
        %1753 = vmatpush1.msra.mxu0 0.0
        %1754 = vmatprep.subr.mxu0 0.0
        %1755 = vmatpush1.msra.mxu0 0.0
        %1756 = vmatprep.subr.mxu0 0.0
        %1757 = vmatpush1.msra.mxu0 0.0
        %1758 = vmatprep.subr.mxu0 0.0
        %1759 = vmatpush1.msra.mxu0 0.0
        %1760 = vmatprep.subr.mxu0 0.0
        %1761 = vmatpush1.msra.mxu0 0.0
        %1762 = vmatprep.subr.mxu0 0.0
        %1763 = vmatpush1.msra.mxu0 0.0
        %1764 = vmatprep.subr.mxu0 0.0
        %1765 = vmatpush1.msra.mxu0 0.0
        %1766 = vmatprep.subr.mxu0 0.0
        %1767 = vmatpush1.msra.mxu0 0.0
        %1768 = vmatprep.subr.mxu0 0.0
        %1769 = vmatpush1.msra.mxu0 0.0
        %1770 = vmatprep.subr.mxu0 0.0
        %1771 = vmatpush1.msra.mxu0 0.0
        %1772 = vmatprep.subr.mxu0 0.0
        %1773 = vmatpush1.msra.mxu0 0.0
        %1774 = vmatprep.subr.mxu0 0.0
        %1775 = vmatpush1.msra.mxu0 0.0
        %1776 = vmatprep.subr.mxu0 0.0
        %1777 = vmatpush1.msra.mxu0 0.0
        %1778 = vmatprep.subr.mxu0 0.0
        %1779 = vmatpush1.msra.mxu0 0.0
        %1780 = vmatprep.subr.mxu0 0.0
        %1781 = vmatpush1.msra.mxu0 0.0
        %1782 = vmatprep.subr.mxu0 0.0
        %1783 = vmatpush1.msra.mxu0 0.0
        %1784 = vmatprep.subr.mxu0 0.0
        %1785 = vmatpush1.msra.mxu0 0.0
        %1786 = vmatprep.subr.mxu0 0.0
        %1787 = vmatpush1.msra.mxu0 0.0
        %1788 = vmatprep.subr.mxu0 0.0
        %1789 = vmatpush1.msra.mxu0 0.0
        %1790 = vmatprep.subr.mxu0 0.0
        %1791 = vmatpush1.msra.mxu0 0.0
        %1792 = vmatprep.subr.mxu0 0.0
        %1793 = vmatpush1.msra.mxu0 0.0
        %1794 = vmatprep.subr.mxu0 0.0
        %1795 = vmatpush1.msra.mxu0 0.0
        %1796 = vmatprep.mubr.f32.mxu0 0.0
        %v1797 = vand.u32 %v1387, 4294901760
        %1798 = vmatmul.mubr.f32.gmra.mrb[0].mxu0 %v1797
        %v1799 = vpop.f32.mrb[0].mxu0
        %v1800 = vadd.f32 %v1716, %v1799
        %v1801 = vpop.f32.mrb[0].mxu0
        %v1802 = vadd.f32 %v1718, %v1801
        %1803 = vdwg.mxu0
        %v1804 = vand.u32 %v343, 4294901760
        %1805 = vmatprep.subr.mxu0 %v1804
        %v1806 = vand.u32 %v342, 4294901760
        %1807 = vmatpush1.msra.mxu0 %v1806
        %v1808 = vand.u32 %v347, 4294901760
        %1809 = vmatprep.subr.mxu0 %v1808
        %v1810 = vand.u32 %v346, 4294901760
        %1811 = vmatpush1.msra.mxu0 %v1810
        %1812 = vmatprep.subr.mxu0 0.0
        %1813 = vmatpush1.msra.mxu0 0.0
        %1814 = vmatprep.subr.mxu0 0.0
        %1815 = vmatpush1.msra.mxu0 0.0
        %1816 = vmatprep.subr.mxu0 0.0
        %1817 = vmatpush1.msra.mxu0 0.0
        %1818 = vmatprep.subr.mxu0 0.0
        %1819 = vmatpush1.msra.mxu0 0.0
        %1820 = vmatprep.subr.mxu0 0.0
        %1821 = vmatpush1.msra.mxu0 0.0
        %1822 = vmatprep.subr.mxu0 0.0
        %1823 = vmatpush1.msra.mxu0 0.0
        %1824 = vmatprep.subr.mxu0 0.0
        %1825 = vmatpush1.msra.mxu0 0.0
        %1826 = vmatprep.subr.mxu0 0.0
        %1827 = vmatpush1.msra.mxu0 0.0
        %1828 = vmatprep.subr.mxu0 0.0
        %1829 = vmatpush1.msra.mxu0 0.0
        %1830 = vmatprep.subr.mxu0 0.0
        %1831 = vmatpush1.msra.mxu0 0.0
        %1832 = vmatprep.subr.mxu0 0.0
        %1833 = vmatpush1.msra.mxu0 0.0
        %1834 = vmatprep.subr.mxu0 0.0
        %1835 = vmatpush1.msra.mxu0 0.0
        %1836 = vmatprep.subr.mxu0 0.0
        %1837 = vmatpush1.msra.mxu0 0.0
        %1838 = vmatprep.subr.mxu0 0.0
        %1839 = vmatpush1.msra.mxu0 0.0
        %1840 = vmatprep.subr.mxu0 0.0
        %1841 = vmatpush1.msra.mxu0 0.0
        %1842 = vmatprep.subr.mxu0 0.0
        %1843 = vmatpush1.msra.mxu0 0.0
        %1844 = vmatprep.subr.mxu0 0.0
        %1845 = vmatpush1.msra.mxu0 0.0
        %1846 = vmatprep.subr.mxu0 0.0
        %1847 = vmatpush1.msra.mxu0 0.0
        %1848 = vmatprep.subr.mxu0 0.0
        %1849 = vmatpush1.msra.mxu0 0.0
        %1850 = vmatprep.subr.mxu0 0.0
        %1851 = vmatpush1.msra.mxu0 0.0
        %1852 = vmatprep.subr.mxu0 0.0
        %1853 = vmatpush1.msra.mxu0 0.0
        %1854 = vmatprep.subr.mxu0 0.0
        %1855 = vmatpush1.msra.mxu0 0.0
        %1856 = vmatprep.subr.mxu0 0.0
        %1857 = vmatpush1.msra.mxu0 0.0
        %1858 = vmatprep.subr.mxu0 0.0
        %1859 = vmatpush1.msra.mxu0 0.0
        %1860 = vmatprep.subr.mxu0 0.0
        %1861 = vmatpush1.msra.mxu0 0.0
        %1862 = vmatprep.subr.mxu0 0.0
        %1863 = vmatpush1.msra.mxu0 0.0
        %1864 = vmatprep.subr.mxu0 0.0
        %1865 = vmatpush1.msra.mxu0 0.0
        %1866 = vmatprep.subr.mxu0 0.0
        %1867 = vmatpush1.msra.mxu0 0.0
        %1868 = vmatprep.subr.mxu0 0.0
        %1869 = vmatpush1.msra.mxu0 0.0
        %1870 = vmatprep.subr.mxu0 0.0
        %1871 = vmatpush1.msra.mxu0 0.0
        %1872 = vmatprep.mubr.f32.mxu0 0.0
        %v1873 = vand.u32 %v1387, 4294901760
        %1874 = vmatmul.mubr.f32.gmra.mrb[0].mxu0 %v1873
        %v1875 = vpop.f32.mrb[0].mxu0
        %v1876 = vadd.f32 %v1800, %v1875
        %v1877 = vpop.f32.mrb[0].mxu0
        %v1878 = vadd.f32 %v1802, %v1877
        %1879 = vdwg.mxu0
        %v1880 = vand.u32 %v345, 4294901760
        %1881 = vmatprep.subr.mxu0 %v1880
        %v1882 = vand.u32 %v344, 4294901760
        %1883 = vmatpush1.msra.mxu0 %v1882
        %v1884 = vand.u32 %v349, 4294901760
        %1885 = vmatprep.subr.mxu0 %v1884
        %v1886 = vand.u32 %v348, 4294901760
        %1887 = vmatpush1.msra.mxu0 %v1886
        %1888 = vmatprep.subr.mxu0 0.0
        %1889 = vmatpush1.msra.mxu0 0.0
        %1890 = vmatprep.subr.mxu0 0.0
        %1891 = vmatpush1.msra.mxu0 0.0
        %1892 = vmatprep.subr.mxu0 0.0
        %1893 = vmatpush1.msra.mxu0 0.0
        %1894 = vmatprep.subr.mxu0 0.0
        %1895 = vmatpush1.msra.mxu0 0.0
        %1896 = vmatprep.subr.mxu0 0.0
        %1897 = vmatpush1.msra.mxu0 0.0
        %1898 = vmatprep.subr.mxu0 0.0
        %1899 = vmatpush1.msra.mxu0 0.0
        %1900 = vmatprep.subr.mxu0 0.0
        %1901 = vmatpush1.msra.mxu0 0.0
        %1902 = vmatprep.subr.mxu0 0.0
        %1903 = vmatpush1.msra.mxu0 0.0
        %1904 = vmatprep.subr.mxu0 0.0
        %1905 = vmatpush1.msra.mxu0 0.0
        %1906 = vmatprep.subr.mxu0 0.0
        %1907 = vmatpush1.msra.mxu0 0.0
        %1908 = vmatprep.subr.mxu0 0.0
        %1909 = vmatpush1.msra.mxu0 0.0
        %1910 = vmatprep.subr.mxu0 0.0
        %1911 = vmatpush1.msra.mxu0 0.0
        %1912 = vmatprep.subr.mxu0 0.0
        %1913 = vmatpush1.msra.mxu0 0.0
        %1914 = vmatprep.subr.mxu0 0.0
        %1915 = vmatpush1.msra.mxu0 0.0
        %1916 = vmatprep.subr.mxu0 0.0
        %1917 = vmatpush1.msra.mxu0 0.0
        %1918 = vmatprep.subr.mxu0 0.0
        %1919 = vmatpush1.msra.mxu0 0.0
        %1920 = vmatprep.subr.mxu0 0.0
        %1921 = vmatpush1.msra.mxu0 0.0
        %1922 = vmatprep.subr.mxu0 0.0
        %1923 = vmatpush1.msra.mxu0 0.0
        %1924 = vmatprep.subr.mxu0 0.0
        %1925 = vmatpush1.msra.mxu0 0.0
        %1926 = vmatprep.subr.mxu0 0.0
        %1927 = vmatpush1.msra.mxu0 0.0
        %1928 = vmatprep.subr.mxu0 0.0
        %1929 = vmatpush1.msra.mxu0 0.0
        %1930 = vmatprep.subr.mxu0 0.0
        %1931 = vmatpush1.msra.mxu0 0.0
        %1932 = vmatprep.subr.mxu0 0.0
        %1933 = vmatpush1.msra.mxu0 0.0
        %1934 = vmatprep.subr.mxu0 0.0
        %1935 = vmatpush1.msra.mxu0 0.0
        %1936 = vmatprep.subr.mxu0 0.0
        %1937 = vmatpush1.msra.mxu0 0.0
        %1938 = vmatprep.subr.mxu0 0.0
        %1939 = vmatpush1.msra.mxu0 0.0
        %1940 = vmatprep.subr.mxu0 0.0
        %1941 = vmatpush1.msra.mxu0 0.0
        %1942 = vmatprep.subr.mxu0 0.0
        %1943 = vmatpush1.msra.mxu0 0.0
        %1944 = vmatprep.subr.mxu0 0.0
        %1945 = vmatpush1.msra.mxu0 0.0
        %1946 = vmatprep.subr.mxu0 0.0
        %1947 = vmatpush1.msra.mxu0 0.0
        %1948 = vmatprep.mubr.f32.mxu0 0.0
        %v1949 = vand.u32 %v1387, 4294901760
        %v1950 = vsub.f32 %v1387, %v1949
        %v1951 = vand.u32 %v1950, 4294901760
        %v1952 = vsub.f32 %v1950, %v1951
        %v1953 = vand.u32 %v1952, 4294901760
        %1954 = vmatmul.mubr.f32.gmra.mrb[0].mxu0 %v1953
        %v1955 = vpop.f32.mrb[0].mxu0
        %v1956 = vadd.f32 %v1382, %v1955
        %v1957 = vpop.f32.mrb[0].mxu0
        %v1958 = vadd.f32 %v1384, %v1957
        %1959 = vdwg.mxu0
        %v1960 = vand.u32 %v345, 4294901760
        %v1961 = vsub.f32 %v345, %v1960
        %v1962 = vand.u32 %v1961, 4294901760
        %v1963 = vsub.f32 %v1961, %v1962
        %v1964 = vand.u32 %v1963, 4294901760
        %1965 = vmatprep.subr.mxu0 %v1964
        %v1966 = vand.u32 %v344, 4294901760
        %v1967 = vsub.f32 %v344, %v1966
        %v1968 = vand.u32 %v1967, 4294901760
        %v1969 = vsub.f32 %v1967, %v1968
        %v1970 = vand.u32 %v1969, 4294901760
        %1971 = vmatpush1.msra.mxu0 %v1970
        %v1972 = vand.u32 %v349, 4294901760
        %v1973 = vsub.f32 %v349, %v1972
        %v1974 = vand.u32 %v1973, 4294901760
        %v1975 = vsub.f32 %v1973, %v1974
        %v1976 = vand.u32 %v1975, 4294901760
        %1977 = vmatprep.subr.mxu0 %v1976
        %v1978 = vand.u32 %v348, 4294901760
        %v1979 = vsub.f32 %v348, %v1978
        %v1980 = vand.u32 %v1979, 4294901760
        %v1981 = vsub.f32 %v1979, %v1980
        %v1982 = vand.u32 %v1981, 4294901760
        %1983 = vmatpush1.msra.mxu0 %v1982
        %1984 = vmatprep.subr.mxu0 0.0
        %1985 = vmatpush1.msra.mxu0 0.0
        %1986 = vmatprep.subr.mxu0 0.0
        %1987 = vmatpush1.msra.mxu0 0.0
        %1988 = vmatprep.subr.mxu0 0.0
        %1989 = vmatpush1.msra.mxu0 0.0
        %1990 = vmatprep.subr.mxu0 0.0
        %1991 = vmatpush1.msra.mxu0 0.0
        %1992 = vmatprep.subr.mxu0 0.0
        %1993 = vmatpush1.msra.mxu0 0.0
        %1994 = vmatprep.subr.mxu0 0.0
        %1995 = vmatpush1.msra.mxu0 0.0
        %1996 = vmatprep.subr.mxu0 0.0
        %1997 = vmatpush1.msra.mxu0 0.0
        %1998 = vmatprep.subr.mxu0 0.0
        %1999 = vmatpush1.msra.mxu0 0.0
        %2000 = vmatprep.subr.mxu0 0.0
        %2001 = vmatpush1.msra.mxu0 0.0
        %2002 = vmatprep.subr.mxu0 0.0
        %2003 = vmatpush1.msra.mxu0 0.0
        %2004 = vmatprep.subr.mxu0 0.0
        %2005 = vmatpush1.msra.mxu0 0.0
        %2006 = vmatprep.subr.mxu0 0.0
        %2007 = vmatpush1.msra.mxu0 0.0
        %2008 = vmatprep.subr.mxu0 0.0
        %2009 = vmatpush1.msra.mxu0 0.0
        %2010 = vmatprep.subr.mxu0 0.0
        %2011 = vmatpush1.msra.mxu0 0.0
        %2012 = vmatprep.subr.mxu0 0.0
        %2013 = vmatpush1.msra.mxu0 0.0
        %2014 = vmatprep.subr.mxu0 0.0
        %2015 = vmatpush1.msra.mxu0 0.0
        %2016 = vmatprep.subr.mxu0 0.0
        %2017 = vmatpush1.msra.mxu0 0.0
        %2018 = vmatprep.subr.mxu0 0.0
        %2019 = vmatpush1.msra.mxu0 0.0
        %2020 = vmatprep.subr.mxu0 0.0
        %2021 = vmatpush1.msra.mxu0 0.0
        %2022 = vmatprep.subr.mxu0 0.0
        %2023 = vmatpush1.msra.mxu0 0.0
        %2024 = vmatprep.subr.mxu0 0.0
        %2025 = vmatpush1.msra.mxu0 0.0
        %2026 = vmatprep.subr.mxu0 0.0
        %2027 = vmatpush1.msra.mxu0 0.0
        %2028 = vmatprep.subr.mxu0 0.0
        %2029 = vmatpush1.msra.mxu0 0.0
        %2030 = vmatprep.subr.mxu0 0.0
        %2031 = vmatpush1.msra.mxu0 0.0
        %2032 = vmatprep.subr.mxu0 0.0
        %2033 = vmatpush1.msra.mxu0 0.0
        %2034 = vmatprep.subr.mxu0 0.0
        %2035 = vmatpush1.msra.mxu0 0.0
        %2036 = vmatprep.subr.mxu0 0.0
        %2037 = vmatpush1.msra.mxu0 0.0
        %2038 = vmatprep.subr.mxu0 0.0
        %2039 = vmatpush1.msra.mxu0 0.0
        %2040 = vmatprep.subr.mxu0 0.0
        %2041 = vmatpush1.msra.mxu0 0.0
        %2042 = vmatprep.subr.mxu0 0.0
        %2043 = vmatpush1.msra.mxu0 0.0
        %2044 = vmatprep.mubr.f32.mxu0 0.0
        %v2045 = vand.u32 %v1387, 4294901760
        %2046 = vmatmul.mubr.f32.gmra.mrb[0].mxu0 %v2045
        %v2047 = vpop.f32.mrb[0].mxu0
        %v2048 = vadd.f32 %v1956, %v2047
        %v2049 = vpop.f32.mrb[0].mxu0
        %v2050 = vadd.f32 %v1958, %v2049
        %2051 = vdwg.mxu0
        %v2052 = vand.u32 %v345, 4294901760
        %v2053 = vsub.f32 %v345, %v2052
        %2054 = vmatprep.subr.mxu0 %v2053
        %v2055 = vand.u32 %v344, 4294901760
        %v2056 = vsub.f32 %v344, %v2055
        %2057 = vmatpush1.msra.mxu0 %v2056
        %v2058 = vand.u32 %v349, 4294901760
        %v2059 = vsub.f32 %v349, %v2058
        %2060 = vmatprep.subr.mxu0 %v2059
        %v2061 = vand.u32 %v348, 4294901760
        %v2062 = vsub.f32 %v348, %v2061
        %2063 = vmatpush1.msra.mxu0 %v2062
        %2064 = vmatprep.subr.mxu0 0.0
        %2065 = vmatpush1.msra.mxu0 0.0
        %2066 = vmatprep.subr.mxu0 0.0
        %2067 = vmatpush1.msra.mxu0 0.0
        %2068 = vmatprep.subr.mxu0 0.0
        %2069 = vmatpush1.msra.mxu0 0.0
        %2070 = vmatprep.subr.mxu0 0.0
        %2071 = vmatpush1.msra.mxu0 0.0
        %2072 = vmatprep.subr.mxu0 0.0
        %2073 = vmatpush1.msra.mxu0 0.0
        %2074 = vmatprep.subr.mxu0 0.0
        %2075 = vmatpush1.msra.mxu0 0.0
        %2076 = vmatprep.subr.mxu0 0.0
        %2077 = vmatpush1.msra.mxu0 0.0
        %2078 = vmatprep.subr.mxu0 0.0
        %2079 = vmatpush1.msra.mxu0 0.0
        %2080 = vmatprep.subr.mxu0 0.0
        %2081 = vmatpush1.msra.mxu0 0.0
        %2082 = vmatprep.subr.mxu0 0.0
        %2083 = vmatpush1.msra.mxu0 0.0
        %2084 = vmatprep.subr.mxu0 0.0
        %2085 = vmatpush1.msra.mxu0 0.0
        %2086 = vmatprep.subr.mxu0 0.0
        %2087 = vmatpush1.msra.mxu0 0.0
        %2088 = vmatprep.subr.mxu0 0.0
        %2089 = vmatpush1.msra.mxu0 0.0
        %2090 = vmatprep.subr.mxu0 0.0
        %2091 = vmatpush1.msra.mxu0 0.0
        %2092 = vmatprep.subr.mxu0 0.0
        %2093 = vmatpush1.msra.mxu0 0.0
        %2094 = vmatprep.subr.mxu0 0.0
        %2095 = vmatpush1.msra.mxu0 0.0
        %2096 = vmatprep.subr.mxu0 0.0
        %2097 = vmatpush1.msra.mxu0 0.0
        %2098 = vmatprep.subr.mxu0 0.0
        %2099 = vmatpush1.msra.mxu0 0.0
        %2100 = vmatprep.subr.mxu0 0.0
        %2101 = vmatpush1.msra.mxu0 0.0
        %2102 = vmatprep.subr.mxu0 0.0
        %2103 = vmatpush1.msra.mxu0 0.0
        %2104 = vmatprep.subr.mxu0 0.0
        %2105 = vmatpush1.msra.mxu0 0.0
        %2106 = vmatprep.subr.mxu0 0.0
        %2107 = vmatpush1.msra.mxu0 0.0
        %2108 = vmatprep.subr.mxu0 0.0
        %2109 = vmatpush1.msra.mxu0 0.0
        %2110 = vmatprep.subr.mxu0 0.0
        %2111 = vmatpush1.msra.mxu0 0.0
        %2112 = vmatprep.subr.mxu0 0.0
        %2113 = vmatpush1.msra.mxu0 0.0
        %2114 = vmatprep.subr.mxu0 0.0
        %2115 = vmatpush1.msra.mxu0 0.0
        %2116 = vmatprep.subr.mxu0 0.0
        %2117 = vmatpush1.msra.mxu0 0.0
        %2118 = vmatprep.subr.mxu0 0.0
        %2119 = vmatpush1.msra.mxu0 0.0
        %2120 = vmatprep.subr.mxu0 0.0
        %2121 = vmatpush1.msra.mxu0 0.0
        %2122 = vmatprep.subr.mxu0 0.0
        %2123 = vmatpush1.msra.mxu0 0.0
        %2124 = vmatprep.mubr.f32.mxu0 0.0
        %v2125 = vand.u32 %v1387, 4294901760
        %v2126 = vsub.f32 %v1387, %v2125
        %2127 = vmatmul.mubr.f32.gmra.mrb[0].mxu0 %v2126
        %v2128 = vpop.f32.mrb[0].mxu0
        %v2129 = vadd.f32 %v2048, %v2128
        %v2130 = vpop.f32.mrb[0].mxu0
        %v2131 = vadd.f32 %v2050, %v2130
        %2132 = vdwg.mxu0
        %v2133 = vand.u32 %v345, 4294901760
        %2134 = vmatprep.subr.mxu0 %v2133
        %v2135 = vand.u32 %v344, 4294901760
        %2136 = vmatpush1.msra.mxu0 %v2135
        %v2137 = vand.u32 %v349, 4294901760
        %2138 = vmatprep.subr.mxu0 %v2137
        %v2139 = vand.u32 %v348, 4294901760
        %2140 = vmatpush1.msra.mxu0 %v2139
        %2141 = vmatprep.subr.mxu0 0.0
        %2142 = vmatpush1.msra.mxu0 0.0
        %2143 = vmatprep.subr.mxu0 0.0
        %2144 = vmatpush1.msra.mxu0 0.0
        %2145 = vmatprep.subr.mxu0 0.0
        %2146 = vmatpush1.msra.mxu0 0.0
        %2147 = vmatprep.subr.mxu0 0.0
        %2148 = vmatpush1.msra.mxu0 0.0
        %2149 = vmatprep.subr.mxu0 0.0
        %2150 = vmatpush1.msra.mxu0 0.0
        %2151 = vmatprep.subr.mxu0 0.0
        %2152 = vmatpush1.msra.mxu0 0.0
        %2153 = vmatprep.subr.mxu0 0.0
        %2154 = vmatpush1.msra.mxu0 0.0
        %2155 = vmatprep.subr.mxu0 0.0
        %2156 = vmatpush1.msra.mxu0 0.0
        %2157 = vmatprep.subr.mxu0 0.0
        %2158 = vmatpush1.msra.mxu0 0.0
        %2159 = vmatprep.subr.mxu0 0.0
        %2160 = vmatpush1.msra.mxu0 0.0
        %2161 = vmatprep.subr.mxu0 0.0
        %2162 = vmatpush1.msra.mxu0 0.0
        %2163 = vmatprep.subr.mxu0 0.0
        %2164 = vmatpush1.msra.mxu0 0.0
        %2165 = vmatprep.subr.mxu0 0.0
        %2166 = vmatpush1.msra.mxu0 0.0
        %2167 = vmatprep.subr.mxu0 0.0
        %2168 = vmatpush1.msra.mxu0 0.0
        %2169 = vmatprep.subr.mxu0 0.0
        %2170 = vmatpush1.msra.mxu0 0.0
        %2171 = vmatprep.subr.mxu0 0.0
        %2172 = vmatpush1.msra.mxu0 0.0
        %2173 = vmatprep.subr.mxu0 0.0
        %2174 = vmatpush1.msra.mxu0 0.0
        %2175 = vmatprep.subr.mxu0 0.0
        %2176 = vmatpush1.msra.mxu0 0.0
        %2177 = vmatprep.subr.mxu0 0.0
        %2178 = vmatpush1.msra.mxu0 0.0
        %2179 = vmatprep.subr.mxu0 0.0
        %2180 = vmatpush1.msra.mxu0 0.0
        %2181 = vmatprep.subr.mxu0 0.0
        %2182 = vmatpush1.msra.mxu0 0.0
        %2183 = vmatprep.subr.mxu0 0.0
        %2184 = vmatpush1.msra.mxu0 0.0
        %2185 = vmatprep.subr.mxu0 0.0
        %2186 = vmatpush1.msra.mxu0 0.0
        %2187 = vmatprep.subr.mxu0 0.0
        %2188 = vmatpush1.msra.mxu0 0.0
        %2189 = vmatprep.subr.mxu0 0.0
        %2190 = vmatpush1.msra.mxu0 0.0
        %2191 = vmatprep.subr.mxu0 0.0
        %2192 = vmatpush1.msra.mxu0 0.0
        %2193 = vmatprep.subr.mxu0 0.0
        %2194 = vmatpush1.msra.mxu0 0.0
        %2195 = vmatprep.subr.mxu0 0.0
        %2196 = vmatpush1.msra.mxu0 0.0
        %2197 = vmatprep.subr.mxu0 0.0
        %2198 = vmatpush1.msra.mxu0 0.0
        %2199 = vmatprep.subr.mxu0 0.0
        %2200 = vmatpush1.msra.mxu0 0.0
        %2201 = vmatprep.mubr.f32.mxu0 0.0
        %v2202 = vand.u32 %v1387, 4294901760
        %v2203 = vsub.f32 %v1387, %v2202
        %v2204 = vand.u32 %v2203, 4294901760
        %2205 = vmatmul.mubr.f32.gmra.mrb[0].mxu0 %v2204
        %v2206 = vpop.f32.mrb[0].mxu0
        %v2207 = vadd.f32 %v2129, %v2206
        %v2208 = vpop.f32.mrb[0].mxu0
        %v2209 = vadd.f32 %v2131, %v2208
        %2210 = vdwg.mxu0
        %v2211 = vand.u32 %v345, 4294901760
        %v2212 = vsub.f32 %v345, %v2211
        %v2213 = vand.u32 %v2212, 4294901760
        %2214 = vmatprep.subr.mxu0 %v2213
        %v2215 = vand.u32 %v344, 4294901760
        %v2216 = vsub.f32 %v344, %v2215
        %v2217 = vand.u32 %v2216, 4294901760
        %2218 = vmatpush1.msra.mxu0 %v2217
        %v2219 = vand.u32 %v349, 4294901760
        %v2220 = vsub.f32 %v349, %v2219
        %v2221 = vand.u32 %v2220, 4294901760
        %2222 = vmatprep.subr.mxu0 %v2221
        %v2223 = vand.u32 %v348, 4294901760
        %v2224 = vsub.f32 %v348, %v2223
        %v2225 = vand.u32 %v2224, 4294901760
        %2226 = vmatpush1.msra.mxu0 %v2225
        %2227 = vmatprep.subr.mxu0 0.0
        %2228 = vmatpush1.msra.mxu0 0.0
        %2229 = vmatprep.subr.mxu0 0.0
        %2230 = vmatpush1.msra.mxu0 0.0
        %2231 = vmatprep.subr.mxu0 0.0
        %2232 = vmatpush1.msra.mxu0 0.0
        %2233 = vmatprep.subr.mxu0 0.0
        %2234 = vmatpush1.msra.mxu0 0.0
        %2235 = vmatprep.subr.mxu0 0.0
        %2236 = vmatpush1.msra.mxu0 0.0
        %2237 = vmatprep.subr.mxu0 0.0
        %2238 = vmatpush1.msra.mxu0 0.0
        %2239 = vmatprep.subr.mxu0 0.0
        %2240 = vmatpush1.msra.mxu0 0.0
        %2241 = vmatprep.subr.mxu0 0.0
        %2242 = vmatpush1.msra.mxu0 0.0
        %2243 = vmatprep.subr.mxu0 0.0
        %2244 = vmatpush1.msra.mxu0 0.0
        %2245 = vmatprep.subr.mxu0 0.0
        %2246 = vmatpush1.msra.mxu0 0.0
        %2247 = vmatprep.subr.mxu0 0.0
        %2248 = vmatpush1.msra.mxu0 0.0
        %2249 = vmatprep.subr.mxu0 0.0
        %2250 = vmatpush1.msra.mxu0 0.0
        %2251 = vmatprep.subr.mxu0 0.0
        %2252 = vmatpush1.msra.mxu0 0.0
        %2253 = vmatprep.subr.mxu0 0.0
        %2254 = vmatpush1.msra.mxu0 0.0
        %2255 = vmatprep.subr.mxu0 0.0
        %2256 = vmatpush1.msra.mxu0 0.0
        %2257 = vmatprep.subr.mxu0 0.0
        %2258 = vmatpush1.msra.mxu0 0.0
        %2259 = vmatprep.subr.mxu0 0.0
        %2260 = vmatpush1.msra.mxu0 0.0
        %2261 = vmatprep.subr.mxu0 0.0
        %2262 = vmatpush1.msra.mxu0 0.0
        %2263 = vmatprep.subr.mxu0 0.0
        %2264 = vmatpush1.msra.mxu0 0.0
        %2265 = vmatprep.subr.mxu0 0.0
        %2266 = vmatpush1.msra.mxu0 0.0
        %2267 = vmatprep.subr.mxu0 0.0
        %2268 = vmatpush1.msra.mxu0 0.0
        %2269 = vmatprep.subr.mxu0 0.0
        %2270 = vmatpush1.msra.mxu0 0.0
        %2271 = vmatprep.subr.mxu0 0.0
        %2272 = vmatpush1.msra.mxu0 0.0
        %2273 = vmatprep.subr.mxu0 0.0
        %2274 = vmatpush1.msra.mxu0 0.0
        %2275 = vmatprep.subr.mxu0 0.0
        %2276 = vmatpush1.msra.mxu0 0.0
        %2277 = vmatprep.subr.mxu0 0.0
        %2278 = vmatpush1.msra.mxu0 0.0
        %2279 = vmatprep.subr.mxu0 0.0
        %2280 = vmatpush1.msra.mxu0 0.0
        %2281 = vmatprep.subr.mxu0 0.0
        %2282 = vmatpush1.msra.mxu0 0.0
        %2283 = vmatprep.subr.mxu0 0.0
        %2284 = vmatpush1.msra.mxu0 0.0
        %2285 = vmatprep.subr.mxu0 0.0
        %2286 = vmatpush1.msra.mxu0 0.0
        %2287 = vmatprep.mubr.f32.mxu0 0.0
        %v2288 = vand.u32 %v1387, 4294901760
        %2289 = vmatmul.mubr.f32.gmra.mrb[0].mxu0 %v2288
        %v2290 = vpop.f32.mrb[0].mxu0
        %v2291 = vadd.f32 %v2207, %v2290
        %v2292 = vpop.f32.mrb[0].mxu0
        %v2293 = vadd.f32 %v2209, %v2292
        %2294 = vdwg.mxu0
        %v2295 = vand.u32 %v345, 4294901760
        %2296 = vmatprep.subr.mxu0 %v2295
        %v2297 = vand.u32 %v344, 4294901760
        %2298 = vmatpush1.msra.mxu0 %v2297
        %v2299 = vand.u32 %v349, 4294901760
        %2300 = vmatprep.subr.mxu0 %v2299
        %v2301 = vand.u32 %v348, 4294901760
        %2302 = vmatpush1.msra.mxu0 %v2301
        %2303 = vmatprep.subr.mxu0 0.0
        %2304 = vmatpush1.msra.mxu0 0.0
        %2305 = vmatprep.subr.mxu0 0.0
        %2306 = vmatpush1.msra.mxu0 0.0
        %2307 = vmatprep.subr.mxu0 0.0
        %2308 = vmatpush1.msra.mxu0 0.0
        %2309 = vmatprep.subr.mxu0 0.0
        %2310 = vmatpush1.msra.mxu0 0.0
        %2311 = vmatprep.subr.mxu0 0.0
        %2312 = vmatpush1.msra.mxu0 0.0
        %2313 = vmatprep.subr.mxu0 0.0
        %2314 = vmatpush1.msra.mxu0 0.0
        %2315 = vmatprep.subr.mxu0 0.0
        %2316 = vmatpush1.msra.mxu0 0.0
        %2317 = vmatprep.subr.mxu0 0.0
        %2318 = vmatpush1.msra.mxu0 0.0
        %2319 = vmatprep.subr.mxu0 0.0
        %2320 = vmatpush1.msra.mxu0 0.0
        %2321 = vmatprep.subr.mxu0 0.0
        %2322 = vmatpush1.msra.mxu0 0.0
        %2323 = vmatprep.subr.mxu0 0.0
        %2324 = vmatpush1.msra.mxu0 0.0
        %2325 = vmatprep.subr.mxu0 0.0
        %2326 = vmatpush1.msra.mxu0 0.0
        %2327 = vmatprep.subr.mxu0 0.0
        %2328 = vmatpush1.msra.mxu0 0.0
        %2329 = vmatprep.subr.mxu0 0.0
        %2330 = vmatpush1.msra.mxu0 0.0
        %2331 = vmatprep.subr.mxu0 0.0
        %2332 = vmatpush1.msra.mxu0 0.0
        %2333 = vmatprep.subr.mxu0 0.0
        %2334 = vmatpush1.msra.mxu0 0.0
        %2335 = vmatprep.subr.mxu0 0.0
        %2336 = vmatpush1.msra.mxu0 0.0
        %2337 = vmatprep.subr.mxu0 0.0
        %2338 = vmatpush1.msra.mxu0 0.0
        %2339 = vmatprep.subr.mxu0 0.0
        %2340 = vmatpush1.msra.mxu0 0.0
        %2341 = vmatprep.subr.mxu0 0.0
        %2342 = vmatpush1.msra.mxu0 0.0
        %2343 = vmatprep.subr.mxu0 0.0
        %2344 = vmatpush1.msra.mxu0 0.0
        %2345 = vmatprep.subr.mxu0 0.0
        %2346 = vmatpush1.msra.mxu0 0.0
        %2347 = vmatprep.subr.mxu0 0.0
        %2348 = vmatpush1.msra.mxu0 0.0
        %2349 = vmatprep.subr.mxu0 0.0
        %2350 = vmatpush1.msra.mxu0 0.0
        %2351 = vmatprep.subr.mxu0 0.0
        %2352 = vmatpush1.msra.mxu0 0.0
        %2353 = vmatprep.subr.mxu0 0.0
        %2354 = vmatpush1.msra.mxu0 0.0
        %2355 = vmatprep.subr.mxu0 0.0
        %2356 = vmatpush1.msra.mxu0 0.0
        %2357 = vmatprep.subr.mxu0 0.0
        %2358 = vmatpush1.msra.mxu0 0.0
        %2359 = vmatprep.subr.mxu0 0.0
        %2360 = vmatpush1.msra.mxu0 0.0
        %2361 = vmatprep.subr.mxu0 0.0
        %2362 = vmatpush1.msra.mxu0 0.0
        %2363 = vmatprep.mubr.f32.mxu0 0.0
        %v2364 = vand.u32 %v1387, 4294901760
        %2365 = vmatmul.mubr.f32.gmra.mrb[0].mxu0 %v2364
        %v2366 = vpop.f32.mrb[0].mxu0
        %v2367 = vadd.f32 %v2291, %v2366
        %v2368 = vpop.f32.mrb[0].mxu0
        %v2369 = vadd.f32 %v2293, %v2368
        %2370 = vdwg.mxu0
        %s2371 = scalar_lea.vmem %s3, 16
        %v2372 = vld [vmem:[%s2371] sm:$0xff]
        %v2374 = vsel %vm400, %v2372, 0
        %v2376 = vand.u32 %v390, 4294901760
        %2377 = vmatprep.subr.mxu0 %v2376
        %v2378 = vand.u32 %v389, 4294901760
        %2379 = vmatpush1.msra.mxu0 %v2378
        %v2380 = vand.u32 %v394, 4294901760
        %2381 = vmatprep.subr.mxu0 %v2380
        %v2382 = vand.u32 %v393, 4294901760
        %2383 = vmatpush1.msra.mxu0 %v2382
        %2384 = vmatprep.subr.mxu0 0.0
        %2385 = vmatpush1.msra.mxu0 0.0
        %2386 = vmatprep.subr.mxu0 0.0
        %2387 = vmatpush1.msra.mxu0 0.0
        %2388 = vmatprep.subr.mxu0 0.0
        %2389 = vmatpush1.msra.mxu0 0.0
        %2390 = vmatprep.subr.mxu0 0.0
        %2391 = vmatpush1.msra.mxu0 0.0
        %2392 = vmatprep.subr.mxu0 0.0
        %2393 = vmatpush1.msra.mxu0 0.0
        %2394 = vmatprep.subr.mxu0 0.0
        %2395 = vmatpush1.msra.mxu0 0.0
        %2396 = vmatprep.subr.mxu0 0.0
        %2397 = vmatpush1.msra.mxu0 0.0
        %2398 = vmatprep.subr.mxu0 0.0
        %2399 = vmatpush1.msra.mxu0 0.0
        %2400 = vmatprep.subr.mxu0 0.0
        %2401 = vmatpush1.msra.mxu0 0.0
        %2402 = vmatprep.subr.mxu0 0.0
        %2403 = vmatpush1.msra.mxu0 0.0
        %2404 = vmatprep.subr.mxu0 0.0
        %2405 = vmatpush1.msra.mxu0 0.0
        %2406 = vmatprep.subr.mxu0 0.0
        %2407 = vmatpush1.msra.mxu0 0.0
        %2408 = vmatprep.subr.mxu0 0.0
        %2409 = vmatpush1.msra.mxu0 0.0
        %2410 = vmatprep.subr.mxu0 0.0
        %2411 = vmatpush1.msra.mxu0 0.0
        %2412 = vmatprep.subr.mxu0 0.0
        %2413 = vmatpush1.msra.mxu0 0.0
        %2414 = vmatprep.subr.mxu0 0.0
        %2415 = vmatpush1.msra.mxu0 0.0
        %2416 = vmatprep.subr.mxu0 0.0
        %2417 = vmatpush1.msra.mxu0 0.0
        %2418 = vmatprep.subr.mxu0 0.0
        %2419 = vmatpush1.msra.mxu0 0.0
        %2420 = vmatprep.subr.mxu0 0.0
        %2421 = vmatpush1.msra.mxu0 0.0
        %2422 = vmatprep.subr.mxu0 0.0
        %2423 = vmatpush1.msra.mxu0 0.0
        %2424 = vmatprep.subr.mxu0 0.0
        %2425 = vmatpush1.msra.mxu0 0.0
        %2426 = vmatprep.subr.mxu0 0.0
        %2427 = vmatpush1.msra.mxu0 0.0
        %2428 = vmatprep.subr.mxu0 0.0
        %2429 = vmatpush1.msra.mxu0 0.0
        %2430 = vmatprep.subr.mxu0 0.0
        %2431 = vmatpush1.msra.mxu0 0.0
        %2432 = vmatprep.subr.mxu0 0.0
        %2433 = vmatpush1.msra.mxu0 0.0
        %2434 = vmatprep.subr.mxu0 0.0
        %2435 = vmatpush1.msra.mxu0 0.0
        %2436 = vmatprep.subr.mxu0 0.0
        %2437 = vmatpush1.msra.mxu0 0.0
        %2438 = vmatprep.subr.mxu0 0.0
        %2439 = vmatpush1.msra.mxu0 0.0
        %2440 = vmatprep.subr.mxu0 0.0
        %2441 = vmatpush1.msra.mxu0 0.0
        %2442 = vmatprep.subr.mxu0 0.0
        %2443 = vmatpush1.msra.mxu0 0.0
        %2444 = vmatprep.mubr.f32.mxu0 0.0
        %v2445 = vand.u32 %v2374, 4294901760
        %v2446 = vsub.f32 %v2374, %v2445
        %v2447 = vand.u32 %v2446, 4294901760
        %v2448 = vsub.f32 %v2446, %v2447
        %v2449 = vand.u32 %v2448, 4294901760
        %2450 = vmatmul.mubr.f32.gmra.mrb[0].mxu0 %v2449
        %v2451 = vpop.f32.mrb[0].mxu0
        %v2452 = vadd.f32 0.0, %v2451
        %v2453 = vpop.f32.mrb[0].mxu0
        %v2454 = vadd.f32 0.0, %v2453
        %2455 = vdwg.mxu0
        %v2456 = vand.u32 %v390, 4294901760
        %v2457 = vsub.f32 %v390, %v2456
        %v2458 = vand.u32 %v2457, 4294901760
        %v2459 = vsub.f32 %v2457, %v2458
        %v2460 = vand.u32 %v2459, 4294901760
        %2461 = vmatprep.subr.mxu0 %v2460
        %v2462 = vand.u32 %v389, 4294901760
        %v2463 = vsub.f32 %v389, %v2462
        %v2464 = vand.u32 %v2463, 4294901760
        %v2465 = vsub.f32 %v2463, %v2464
        %v2466 = vand.u32 %v2465, 4294901760
        %2467 = vmatpush1.msra.mxu0 %v2466
        %v2468 = vand.u32 %v394, 4294901760
        %v2469 = vsub.f32 %v394, %v2468
        %v2470 = vand.u32 %v2469, 4294901760
        %v2471 = vsub.f32 %v2469, %v2470
        %v2472 = vand.u32 %v2471, 4294901760
        %2473 = vmatprep.subr.mxu0 %v2472
        %v2474 = vand.u32 %v393, 4294901760
        %v2475 = vsub.f32 %v393, %v2474
        %v2476 = vand.u32 %v2475, 4294901760
        %v2477 = vsub.f32 %v2475, %v2476
        %v2478 = vand.u32 %v2477, 4294901760
        %2479 = vmatpush1.msra.mxu0 %v2478
        %2480 = vmatprep.subr.mxu0 0.0
        %2481 = vmatpush1.msra.mxu0 0.0
        %2482 = vmatprep.subr.mxu0 0.0
        %2483 = vmatpush1.msra.mxu0 0.0
        %2484 = vmatprep.subr.mxu0 0.0
        %2485 = vmatpush1.msra.mxu0 0.0
        %2486 = vmatprep.subr.mxu0 0.0
        %2487 = vmatpush1.msra.mxu0 0.0
        %2488 = vmatprep.subr.mxu0 0.0
        %2489 = vmatpush1.msra.mxu0 0.0
        %2490 = vmatprep.subr.mxu0 0.0
        %2491 = vmatpush1.msra.mxu0 0.0
        %2492 = vmatprep.subr.mxu0 0.0
        %2493 = vmatpush1.msra.mxu0 0.0
        %2494 = vmatprep.subr.mxu0 0.0
        %2495 = vmatpush1.msra.mxu0 0.0
        %2496 = vmatprep.subr.mxu0 0.0
        %2497 = vmatpush1.msra.mxu0 0.0
        %2498 = vmatprep.subr.mxu0 0.0
        %2499 = vmatpush1.msra.mxu0 0.0
        %2500 = vmatprep.subr.mxu0 0.0
        %2501 = vmatpush1.msra.mxu0 0.0
        %2502 = vmatprep.subr.mxu0 0.0
        %2503 = vmatpush1.msra.mxu0 0.0
        %2504 = vmatprep.subr.mxu0 0.0
        %2505 = vmatpush1.msra.mxu0 0.0
        %2506 = vmatprep.subr.mxu0 0.0
        %2507 = vmatpush1.msra.mxu0 0.0
        %2508 = vmatprep.subr.mxu0 0.0
        %2509 = vmatpush1.msra.mxu0 0.0
        %2510 = vmatprep.subr.mxu0 0.0
        %2511 = vmatpush1.msra.mxu0 0.0
        %2512 = vmatprep.subr.mxu0 0.0
        %2513 = vmatpush1.msra.mxu0 0.0
        %2514 = vmatprep.subr.mxu0 0.0
        %2515 = vmatpush1.msra.mxu0 0.0
        %2516 = vmatprep.subr.mxu0 0.0
        %2517 = vmatpush1.msra.mxu0 0.0
        %2518 = vmatprep.subr.mxu0 0.0
        %2519 = vmatpush1.msra.mxu0 0.0
        %2520 = vmatprep.subr.mxu0 0.0
        %2521 = vmatpush1.msra.mxu0 0.0
        %2522 = vmatprep.subr.mxu0 0.0
        %2523 = vmatpush1.msra.mxu0 0.0
        %2524 = vmatprep.subr.mxu0 0.0
        %2525 = vmatpush1.msra.mxu0 0.0
        %2526 = vmatprep.subr.mxu0 0.0
        %2527 = vmatpush1.msra.mxu0 0.0
        %2528 = vmatprep.subr.mxu0 0.0
        %2529 = vmatpush1.msra.mxu0 0.0
        %2530 = vmatprep.subr.mxu0 0.0
        %2531 = vmatpush1.msra.mxu0 0.0
        %2532 = vmatprep.subr.mxu0 0.0
        %2533 = vmatpush1.msra.mxu0 0.0
        %2534 = vmatprep.subr.mxu0 0.0
        %2535 = vmatpush1.msra.mxu0 0.0
        %2536 = vmatprep.subr.mxu0 0.0
        %2537 = vmatpush1.msra.mxu0 0.0
        %2538 = vmatprep.subr.mxu0 0.0
        %2539 = vmatpush1.msra.mxu0 0.0
        %2540 = vmatprep.mubr.f32.mxu0 0.0
        %v2541 = vand.u32 %v2374, 4294901760
        %2542 = vmatmul.mubr.f32.gmra.mrb[0].mxu0 %v2541
        %v2543 = vpop.f32.mrb[0].mxu0
        %v2544 = vadd.f32 %v2452, %v2543
        %v2545 = vpop.f32.mrb[0].mxu0
        %v2546 = vadd.f32 %v2454, %v2545
        %2547 = vdwg.mxu0
        %v2548 = vand.u32 %v390, 4294901760
        %v2549 = vsub.f32 %v390, %v2548
        %2550 = vmatprep.subr.mxu0 %v2549
        %v2551 = vand.u32 %v389, 4294901760
        %v2552 = vsub.f32 %v389, %v2551
        %2553 = vmatpush1.msra.mxu0 %v2552
        %v2554 = vand.u32 %v394, 4294901760
        %v2555 = vsub.f32 %v394, %v2554
        %2556 = vmatprep.subr.mxu0 %v2555
        %v2557 = vand.u32 %v393, 4294901760
        %v2558 = vsub.f32 %v393, %v2557
        %2559 = vmatpush1.msra.mxu0 %v2558
        %2560 = vmatprep.subr.mxu0 0.0
        %2561 = vmatpush1.msra.mxu0 0.0
        %2562 = vmatprep.subr.mxu0 0.0
        %2563 = vmatpush1.msra.mxu0 0.0
        %2564 = vmatprep.subr.mxu0 0.0
        %2565 = vmatpush1.msra.mxu0 0.0
        %2566 = vmatprep.subr.mxu0 0.0
        %2567 = vmatpush1.msra.mxu0 0.0
        %2568 = vmatprep.subr.mxu0 0.0
        %2569 = vmatpush1.msra.mxu0 0.0
        %2570 = vmatprep.subr.mxu0 0.0
        %2571 = vmatpush1.msra.mxu0 0.0
        %2572 = vmatprep.subr.mxu0 0.0
        %2573 = vmatpush1.msra.mxu0 0.0
        %2574 = vmatprep.subr.mxu0 0.0
        %2575 = vmatpush1.msra.mxu0 0.0
        %2576 = vmatprep.subr.mxu0 0.0
        %2577 = vmatpush1.msra.mxu0 0.0
        %2578 = vmatprep.subr.mxu0 0.0
        %2579 = vmatpush1.msra.mxu0 0.0
        %2580 = vmatprep.subr.mxu0 0.0
        %2581 = vmatpush1.msra.mxu0 0.0
        %2582 = vmatprep.subr.mxu0 0.0
        %2583 = vmatpush1.msra.mxu0 0.0
        %2584 = vmatprep.subr.mxu0 0.0
        %2585 = vmatpush1.msra.mxu0 0.0
        %2586 = vmatprep.subr.mxu0 0.0
        %2587 = vmatpush1.msra.mxu0 0.0
        %2588 = vmatprep.subr.mxu0 0.0
        %2589 = vmatpush1.msra.mxu0 0.0
        %2590 = vmatprep.subr.mxu0 0.0
        %2591 = vmatpush1.msra.mxu0 0.0
        %2592 = vmatprep.subr.mxu0 0.0
        %2593 = vmatpush1.msra.mxu0 0.0
        %2594 = vmatprep.subr.mxu0 0.0
        %2595 = vmatpush1.msra.mxu0 0.0
        %2596 = vmatprep.subr.mxu0 0.0
        %2597 = vmatpush1.msra.mxu0 0.0
        %2598 = vmatprep.subr.mxu0 0.0
        %2599 = vmatpush1.msra.mxu0 0.0
        %2600 = vmatprep.subr.mxu0 0.0
        %2601 = vmatpush1.msra.mxu0 0.0
        %2602 = vmatprep.subr.mxu0 0.0
        %2603 = vmatpush1.msra.mxu0 0.0
        %2604 = vmatprep.subr.mxu0 0.0
        %2605 = vmatpush1.msra.mxu0 0.0
        %2606 = vmatprep.subr.mxu0 0.0
        %2607 = vmatpush1.msra.mxu0 0.0
        %2608 = vmatprep.subr.mxu0 0.0
        %2609 = vmatpush1.msra.mxu0 0.0
        %2610 = vmatprep.subr.mxu0 0.0
        %2611 = vmatpush1.msra.mxu0 0.0
        %2612 = vmatprep.subr.mxu0 0.0
        %2613 = vmatpush1.msra.mxu0 0.0
        %2614 = vmatprep.subr.mxu0 0.0
        %2615 = vmatpush1.msra.mxu0 0.0
        %2616 = vmatprep.subr.mxu0 0.0
        %2617 = vmatpush1.msra.mxu0 0.0
        %2618 = vmatprep.subr.mxu0 0.0
        %2619 = vmatpush1.msra.mxu0 0.0
        %2620 = vmatprep.mubr.f32.mxu0 0.0
        %v2621 = vand.u32 %v2374, 4294901760
        %v2622 = vsub.f32 %v2374, %v2621
        %2623 = vmatmul.mubr.f32.gmra.mrb[0].mxu0 %v2622
        %v2624 = vpop.f32.mrb[0].mxu0
        %v2625 = vadd.f32 %v2544, %v2624
        %v2626 = vpop.f32.mrb[0].mxu0
        %v2627 = vadd.f32 %v2546, %v2626
        %2628 = vdwg.mxu0
        %v2629 = vand.u32 %v390, 4294901760
        %2630 = vmatprep.subr.mxu0 %v2629
        %v2631 = vand.u32 %v389, 4294901760
        %2632 = vmatpush1.msra.mxu0 %v2631
        %v2633 = vand.u32 %v394, 4294901760
        %2634 = vmatprep.subr.mxu0 %v2633
        %v2635 = vand.u32 %v393, 4294901760
        %2636 = vmatpush1.msra.mxu0 %v2635
        %2637 = vmatprep.subr.mxu0 0.0
        %2638 = vmatpush1.msra.mxu0 0.0
        %2639 = vmatprep.subr.mxu0 0.0
        %2640 = vmatpush1.msra.mxu0 0.0
        %2641 = vmatprep.subr.mxu0 0.0
        %2642 = vmatpush1.msra.mxu0 0.0
        %2643 = vmatprep.subr.mxu0 0.0
        %2644 = vmatpush1.msra.mxu0 0.0
        %2645 = vmatprep.subr.mxu0 0.0
        %2646 = vmatpush1.msra.mxu0 0.0
        %2647 = vmatprep.subr.mxu0 0.0
        %2648 = vmatpush1.msra.mxu0 0.0
        %2649 = vmatprep.subr.mxu0 0.0
        %2650 = vmatpush1.msra.mxu0 0.0
        %2651 = vmatprep.subr.mxu0 0.0
        %2652 = vmatpush1.msra.mxu0 0.0
        %2653 = vmatprep.subr.mxu0 0.0
        %2654 = vmatpush1.msra.mxu0 0.0
        %2655 = vmatprep.subr.mxu0 0.0
        %2656 = vmatpush1.msra.mxu0 0.0
        %2657 = vmatprep.subr.mxu0 0.0
        %2658 = vmatpush1.msra.mxu0 0.0
        %2659 = vmatprep.subr.mxu0 0.0
        %2660 = vmatpush1.msra.mxu0 0.0
        %2661 = vmatprep.subr.mxu0 0.0
        %2662 = vmatpush1.msra.mxu0 0.0
        %2663 = vmatprep.subr.mxu0 0.0
        %2664 = vmatpush1.msra.mxu0 0.0
        %2665 = vmatprep.subr.mxu0 0.0
        %2666 = vmatpush1.msra.mxu0 0.0
        %2667 = vmatprep.subr.mxu0 0.0
        %2668 = vmatpush1.msra.mxu0 0.0
        %2669 = vmatprep.subr.mxu0 0.0
        %2670 = vmatpush1.msra.mxu0 0.0
        %2671 = vmatprep.subr.mxu0 0.0
        %2672 = vmatpush1.msra.mxu0 0.0
        %2673 = vmatprep.subr.mxu0 0.0
        %2674 = vmatpush1.msra.mxu0 0.0
        %2675 = vmatprep.subr.mxu0 0.0
        %2676 = vmatpush1.msra.mxu0 0.0
        %2677 = vmatprep.subr.mxu0 0.0
        %2678 = vmatpush1.msra.mxu0 0.0
        %2679 = vmatprep.subr.mxu0 0.0
        %2680 = vmatpush1.msra.mxu0 0.0
        %2681 = vmatprep.subr.mxu0 0.0
        %2682 = vmatpush1.msra.mxu0 0.0
        %2683 = vmatprep.subr.mxu0 0.0
        %2684 = vmatpush1.msra.mxu0 0.0
        %2685 = vmatprep.subr.mxu0 0.0
        %2686 = vmatpush1.msra.mxu0 0.0
        %2687 = vmatprep.subr.mxu0 0.0
        %2688 = vmatpush1.msra.mxu0 0.0
        %2689 = vmatprep.subr.mxu0 0.0
        %2690 = vmatpush1.msra.mxu0 0.0
        %2691 = vmatprep.subr.mxu0 0.0
        %2692 = vmatpush1.msra.mxu0 0.0
        %2693 = vmatprep.subr.mxu0 0.0
        %2694 = vmatpush1.msra.mxu0 0.0
        %2695 = vmatprep.subr.mxu0 0.0
        %2696 = vmatpush1.msra.mxu0 0.0
        %2697 = vmatprep.mubr.f32.mxu0 0.0
        %v2698 = vand.u32 %v2374, 4294901760
        %v2699 = vsub.f32 %v2374, %v2698
        %v2700 = vand.u32 %v2699, 4294901760
        %2701 = vmatmul.mubr.f32.gmra.mrb[0].mxu0 %v2700
        %v2702 = vpop.f32.mrb[0].mxu0
        %v2703 = vadd.f32 %v2625, %v2702
        %v2704 = vpop.f32.mrb[0].mxu0
        %v2705 = vadd.f32 %v2627, %v2704
        %2706 = vdwg.mxu0
        %v2707 = vand.u32 %v390, 4294901760
        %v2708 = vsub.f32 %v390, %v2707
        %v2709 = vand.u32 %v2708, 4294901760
        %2710 = vmatprep.subr.mxu0 %v2709
        %v2711 = vand.u32 %v389, 4294901760
        %v2712 = vsub.f32 %v389, %v2711
        %v2713 = vand.u32 %v2712, 4294901760
        %2714 = vmatpush1.msra.mxu0 %v2713
        %v2715 = vand.u32 %v394, 4294901760
        %v2716 = vsub.f32 %v394, %v2715
        %v2717 = vand.u32 %v2716, 4294901760
        %2718 = vmatprep.subr.mxu0 %v2717
        %v2719 = vand.u32 %v393, 4294901760
        %v2720 = vsub.f32 %v393, %v2719
        %v2721 = vand.u32 %v2720, 4294901760
        %2722 = vmatpush1.msra.mxu0 %v2721
        %2723 = vmatprep.subr.mxu0 0.0
        %2724 = vmatpush1.msra.mxu0 0.0
        %2725 = vmatprep.subr.mxu0 0.0
        %2726 = vmatpush1.msra.mxu0 0.0
        %2727 = vmatprep.subr.mxu0 0.0
        %2728 = vmatpush1.msra.mxu0 0.0
        %2729 = vmatprep.subr.mxu0 0.0
        %2730 = vmatpush1.msra.mxu0 0.0
        %2731 = vmatprep.subr.mxu0 0.0
        %2732 = vmatpush1.msra.mxu0 0.0
        %2733 = vmatprep.subr.mxu0 0.0
        %2734 = vmatpush1.msra.mxu0 0.0
        %2735 = vmatprep.subr.mxu0 0.0
        %2736 = vmatpush1.msra.mxu0 0.0
        %2737 = vmatprep.subr.mxu0 0.0
        %2738 = vmatpush1.msra.mxu0 0.0
        %2739 = vmatprep.subr.mxu0 0.0
        %2740 = vmatpush1.msra.mxu0 0.0
        %2741 = vmatprep.subr.mxu0 0.0
        %2742 = vmatpush1.msra.mxu0 0.0
        %2743 = vmatprep.subr.mxu0 0.0
        %2744 = vmatpush1.msra.mxu0 0.0
        %2745 = vmatprep.subr.mxu0 0.0
        %2746 = vmatpush1.msra.mxu0 0.0
        %2747 = vmatprep.subr.mxu0 0.0
        %2748 = vmatpush1.msra.mxu0 0.0
        %2749 = vmatprep.subr.mxu0 0.0
        %2750 = vmatpush1.msra.mxu0 0.0
        %2751 = vmatprep.subr.mxu0 0.0
        %2752 = vmatpush1.msra.mxu0 0.0
        %2753 = vmatprep.subr.mxu0 0.0
        %2754 = vmatpush1.msra.mxu0 0.0
        %2755 = vmatprep.subr.mxu0 0.0
        %2756 = vmatpush1.msra.mxu0 0.0
        %2757 = vmatprep.subr.mxu0 0.0
        %2758 = vmatpush1.msra.mxu0 0.0
        %2759 = vmatprep.subr.mxu0 0.0
        %2760 = vmatpush1.msra.mxu0 0.0
        %2761 = vmatprep.subr.mxu0 0.0
        %2762 = vmatpush1.msra.mxu0 0.0
        %2763 = vmatprep.subr.mxu0 0.0
        %2764 = vmatpush1.msra.mxu0 0.0
        %2765 = vmatprep.subr.mxu0 0.0
        %2766 = vmatpush1.msra.mxu0 0.0
        %2767 = vmatprep.subr.mxu0 0.0
        %2768 = vmatpush1.msra.mxu0 0.0
        %2769 = vmatprep.subr.mxu0 0.0
        %2770 = vmatpush1.msra.mxu0 0.0
        %2771 = vmatprep.subr.mxu0 0.0
        %2772 = vmatpush1.msra.mxu0 0.0
        %2773 = vmatprep.subr.mxu0 0.0
        %2774 = vmatpush1.msra.mxu0 0.0
        %2775 = vmatprep.subr.mxu0 0.0
        %2776 = vmatpush1.msra.mxu0 0.0
        %2777 = vmatprep.subr.mxu0 0.0
        %2778 = vmatpush1.msra.mxu0 0.0
        %2779 = vmatprep.subr.mxu0 0.0
        %2780 = vmatpush1.msra.mxu0 0.0
        %2781 = vmatprep.subr.mxu0 0.0
        %2782 = vmatpush1.msra.mxu0 0.0
        %2783 = vmatprep.mubr.f32.mxu0 0.0
        %v2784 = vand.u32 %v2374, 4294901760
        %2785 = vmatmul.mubr.f32.gmra.mrb[0].mxu0 %v2784
        %v2786 = vpop.f32.mrb[0].mxu0
        %v2787 = vadd.f32 %v2703, %v2786
        %v2788 = vpop.f32.mrb[0].mxu0
        %v2789 = vadd.f32 %v2705, %v2788
        %2790 = vdwg.mxu0
        %v2791 = vand.u32 %v390, 4294901760
        %2792 = vmatprep.subr.mxu0 %v2791
        %v2793 = vand.u32 %v389, 4294901760
        %2794 = vmatpush1.msra.mxu0 %v2793
        %v2795 = vand.u32 %v394, 4294901760
        %2796 = vmatprep.subr.mxu0 %v2795
        %v2797 = vand.u32 %v393, 4294901760
        %2798 = vmatpush1.msra.mxu0 %v2797
        %2799 = vmatprep.subr.mxu0 0.0
        %2800 = vmatpush1.msra.mxu0 0.0
        %2801 = vmatprep.subr.mxu0 0.0
        %2802 = vmatpush1.msra.mxu0 0.0
        %2803 = vmatprep.subr.mxu0 0.0
        %2804 = vmatpush1.msra.mxu0 0.0
        %2805 = vmatprep.subr.mxu0 0.0
        %2806 = vmatpush1.msra.mxu0 0.0
        %2807 = vmatprep.subr.mxu0 0.0
        %2808 = vmatpush1.msra.mxu0 0.0
        %2809 = vmatprep.subr.mxu0 0.0
        %2810 = vmatpush1.msra.mxu0 0.0
        %2811 = vmatprep.subr.mxu0 0.0
        %2812 = vmatpush1.msra.mxu0 0.0
        %2813 = vmatprep.subr.mxu0 0.0
        %2814 = vmatpush1.msra.mxu0 0.0
        %2815 = vmatprep.subr.mxu0 0.0
        %2816 = vmatpush1.msra.mxu0 0.0
        %2817 = vmatprep.subr.mxu0 0.0
        %2818 = vmatpush1.msra.mxu0 0.0
        %2819 = vmatprep.subr.mxu0 0.0
        %2820 = vmatpush1.msra.mxu0 0.0
        %2821 = vmatprep.subr.mxu0 0.0
        %2822 = vmatpush1.msra.mxu0 0.0
        %2823 = vmatprep.subr.mxu0 0.0
        %2824 = vmatpush1.msra.mxu0 0.0
        %2825 = vmatprep.subr.mxu0 0.0
        %2826 = vmatpush1.msra.mxu0 0.0
        %2827 = vmatprep.subr.mxu0 0.0
        %2828 = vmatpush1.msra.mxu0 0.0
        %2829 = vmatprep.subr.mxu0 0.0
        %2830 = vmatpush1.msra.mxu0 0.0
        %2831 = vmatprep.subr.mxu0 0.0
        %2832 = vmatpush1.msra.mxu0 0.0
        %2833 = vmatprep.subr.mxu0 0.0
        %2834 = vmatpush1.msra.mxu0 0.0
        %2835 = vmatprep.subr.mxu0 0.0
        %2836 = vmatpush1.msra.mxu0 0.0
        %2837 = vmatprep.subr.mxu0 0.0
        %2838 = vmatpush1.msra.mxu0 0.0
        %2839 = vmatprep.subr.mxu0 0.0
        %2840 = vmatpush1.msra.mxu0 0.0
        %2841 = vmatprep.subr.mxu0 0.0
        %2842 = vmatpush1.msra.mxu0 0.0
        %2843 = vmatprep.subr.mxu0 0.0
        %2844 = vmatpush1.msra.mxu0 0.0
        %2845 = vmatprep.subr.mxu0 0.0
        %2846 = vmatpush1.msra.mxu0 0.0
        %2847 = vmatprep.subr.mxu0 0.0
        %2848 = vmatpush1.msra.mxu0 0.0
        %2849 = vmatprep.subr.mxu0 0.0
        %2850 = vmatpush1.msra.mxu0 0.0
        %2851 = vmatprep.subr.mxu0 0.0
        %2852 = vmatpush1.msra.mxu0 0.0
        %2853 = vmatprep.subr.mxu0 0.0
        %2854 = vmatpush1.msra.mxu0 0.0
        %2855 = vmatprep.subr.mxu0 0.0
        %2856 = vmatpush1.msra.mxu0 0.0
        %2857 = vmatprep.subr.mxu0 0.0
        %2858 = vmatpush1.msra.mxu0 0.0
        %2859 = vmatprep.mubr.f32.mxu0 0.0
        %v2860 = vand.u32 %v2374, 4294901760
        %2861 = vmatmul.mubr.f32.gmra.mrb[0].mxu0 %v2860
        %v2862 = vpop.f32.mrb[0].mxu0
        %v2863 = vadd.f32 %v2787, %v2862
        %v2864 = vpop.f32.mrb[0].mxu0
        %v2865 = vadd.f32 %v2789, %v2864
        %2866 = vdwg.mxu0
        %v2867 = vand.u32 %v392, 4294901760
        %2868 = vmatprep.subr.mxu0 %v2867
        %v2869 = vand.u32 %v391, 4294901760
        %2870 = vmatpush1.msra.mxu0 %v2869
        %v2871 = vand.u32 %v396, 4294901760
        %2872 = vmatprep.subr.mxu0 %v2871
        %v2873 = vand.u32 %v395, 4294901760
        %2874 = vmatpush1.msra.mxu0 %v2873
        %2875 = vmatprep.subr.mxu0 0.0
        %2876 = vmatpush1.msra.mxu0 0.0
        %2877 = vmatprep.subr.mxu0 0.0
        %2878 = vmatpush1.msra.mxu0 0.0
        %2879 = vmatprep.subr.mxu0 0.0
        %2880 = vmatpush1.msra.mxu0 0.0
        %2881 = vmatprep.subr.mxu0 0.0
        %2882 = vmatpush1.msra.mxu0 0.0
        %2883 = vmatprep.subr.mxu0 0.0
        %2884 = vmatpush1.msra.mxu0 0.0
        %2885 = vmatprep.subr.mxu0 0.0
        %2886 = vmatpush1.msra.mxu0 0.0
        %2887 = vmatprep.subr.mxu0 0.0
        %2888 = vmatpush1.msra.mxu0 0.0
        %2889 = vmatprep.subr.mxu0 0.0
        %2890 = vmatpush1.msra.mxu0 0.0
        %2891 = vmatprep.subr.mxu0 0.0
        %2892 = vmatpush1.msra.mxu0 0.0
        %2893 = vmatprep.subr.mxu0 0.0
        %2894 = vmatpush1.msra.mxu0 0.0
        %2895 = vmatprep.subr.mxu0 0.0
        %2896 = vmatpush1.msra.mxu0 0.0
        %2897 = vmatprep.subr.mxu0 0.0
        %2898 = vmatpush1.msra.mxu0 0.0
        %2899 = vmatprep.subr.mxu0 0.0
        %2900 = vmatpush1.msra.mxu0 0.0
        %2901 = vmatprep.subr.mxu0 0.0
        %2902 = vmatpush1.msra.mxu0 0.0
        %2903 = vmatprep.subr.mxu0 0.0
        %2904 = vmatpush1.msra.mxu0 0.0
        %2905 = vmatprep.subr.mxu0 0.0
        %2906 = vmatpush1.msra.mxu0 0.0
        %2907 = vmatprep.subr.mxu0 0.0
        %2908 = vmatpush1.msra.mxu0 0.0
        %2909 = vmatprep.subr.mxu0 0.0
        %2910 = vmatpush1.msra.mxu0 0.0
        %2911 = vmatprep.subr.mxu0 0.0
        %2912 = vmatpush1.msra.mxu0 0.0
        %2913 = vmatprep.subr.mxu0 0.0
        %2914 = vmatpush1.msra.mxu0 0.0
        %2915 = vmatprep.subr.mxu0 0.0
        %2916 = vmatpush1.msra.mxu0 0.0
        %2917 = vmatprep.subr.mxu0 0.0
        %2918 = vmatpush1.msra.mxu0 0.0
        %2919 = vmatprep.subr.mxu0 0.0
        %2920 = vmatpush1.msra.mxu0 0.0
        %2921 = vmatprep.subr.mxu0 0.0
        %2922 = vmatpush1.msra.mxu0 0.0
        %2923 = vmatprep.subr.mxu0 0.0
        %2924 = vmatpush1.msra.mxu0 0.0
        %2925 = vmatprep.subr.mxu0 0.0
        %2926 = vmatpush1.msra.mxu0 0.0
        %2927 = vmatprep.subr.mxu0 0.0
        %2928 = vmatpush1.msra.mxu0 0.0
        %2929 = vmatprep.subr.mxu0 0.0
        %2930 = vmatpush1.msra.mxu0 0.0
        %2931 = vmatprep.subr.mxu0 0.0
        %2932 = vmatpush1.msra.mxu0 0.0
        %2933 = vmatprep.subr.mxu0 0.0
        %2934 = vmatpush1.msra.mxu0 0.0
        %2935 = vmatprep.mubr.f32.mxu0 0.0
        %v2936 = vand.u32 %v2374, 4294901760
        %v2937 = vsub.f32 %v2374, %v2936
        %v2938 = vand.u32 %v2937, 4294901760
        %v2939 = vsub.f32 %v2937, %v2938
        %v2940 = vand.u32 %v2939, 4294901760
        %2941 = vmatmul.mubr.f32.gmra.mrb[0].mxu0 %v2940
        %v2942 = vpop.f32.mrb[0].mxu0
        %v2943 = vadd.f32 0.0, %v2942
        %v2944 = vpop.f32.mrb[0].mxu0
        %v2945 = vadd.f32 0.0, %v2944
        %2946 = vdwg.mxu0
        %v2947 = vand.u32 %v392, 4294901760
        %v2948 = vsub.f32 %v392, %v2947
        %v2949 = vand.u32 %v2948, 4294901760
        %v2950 = vsub.f32 %v2948, %v2949
        %v2951 = vand.u32 %v2950, 4294901760
        %2952 = vmatprep.subr.mxu0 %v2951
        %v2953 = vand.u32 %v391, 4294901760
        %v2954 = vsub.f32 %v391, %v2953
        %v2955 = vand.u32 %v2954, 4294901760
        %v2956 = vsub.f32 %v2954, %v2955
        %v2957 = vand.u32 %v2956, 4294901760
        %2958 = vmatpush1.msra.mxu0 %v2957
        %v2959 = vand.u32 %v396, 4294901760
        %v2960 = vsub.f32 %v396, %v2959
        %v2961 = vand.u32 %v2960, 4294901760
        %v2962 = vsub.f32 %v2960, %v2961
        %v2963 = vand.u32 %v2962, 4294901760
        %2964 = vmatprep.subr.mxu0 %v2963
        %v2965 = vand.u32 %v395, 4294901760
        %v2966 = vsub.f32 %v395, %v2965
        %v2967 = vand.u32 %v2966, 4294901760
        %v2968 = vsub.f32 %v2966, %v2967
        %v2969 = vand.u32 %v2968, 4294901760
        %2970 = vmatpush1.msra.mxu0 %v2969
        %2971 = vmatprep.subr.mxu0 0.0
        %2972 = vmatpush1.msra.mxu0 0.0
        %2973 = vmatprep.subr.mxu0 0.0
        %2974 = vmatpush1.msra.mxu0 0.0
        %2975 = vmatprep.subr.mxu0 0.0
        %2976 = vmatpush1.msra.mxu0 0.0
        %2977 = vmatprep.subr.mxu0 0.0
        %2978 = vmatpush1.msra.mxu0 0.0
        %2979 = vmatprep.subr.mxu0 0.0
        %2980 = vmatpush1.msra.mxu0 0.0
        %2981 = vmatprep.subr.mxu0 0.0
        %2982 = vmatpush1.msra.mxu0 0.0
        %2983 = vmatprep.subr.mxu0 0.0
        %2984 = vmatpush1.msra.mxu0 0.0
        %2985 = vmatprep.subr.mxu0 0.0
        %2986 = vmatpush1.msra.mxu0 0.0
        %2987 = vmatprep.subr.mxu0 0.0
        %2988 = vmatpush1.msra.mxu0 0.0
        %2989 = vmatprep.subr.mxu0 0.0
        %2990 = vmatpush1.msra.mxu0 0.0
        %2991 = vmatprep.subr.mxu0 0.0
        %2992 = vmatpush1.msra.mxu0 0.0
        %2993 = vmatprep.subr.mxu0 0.0
        %2994 = vmatpush1.msra.mxu0 0.0
        %2995 = vmatprep.subr.mxu0 0.0
        %2996 = vmatpush1.msra.mxu0 0.0
        %2997 = vmatprep.subr.mxu0 0.0
        %2998 = vmatpush1.msra.mxu0 0.0
        %2999 = vmatprep.subr.mxu0 0.0
        %3000 = vmatpush1.msra.mxu0 0.0
        %3001 = vmatprep.subr.mxu0 0.0
        %3002 = vmatpush1.msra.mxu0 0.0
        %3003 = vmatprep.subr.mxu0 0.0
        %3004 = vmatpush1.msra.mxu0 0.0
        %3005 = vmatprep.subr.mxu0 0.0
        %3006 = vmatpush1.msra.mxu0 0.0
        %3007 = vmatprep.subr.mxu0 0.0
        %3008 = vmatpush1.msra.mxu0 0.0
        %3009 = vmatprep.subr.mxu0 0.0
        %3010 = vmatpush1.msra.mxu0 0.0
        %3011 = vmatprep.subr.mxu0 0.0
        %3012 = vmatpush1.msra.mxu0 0.0
        %3013 = vmatprep.subr.mxu0 0.0
        %3014 = vmatpush1.msra.mxu0 0.0
        %3015 = vmatprep.subr.mxu0 0.0
        %3016 = vmatpush1.msra.mxu0 0.0
        %3017 = vmatprep.subr.mxu0 0.0
        %3018 = vmatpush1.msra.mxu0 0.0
        %3019 = vmatprep.subr.mxu0 0.0
        %3020 = vmatpush1.msra.mxu0 0.0
        %3021 = vmatprep.subr.mxu0 0.0
        %3022 = vmatpush1.msra.mxu0 0.0
        %3023 = vmatprep.subr.mxu0 0.0
        %3024 = vmatpush1.msra.mxu0 0.0
        %3025 = vmatprep.subr.mxu0 0.0
        %3026 = vmatpush1.msra.mxu0 0.0
        %3027 = vmatprep.subr.mxu0 0.0
        %3028 = vmatpush1.msra.mxu0 0.0
        %3029 = vmatprep.subr.mxu0 0.0
        %3030 = vmatpush1.msra.mxu0 0.0
        %3031 = vmatprep.mubr.f32.mxu0 0.0
        %v3032 = vand.u32 %v2374, 4294901760
        %3033 = vmatmul.mubr.f32.gmra.mrb[0].mxu0 %v3032
        %v3034 = vpop.f32.mrb[0].mxu0
        %v3035 = vadd.f32 %v2943, %v3034
        %v3036 = vpop.f32.mrb[0].mxu0
        %v3037 = vadd.f32 %v2945, %v3036
        %3038 = vdwg.mxu0
        %v3039 = vand.u32 %v392, 4294901760
        %v3040 = vsub.f32 %v392, %v3039
        %3041 = vmatprep.subr.mxu0 %v3040
        %v3042 = vand.u32 %v391, 4294901760
        %v3043 = vsub.f32 %v391, %v3042
        %3044 = vmatpush1.msra.mxu0 %v3043
        %v3045 = vand.u32 %v396, 4294901760
        %v3046 = vsub.f32 %v396, %v3045
        %3047 = vmatprep.subr.mxu0 %v3046
        %v3048 = vand.u32 %v395, 4294901760
        %v3049 = vsub.f32 %v395, %v3048
        %3050 = vmatpush1.msra.mxu0 %v3049
        %3051 = vmatprep.subr.mxu0 0.0
        %3052 = vmatpush1.msra.mxu0 0.0
        %3053 = vmatprep.subr.mxu0 0.0
        %3054 = vmatpush1.msra.mxu0 0.0
        %3055 = vmatprep.subr.mxu0 0.0
        %3056 = vmatpush1.msra.mxu0 0.0
        %3057 = vmatprep.subr.mxu0 0.0
        %3058 = vmatpush1.msra.mxu0 0.0
        %3059 = vmatprep.subr.mxu0 0.0
        %3060 = vmatpush1.msra.mxu0 0.0
        %3061 = vmatprep.subr.mxu0 0.0
        %3062 = vmatpush1.msra.mxu0 0.0
        %3063 = vmatprep.subr.mxu0 0.0
        %3064 = vmatpush1.msra.mxu0 0.0
        %3065 = vmatprep.subr.mxu0 0.0
        %3066 = vmatpush1.msra.mxu0 0.0
        %3067 = vmatprep.subr.mxu0 0.0
        %3068 = vmatpush1.msra.mxu0 0.0
        %3069 = vmatprep.subr.mxu0 0.0
        %3070 = vmatpush1.msra.mxu0 0.0
        %3071 = vmatprep.subr.mxu0 0.0
        %3072 = vmatpush1.msra.mxu0 0.0
        %3073 = vmatprep.subr.mxu0 0.0
        %3074 = vmatpush1.msra.mxu0 0.0
        %3075 = vmatprep.subr.mxu0 0.0
        %3076 = vmatpush1.msra.mxu0 0.0
        %3077 = vmatprep.subr.mxu0 0.0
        %3078 = vmatpush1.msra.mxu0 0.0
        %3079 = vmatprep.subr.mxu0 0.0
        %3080 = vmatpush1.msra.mxu0 0.0
        %3081 = vmatprep.subr.mxu0 0.0
        %3082 = vmatpush1.msra.mxu0 0.0
        %3083 = vmatprep.subr.mxu0 0.0
        %3084 = vmatpush1.msra.mxu0 0.0
        %3085 = vmatprep.subr.mxu0 0.0
        %3086 = vmatpush1.msra.mxu0 0.0
        %3087 = vmatprep.subr.mxu0 0.0
        %3088 = vmatpush1.msra.mxu0 0.0
        %3089 = vmatprep.subr.mxu0 0.0
        %3090 = vmatpush1.msra.mxu0 0.0
        %3091 = vmatprep.subr.mxu0 0.0
        %3092 = vmatpush1.msra.mxu0 0.0
        %3093 = vmatprep.subr.mxu0 0.0
        %3094 = vmatpush1.msra.mxu0 0.0
        %3095 = vmatprep.subr.mxu0 0.0
        %3096 = vmatpush1.msra.mxu0 0.0
        %3097 = vmatprep.subr.mxu0 0.0
        %3098 = vmatpush1.msra.mxu0 0.0
        %3099 = vmatprep.subr.mxu0 0.0
        %3100 = vmatpush1.msra.mxu0 0.0
        %3101 = vmatprep.subr.mxu0 0.0
        %3102 = vmatpush1.msra.mxu0 0.0
        %3103 = vmatprep.subr.mxu0 0.0
        %3104 = vmatpush1.msra.mxu0 0.0
        %3105 = vmatprep.subr.mxu0 0.0
        %3106 = vmatpush1.msra.mxu0 0.0
        %3107 = vmatprep.subr.mxu0 0.0
        %3108 = vmatpush1.msra.mxu0 0.0
        %3109 = vmatprep.subr.mxu0 0.0
        %3110 = vmatpush1.msra.mxu0 0.0
        %3111 = vmatprep.mubr.f32.mxu0 0.0
        %v3112 = vand.u32 %v2374, 4294901760
        %v3113 = vsub.f32 %v2374, %v3112
        %3114 = vmatmul.mubr.f32.gmra.mrb[0].mxu0 %v3113
        %v3115 = vpop.f32.mrb[0].mxu0
        %v3116 = vadd.f32 %v3035, %v3115
        %v3117 = vpop.f32.mrb[0].mxu0
        %v3118 = vadd.f32 %v3037, %v3117
        %3119 = vdwg.mxu0
        %v3120 = vand.u32 %v392, 4294901760
        %3121 = vmatprep.subr.mxu0 %v3120
        %v3122 = vand.u32 %v391, 4294901760
        %3123 = vmatpush1.msra.mxu0 %v3122
        %v3124 = vand.u32 %v396, 4294901760
        %3125 = vmatprep.subr.mxu0 %v3124
        %v3126 = vand.u32 %v395, 4294901760
        %3127 = vmatpush1.msra.mxu0 %v3126
        %3128 = vmatprep.subr.mxu0 0.0
        %3129 = vmatpush1.msra.mxu0 0.0
        %3130 = vmatprep.subr.mxu0 0.0
        %3131 = vmatpush1.msra.mxu0 0.0
        %3132 = vmatprep.subr.mxu0 0.0
        %3133 = vmatpush1.msra.mxu0 0.0
        %3134 = vmatprep.subr.mxu0 0.0
        %3135 = vmatpush1.msra.mxu0 0.0
        %3136 = vmatprep.subr.mxu0 0.0
        %3137 = vmatpush1.msra.mxu0 0.0
        %3138 = vmatprep.subr.mxu0 0.0
        %3139 = vmatpush1.msra.mxu0 0.0
        %3140 = vmatprep.subr.mxu0 0.0
        %3141 = vmatpush1.msra.mxu0 0.0
        %3142 = vmatprep.subr.mxu0 0.0
        %3143 = vmatpush1.msra.mxu0 0.0
        %3144 = vmatprep.subr.mxu0 0.0
        %3145 = vmatpush1.msra.mxu0 0.0
        %3146 = vmatprep.subr.mxu0 0.0
        %3147 = vmatpush1.msra.mxu0 0.0
        %3148 = vmatprep.subr.mxu0 0.0
        %3149 = vmatpush1.msra.mxu0 0.0
        %3150 = vmatprep.subr.mxu0 0.0
        %3151 = vmatpush1.msra.mxu0 0.0
        %3152 = vmatprep.subr.mxu0 0.0
        %3153 = vmatpush1.msra.mxu0 0.0
        %3154 = vmatprep.subr.mxu0 0.0
        %3155 = vmatpush1.msra.mxu0 0.0
        %3156 = vmatprep.subr.mxu0 0.0
        %3157 = vmatpush1.msra.mxu0 0.0
        %3158 = vmatprep.subr.mxu0 0.0
        %3159 = vmatpush1.msra.mxu0 0.0
        %3160 = vmatprep.subr.mxu0 0.0
        %3161 = vmatpush1.msra.mxu0 0.0
        %3162 = vmatprep.subr.mxu0 0.0
        %3163 = vmatpush1.msra.mxu0 0.0
        %3164 = vmatprep.subr.mxu0 0.0
        %3165 = vmatpush1.msra.mxu0 0.0
        %3166 = vmatprep.subr.mxu0 0.0
        %3167 = vmatpush1.msra.mxu0 0.0
        %3168 = vmatprep.subr.mxu0 0.0
        %3169 = vmatpush1.msra.mxu0 0.0
        %3170 = vmatprep.subr.mxu0 0.0
        %3171 = vmatpush1.msra.mxu0 0.0
        %3172 = vmatprep.subr.mxu0 0.0
        %3173 = vmatpush1.msra.mxu0 0.0
        %3174 = vmatprep.subr.mxu0 0.0
        %3175 = vmatpush1.msra.mxu0 0.0
        %3176 = vmatprep.subr.mxu0 0.0
        %3177 = vmatpush1.msra.mxu0 0.0
        %3178 = vmatprep.subr.mxu0 0.0
        %3179 = vmatpush1.msra.mxu0 0.0
        %3180 = vmatprep.subr.mxu0 0.0
        %3181 = vmatpush1.msra.mxu0 0.0
        %3182 = vmatprep.subr.mxu0 0.0
        %3183 = vmatpush1.msra.mxu0 0.0
        %3184 = vmatprep.subr.mxu0 0.0
        %3185 = vmatpush1.msra.mxu0 0.0
        %3186 = vmatprep.subr.mxu0 0.0
        %3187 = vmatpush1.msra.mxu0 0.0
        %3188 = vmatprep.mubr.f32.mxu0 0.0
        %v3189 = vand.u32 %v2374, 4294901760
        %v3190 = vsub.f32 %v2374, %v3189
        %v3191 = vand.u32 %v3190, 4294901760
        %3192 = vmatmul.mubr.f32.gmra.mrb[0].mxu0 %v3191
        %v3193 = vpop.f32.mrb[0].mxu0
        %v3194 = vadd.f32 %v3116, %v3193
        %v3195 = vpop.f32.mrb[0].mxu0
        %v3196 = vadd.f32 %v3118, %v3195
        %3197 = vdwg.mxu0
        %v3198 = vand.u32 %v392, 4294901760
        %v3199 = vsub.f32 %v392, %v3198
        %v3200 = vand.u32 %v3199, 4294901760
        %3201 = vmatprep.subr.mxu0 %v3200
        %v3202 = vand.u32 %v391, 4294901760
        %v3203 = vsub.f32 %v391, %v3202
        %v3204 = vand.u32 %v3203, 4294901760
        %3205 = vmatpush1.msra.mxu0 %v3204
        %v3206 = vand.u32 %v396, 4294901760
        %v3207 = vsub.f32 %v396, %v3206
        %v3208 = vand.u32 %v3207, 4294901760
        %3209 = vmatprep.subr.mxu0 %v3208
        %v3210 = vand.u32 %v395, 4294901760
        %v3211 = vsub.f32 %v395, %v3210
        %v3212 = vand.u32 %v3211, 4294901760
        %3213 = vmatpush1.msra.mxu0 %v3212
        %3214 = vmatprep.subr.mxu0 0.0
        %3215 = vmatpush1.msra.mxu0 0.0
        %3216 = vmatprep.subr.mxu0 0.0
        %3217 = vmatpush1.msra.mxu0 0.0
        %3218 = vmatprep.subr.mxu0 0.0
        %3219 = vmatpush1.msra.mxu0 0.0
        %3220 = vmatprep.subr.mxu0 0.0
        %3221 = vmatpush1.msra.mxu0 0.0
        %3222 = vmatprep.subr.mxu0 0.0
        %3223 = vmatpush1.msra.mxu0 0.0
        %3224 = vmatprep.subr.mxu0 0.0
        %3225 = vmatpush1.msra.mxu0 0.0
        %3226 = vmatprep.subr.mxu0 0.0
        %3227 = vmatpush1.msra.mxu0 0.0
        %3228 = vmatprep.subr.mxu0 0.0
        %3229 = vmatpush1.msra.mxu0 0.0
        %3230 = vmatprep.subr.mxu0 0.0
        %3231 = vmatpush1.msra.mxu0 0.0
        %3232 = vmatprep.subr.mxu0 0.0
        %3233 = vmatpush1.msra.mxu0 0.0
        %3234 = vmatprep.subr.mxu0 0.0
        %3235 = vmatpush1.msra.mxu0 0.0
        %3236 = vmatprep.subr.mxu0 0.0
        %3237 = vmatpush1.msra.mxu0 0.0
        %3238 = vmatprep.subr.mxu0 0.0
        %3239 = vmatpush1.msra.mxu0 0.0
        %3240 = vmatprep.subr.mxu0 0.0
        %3241 = vmatpush1.msra.mxu0 0.0
        %3242 = vmatprep.subr.mxu0 0.0
        %3243 = vmatpush1.msra.mxu0 0.0
        %3244 = vmatprep.subr.mxu0 0.0
        %3245 = vmatpush1.msra.mxu0 0.0
        %3246 = vmatprep.subr.mxu0 0.0
        %3247 = vmatpush1.msra.mxu0 0.0
        %3248 = vmatprep.subr.mxu0 0.0
        %3249 = vmatpush1.msra.mxu0 0.0
        %3250 = vmatprep.subr.mxu0 0.0
        %3251 = vmatpush1.msra.mxu0 0.0
        %3252 = vmatprep.subr.mxu0 0.0
        %3253 = vmatpush1.msra.mxu0 0.0
        %3254 = vmatprep.subr.mxu0 0.0
        %3255 = vmatpush1.msra.mxu0 0.0
        %3256 = vmatprep.subr.mxu0 0.0
        %3257 = vmatpush1.msra.mxu0 0.0
        %3258 = vmatprep.subr.mxu0 0.0
        %3259 = vmatpush1.msra.mxu0 0.0
        %3260 = vmatprep.subr.mxu0 0.0
        %3261 = vmatpush1.msra.mxu0 0.0
        %3262 = vmatprep.subr.mxu0 0.0
        %3263 = vmatpush1.msra.mxu0 0.0
        %3264 = vmatprep.subr.mxu0 0.0
        %3265 = vmatpush1.msra.mxu0 0.0
        %3266 = vmatprep.subr.mxu0 0.0
        %3267 = vmatpush1.msra.mxu0 0.0
        %3268 = vmatprep.subr.mxu0 0.0
        %3269 = vmatpush1.msra.mxu0 0.0
        %3270 = vmatprep.subr.mxu0 0.0
        %3271 = vmatpush1.msra.mxu0 0.0
        %3272 = vmatprep.subr.mxu0 0.0
        %3273 = vmatpush1.msra.mxu0 0.0
        %3274 = vmatprep.mubr.f32.mxu0 0.0
        %v3275 = vand.u32 %v2374, 4294901760
        %3276 = vmatmul.mubr.f32.gmra.mrb[0].mxu0 %v3275
        %v3277 = vpop.f32.mrb[0].mxu0
        %v3278 = vadd.f32 %v3194, %v3277
        %v3279 = vpop.f32.mrb[0].mxu0
        %v3280 = vadd.f32 %v3196, %v3279
        %3281 = vdwg.mxu0
        %v3282 = vand.u32 %v392, 4294901760
        %3283 = vmatprep.subr.mxu0 %v3282
        %v3284 = vand.u32 %v391, 4294901760
        %3285 = vmatpush1.msra.mxu0 %v3284
        %v3286 = vand.u32 %v396, 4294901760
        %3287 = vmatprep.subr.mxu0 %v3286
        %v3288 = vand.u32 %v395, 4294901760
        %3289 = vmatpush1.msra.mxu0 %v3288
        %3290 = vmatprep.subr.mxu0 0.0
        %3291 = vmatpush1.msra.mxu0 0.0
        %3292 = vmatprep.subr.mxu0 0.0
        %3293 = vmatpush1.msra.mxu0 0.0
        %3294 = vmatprep.subr.mxu0 0.0
        %3295 = vmatpush1.msra.mxu0 0.0
        %3296 = vmatprep.subr.mxu0 0.0
        %3297 = vmatpush1.msra.mxu0 0.0
        %3298 = vmatprep.subr.mxu0 0.0
        %3299 = vmatpush1.msra.mxu0 0.0
        %3300 = vmatprep.subr.mxu0 0.0
        %3301 = vmatpush1.msra.mxu0 0.0
        %3302 = vmatprep.subr.mxu0 0.0
        %3303 = vmatpush1.msra.mxu0 0.0
        %3304 = vmatprep.subr.mxu0 0.0
        %3305 = vmatpush1.msra.mxu0 0.0
        %3306 = vmatprep.subr.mxu0 0.0
        %3307 = vmatpush1.msra.mxu0 0.0
        %3308 = vmatprep.subr.mxu0 0.0
        %3309 = vmatpush1.msra.mxu0 0.0
        %3310 = vmatprep.subr.mxu0 0.0
        %3311 = vmatpush1.msra.mxu0 0.0
        %3312 = vmatprep.subr.mxu0 0.0
        %3313 = vmatpush1.msra.mxu0 0.0
        %3314 = vmatprep.subr.mxu0 0.0
        %3315 = vmatpush1.msra.mxu0 0.0
        %3316 = vmatprep.subr.mxu0 0.0
        %3317 = vmatpush1.msra.mxu0 0.0
        %3318 = vmatprep.subr.mxu0 0.0
        %3319 = vmatpush1.msra.mxu0 0.0
        %3320 = vmatprep.subr.mxu0 0.0
        %3321 = vmatpush1.msra.mxu0 0.0
        %3322 = vmatprep.subr.mxu0 0.0
        %3323 = vmatpush1.msra.mxu0 0.0
        %3324 = vmatprep.subr.mxu0 0.0
        %3325 = vmatpush1.msra.mxu0 0.0
        %3326 = vmatprep.subr.mxu0 0.0
        %3327 = vmatpush1.msra.mxu0 0.0
        %3328 = vmatprep.subr.mxu0 0.0
        %3329 = vmatpush1.msra.mxu0 0.0
        %3330 = vmatprep.subr.mxu0 0.0
        %3331 = vmatpush1.msra.mxu0 0.0
        %3332 = vmatprep.subr.mxu0 0.0
        %3333 = vmatpush1.msra.mxu0 0.0
        %3334 = vmatprep.subr.mxu0 0.0
        %3335 = vmatpush1.msra.mxu0 0.0
        %3336 = vmatprep.subr.mxu0 0.0
        %3337 = vmatpush1.msra.mxu0 0.0
        %3338 = vmatprep.subr.mxu0 0.0
        %3339 = vmatpush1.msra.mxu0 0.0
        %3340 = vmatprep.subr.mxu0 0.0
        %3341 = vmatpush1.msra.mxu0 0.0
        %3342 = vmatprep.subr.mxu0 0.0
        %3343 = vmatpush1.msra.mxu0 0.0
        %3344 = vmatprep.subr.mxu0 0.0
        %3345 = vmatpush1.msra.mxu0 0.0
        %3346 = vmatprep.subr.mxu0 0.0
        %3347 = vmatpush1.msra.mxu0 0.0
        %3348 = vmatprep.subr.mxu0 0.0
        %3349 = vmatpush1.msra.mxu0 0.0
        %3350 = vmatprep.mubr.f32.mxu0 0.0
        %v3351 = vand.u32 %v2374, 4294901760
        %3352 = vmatmul.mubr.f32.gmra.mrb[0].mxu0 %v3351
        %v3353 = vpop.f32.mrb[0].mxu0
        %v3354 = vadd.f32 %v3278, %v3353
        %v3355 = vpop.f32.mrb[0].mxu0
        %v3356 = vadd.f32 %v3280, %v3355
        %3357 = vdwg.mxu0
        %v3358 = vadd.f32 %v1876, %v2863
        %v3359 = vadd.f32 %v1878, %v2865
        %v3360 = vadd.f32 %v2367, %v3354
        %v3361 = vadd.f32 %v2369, %v3356
        %3362 = vst [vmem:[%s263] sm:$0xff] %v3358
        %3363 = vst [vmem:[%s263 + $0x8] sm:$0xff] %v3359
        %3364 = vst [vmem:[%s263 + $0x10] sm:$0xff] %v3360
        %3365 = vst [vmem:[%s263 + $0x18] sm:$0xff] %v3361
        %s3366 = sand.u32 %s144, 1
        %s3367 = scalar_lea.sflag [#allocation4], %s3366
        %s3368 = sand.u32 %s144, 1
        %s3369 = smul.addr %s3368, 32
        %s3370 = scalar_lea.vmem [#allocation5], %s3369
        // Predicated region
        $region41: #{tpu_custom_call.1} parent=35 // pred_check
          %p3371 = pneg %p154
        $region42: #{tpu_custom_call.1} parent=35 // pred_check_branch
          %3373 = sbr.rel (%p3371) target = $region44
        $region43: #{tpu_custom_call.1} parent=35 // pred_region
          %s3374 = smul.u32 4, %s26
          %s3376 = ssub.s32 512, 512
          %3377 = vsyncadd %s3367, %s3376
          %s3378 = smul.addr %s25, 4
          %s3379 = sadd.s32 %s3374, %s3378
          %s3380 = smul.addr %s3379, 128
          %s3381 = scalar_lea.hbm %s4, %s3380
          %s3383 = sshll.u32 %s3370, 4
          %s3384 = int_to_ptr.vmem [resolvable:$true] %s3383
          %3386 = dma.vmem_to_hbm [thread:$0]  %s3384, 512, %s3381, %s3367
        $region44: #{tpu_custom_call.1} parent=35 // pred_fallthru
          _
      $region36: #{tpu_custom_call.1} parent=5 // pred_fallthru
        _
      %p3387 = scmp.le.s32.totalorder 2, %s16
      // Predicated region
      $region45: #{tpu_custom_call.1} parent=5 // pred_check
        %p3388 = pneg %p3387
      $region46: #{tpu_custom_call.1} parent=5 // pred_check_branch
        %3390 = sbr.rel (%p3388) target = $region48
      $region47: #{tpu_custom_call.1} parent=5 // pred_region
        %s3391 = ssub.s32 %s16, 2
        // Predicated region
        $region49: #{tpu_custom_call.1} parent=47 // pred_check
          %p3392 = pneg %p160
        $region50: #{tpu_custom_call.1} parent=47 // pred_check_branch
          %3394 = sbr.rel (%p3392) target = $region52
        $region51: #{tpu_custom_call.1} parent=47 // pred_region
          %s3395 = sand.u32 %s145, 1
          %s3396 = scalar_lea.sflag [#allocation4], %s3395
          %s3397 = sand.u32 %s145, 1
          %s3398 = smul.addr %s3397, 32
          %s3399 = scalar_lea.vmem [#allocation5], %s3398
          %3400 = dma.done %s3396, 512
        $region52: #{tpu_custom_call.1} parent=47 // pred_fallthru
          _
      $region48: #{tpu_custom_call.1} parent=5 // pred_fallthru
        _
    $region6: #{tpu_custom_call.1} parent=1 // loop_footer
      %s20 = sadd.s32 1, %s16
    $region7: #{tpu_custom_call.1} parent=1 // loop_footer_branch
      %15 = sbr.rel target = $region3
    $region8: #{tpu_custom_call.1} parent=1 // loop_exit
      _
    %3401 = vsyncpa [#allocation3], 1
    %s3402 = scalar_lea.sflag [#allocation3], 1
    %3403 = vsyncpa %s3402, 1
    %3404 = vsyncpa [#allocation4], 1
    %s3405 = scalar_lea.sflag [#allocation4], 1
    %3406 = vsyncpa %s3405, 1

</llo_original>
